<compile_context>
chip_gen: v5e
topology: v5e:2x2
jax: 0.10.0
libtpu: 0.0.40
codegen_flags: <defaults>
</compile_context>

<pallas_src>
import functools

import jax
import jax.numpy as jnp
from jax import lax
from jax.experimental import pallas as pl
from jax.experimental.pallas import tpu as pltpu

GAMMA = 0.99
NUM_CORES = 2  # leading "parallel" grid axis: sharded across TCs on v7x, serial loop elsewhere


def _make_td0_kernel(tile_b: int, batch: int, tiles_per_core: int,
                     gamma: float, compute_dtype):
    def kernel(obs_ref, nobs_ref, rd_ref,
               w1_ref, tw1_ref, b1_ref, tb1_ref, w2r_ref, tw2r_ref, headb_ref,
               loss_ref):
        c = pl.program_id(0)   # core-split axis ("parallel")
        j = pl.program_id(1)   # batch-tile axis ("arbitrary")

        @pl.when(j == 0)
        def _init():
            loss_ref[...] = jnp.zeros_like(loss_ref)

        # In-kernel bf16 cast (VPU work hidden under the streaming DMA); inputs
        # arrive as f32 so there is no extra wrapper-side HBM convert pass.
        x = obs_ref[...].astype(compute_dtype)
        nx = nobs_ref[...].astype(compute_dtype)

        # ---- layer 1: two independent MXU passes (online / target), f32 accumulate.
        h = jnp.dot(x, w1_ref[...], preferred_element_type=jnp.float32)
        h = jnp.maximum(h + b1_ref[...], 0.0)
        th = jnp.dot(nx, tw1_ref[...], preferred_element_type=jnp.float32)
        th = jnp.maximum(th + tb1_ref[...], 0.0)

        # ---- width-1 value heads: VPU multiply + XLU lane reduce (no N=1 matmul).
        v = jnp.sum(h * w2r_ref[...], axis=-1, keepdims=True) + headb_ref[0]
        tv = jnp.sum(th * tw2r_ref[...], axis=-1, keepdims=True) + headb_ref[1]

        # ---- TD(0) target + masked sum of squared errors (all f32).
        reward = rd_ref[:, 0:1]
        not_done = 1.0 - rd_ref[:, 1:2]
        err = v - (reward + gamma * not_done * tv)

        # Ragged / over-provisioned tiles: rows >= batch contribute 0 (select, so
        # padded or clamped-duplicate data -- even NaN -- cannot leak into the sum).
        row = (lax.broadcasted_iota(jnp.int32, (tile_b, 1), 0)
               + (c * tiles_per_core + j) * tile_b)
        err2 = jnp.where(row < batch, err * err, 0.0)

        # Accumulate SSE directly in the resident output block (one HBM writeback
        # per core); scaling by 1/B and the cross-core sum happen in the wrapper.
        loss_ref[...] += jnp.sum(err2, axis=0, keepdims=True)

    return kernel


@functools.partial(jax.jit, static_argnames=("tile_b", "compute_dtype"))
def td0_value_loss(obs, next_obs, reward, done, params, target_params,
                   *, tile_b=1024, compute_dtype=jnp.bfloat16):
    """Returns the scalar loss_value (0-d float32)."""
    w1, b1, w2, b2 = params
    tw1, tb1, tw2, tb2 = target_params

    B, D = obs.shape
    H = w1.shape[1]
    assert tile_b % 8 == 0, "tile_b must be a multiple of 8 (sublane tiling)"

    nb = pl.cdiv(B, tile_b)                      # total batch blocks
    tiles_per_core = pl.cdiv(nb, NUM_CORES)      # blocks handled by each core

    # Tiny per-call parameter prep (weights, biases): cast once at the boundary.
    w1_c = w1.astype(compute_dtype)                                  # [D, H]
    tw1_c = tw1.astype(compute_dtype)                                # [D, H]
    b1_f = b1.reshape(1, H).astype(jnp.float32)                      # [1, H]
    tb1_f = tb1.reshape(1, H).astype(jnp.float32)                    # [1, H]
    w2row = w2.reshape(1, H).astype(jnp.float32)                     # [1, H]
    tw2row = tw2.reshape(1, H).astype(jnp.float32)                   # [1, H]
    head_b = jnp.stack([b2.reshape(()), tb2.reshape(())]).astype(jnp.float32)  # [2] -> SMEM

    # Pack reward/done into one [B, 2] stream (halves the narrow lane-1 DMAs).
    rd = jnp.concatenate([reward.reshape(B, 1).astype(jnp.float32),
                          done.reshape(B, 1).astype(jnp.float32)], axis=1)

    def batch_block(c, j):
        # Core c owns blocks [c*tiles_per_core, (c+1)*tiles_per_core); blocks past
        # the real range are clamped here and fully masked inside the kernel.
        return (jnp.minimum(c * tiles_per_core + j, nb - 1), 0)

    kernel = _make_td0_kernel(tile_b, B, tiles_per_core, GAMMA, compute_dtype)

    out = pl.pallas_call(
        kernel,
        out_shape=jax.ShapeDtypeStruct((1, NUM_CORES * 128), jnp.float32),
        grid=(NUM_CORES, tiles_per_core),
        in_specs=[
            pl.BlockSpec((tile_b, D), batch_block),        # obs tile (f32)
            pl.BlockSpec((tile_b, D), batch_block),        # next_obs tile (f32)
            pl.BlockSpec((tile_b, 2), batch_block),        # packed [reward|done] tile
            pl.BlockSpec((D, H), lambda c, j: (0, 0)),     # online layer-1 weights (bf16)
            pl.BlockSpec((D, H), lambda c, j: (0, 0)),     # target layer-1 weights (bf16)
            pl.BlockSpec((1, H), lambda c, j: (0, 0)),     # online layer-1 bias
            pl.BlockSpec((1, H), lambda c, j: (0, 0)),     # target layer-1 bias
            pl.BlockSpec((1, H), lambda c, j: (0, 0)),     # online head row
            pl.BlockSpec((1, H), lambda c, j: (0, 0)),     # target head row
            pl.BlockSpec(memory_space=pltpu.MemorySpace.SMEM),  # head biases (scalars)
        ],
        # Lane-dense per-core partial-SSE block: [1,128] per core, written once per core.
        out_specs=pl.BlockSpec((1, 128), lambda c, j: (0, c)),
        compiler_params=pltpu.CompilerParams(
            dimension_semantics=("parallel", "arbitrary"),
            vmem_limit_bytes=32 * 1024 * 1024,  # explicit: v5e scoped default is 16 MiB
        ),
    )(obs, next_obs, rd, w1_c, tw1_c, b1_f, tb1_f, w2row, tw2row, head_b)

    # Sum the per-core partial SSEs, divide by the GLOBAL batch size.
    partials = out.reshape(NUM_CORES, 128)[:, 0]
    return jnp.sum(partials) / B


def _reference_loss(obs, next_obs, reward, done, params, target_params, compute_dtype):
    cast = lambda a: a.astype(compute_dtype).astype(jnp.float32)
    w1, b1, w2, b2 = params
    tw1, tb1, tw2, tb2 = target_params
    h = jnp.maximum(cast(obs) @ cast(w1) + b1, 0.0)
    th = jnp.maximum(cast(next_obs) @ cast(tw1) + tb1, 0.0)
    v = jnp.sum(h * w2.T, axis=-1, keepdims=True) + b2
    tv = jnp.sum(th * tw2.T, axis=-1, keepdims=True) + tb2
    target = reward.astype(jnp.float32) + GAMMA * (1.0 - done.astype(jnp.float32)) * tv
    return jnp.mean((v - target) ** 2)


if __name__ == "__main__":
    D, H = 32, 32

    key = jax.random.PRNGKey(0)
    k_w1, k_b1, k_w2, k_b2, k_t = jax.random.split(key, 5)

    # Deterministic "module" parameters (value MLP: D -> H -> 1).
    w1 = jax.random.normal(k_w1, (D, H), dtype=jnp.float32) * 0.1
    b1 = jax.random.normal(k_b1, (1, H), dtype=jnp.float32) * 0.1
    w2 = jax.random.normal(k_w2, (H, 1), dtype=jnp.float32) * 0.1
    b2 = jax.random.normal(k_b2, (1, 1), dtype=jnp.float32) * 0.1
    params = (w1, b1, w2, b2)

    # create_target_params=True semantics: detached clones (perturbed slightly to
    # emulate a target net after soft updates, so online/target weight routing is
    # actually exercised).
    tkeys = jax.random.split(k_t, 4)
    target_params = tuple(
        p + 0.01 * jax.random.normal(tk, p.shape, dtype=jnp.float32)
        for p, tk in zip(params, tkeys))

    # (B, tile_b) cases:
    #   (2048, 1024): one full tile per core (true two-core partition)
    #   (1000, 1024): ragged tile on core 0, fully-masked clamped tile on core 1
    #   ( 520,  128): multi-tile accumulation per core + ragged last tile
    for B, TB in ((2048, 1024), (1000, 1024), (520, 128)):
        kb = jax.random.fold_in(key, B)
        k_obs, k_nobs, k_rew, k_done = jax.random.split(kb, 4)
        obs = jax.random.normal(k_obs, (B, D), dtype=jnp.float32)
        next_obs = jax.random.normal(k_nobs, (B, D), dtype=jnp.float32)
        reward = jax.random.normal(k_rew, (B, 1), dtype=jnp.float32)
        done = (jax.random.uniform(k_done, (B, 1)) > 0.8).astype(jnp.float32)

        loss = td0_value_loss(obs, next_obs, reward, done, params, target_params,
                              tile_b=TB, compute_dtype=jnp.bfloat16)
        loss = jax.block_until_ready(loss)

        ref = _reference_loss(obs, next_obs, reward, done, params, target_params,
                              jnp.bfloat16)
        assert jnp.allclose(loss, ref, rtol=1e-3, atol=1e-3), (B, TB, loss, ref)

        # "tensordict" of output losses, as LossModule.forward demands.
        losses = {"loss_value": float(loss)}
        assert all(k.startswith("loss") for k in losses)

    print("KERNEL_OK")
</pallas_src>

<mosaic_0001>
module attributes {stable_mosaic.version = 11 : i64} {
  func.func @kernel(%arg0: i32, %arg1: i32, %arg2: memref<1024x32xf32, #tpu.memory_space<vmem>>, %arg3: memref<1024x32xf32, #tpu.memory_space<vmem>>, %arg4: memref<1024x2xf32, #tpu.memory_space<vmem>>, %arg5: memref<32x32xbf16, #tpu.memory_space<vmem>>, %arg6: memref<32x32xbf16, #tpu.memory_space<vmem>>, %arg7: memref<1x32xf32, #tpu.memory_space<vmem>>, %arg8: memref<1x32xf32, #tpu.memory_space<vmem>>, %arg9: memref<1x32xf32, #tpu.memory_space<vmem>>, %arg10: memref<1x32xf32, #tpu.memory_space<vmem>>, %arg11: memref<2xf32, #tpu.memory_space<smem>>, %arg12: memref<1x128xf32, #tpu.memory_space<vmem>>) attributes {dimension_semantics = [#tpu.dimension_semantics<parallel>, #tpu.dimension_semantics<arbitrary>], iteration_bounds = array<i64: 2, 1>, scalar_prefetch = 0 : i64, scratch_operands = 0 : i64, tpu.core_type = #tpu.core_type<tc>, window_params = [{transform_indices = @transform_0, window_bounds = array<i64: 1024, 32>}, {transform_indices = @transform_1, window_bounds = array<i64: 1024, 32>}, {transform_indices = @transform_2, window_bounds = array<i64: 1024, 2>}, {pipeline_mode = #tpu.pipeline_mode<synchronous>, transform_indices = @transform_3, window_bounds = array<i64: 32, 32>}, {pipeline_mode = #tpu.pipeline_mode<synchronous>, transform_indices = @transform_4, window_bounds = array<i64: 32, 32>}, {pipeline_mode = #tpu.pipeline_mode<synchronous>, transform_indices = @transform_5, window_bounds = array<i64: 1, 32>}, {pipeline_mode = #tpu.pipeline_mode<synchronous>, transform_indices = @transform_6, window_bounds = array<i64: 1, 32>}, {pipeline_mode = #tpu.pipeline_mode<synchronous>, transform_indices = @transform_7, window_bounds = array<i64: 1, 32>}, {pipeline_mode = #tpu.pipeline_mode<synchronous>, transform_indices = @transform_8, window_bounds = array<i64: 1, 32>}, {transform_indices = @transform_9, window_bounds = array<i64: 2>}, {transform_indices = @transform_10, window_bounds = array<i64: 1, 128>}]} {
    %c0_i32 = arith.constant 0 : i32
    %0 = arith.cmpi eq, %arg1, %c0_i32 : i32
    %1 = arith.extui %0 : i1 to i32
    %c0_i32_0 = arith.constant 0 : i32
    %2 = arith.cmpi ne, %1, %c0_i32_0 : i32
    scf.if %2 {
      %cst_34 = arith.constant 0.000000e+00 : f32
      %63 = vector.broadcast %cst_34 : f32 to vector<1x128xf32>
      %c0_35 = arith.constant 0 : index
      %c0_36 = arith.constant 0 : index
      %64 = vector.load %arg12[%c0_35, %c0_36] : memref<1x128xf32, #tpu.memory_space<vmem>>, vector<1x128xf32>
      tpu.vector_store %arg12[%c0_35, %c0_36], %63 {strides = array<i32>} : memref<1x128xf32, #tpu.memory_space<vmem>>, vector<1x128xf32>,
    } else {
    }
    %c0 = arith.constant 0 : index
    %c0_1 = arith.constant 0 : index
    %3 = vector.load %arg2[%c0, %c0_1] : memref<1024x32xf32, #tpu.memory_space<vmem>>, vector<1024x32xf32>
    %4 = arith.truncf %3 : vector<1024x32xf32> to vector<1024x32xbf16>
    %c0_2 = arith.constant 0 : index
    %c0_3 = arith.constant 0 : index
    %5 = vector.load %arg3[%c0_2, %c0_3] : memref<1024x32xf32, #tpu.memory_space<vmem>>, vector<1024x32xf32>
    %6 = arith.truncf %5 : vector<1024x32xf32> to vector<1024x32xbf16>
    %c0_4 = arith.constant 0 : index
    %c0_5 = arith.constant 0 : index
    %7 = vector.load %arg5[%c0_4, %c0_5] : memref<32x32xbf16, #tpu.memory_space<vmem>>, vector<32x32xbf16>
    %cst = arith.constant dense<0.000000e+00> : vector<1024x32xf32>
    %8 = tpu.matmul %4, %7, %cst {dimension_numbers = #tpu.dot_dimension_numbers<[1], [0], [0], [1], [0, 0, 1, 1], [], []>} : vector<1024x32xbf16>, vector<32x32xbf16>, vector<1024x32xf32> -> vector<1024x32xf32>
    %c0_6 = arith.constant 0 : index
    %c0_7 = arith.constant 0 : index
    %9 = vector.load %arg7[%c0_6, %c0_7] : memref<1x32xf32, #tpu.memory_space<vmem>>, vector<1x32xf32>
    %10 = vector.broadcast %9 : vector<1x32xf32> to vector<1024x32xf32>
    %11 = arith.addf %8, %10 : vector<1024x32xf32>
    %cst_8 = arith.constant 0.000000e+00 : f32
    %12 = vector.broadcast %cst_8 : f32 to vector<1024x32xf32>
    %13 = arith.maximumf %11, %12 : vector<1024x32xf32>
    %c0_9 = arith.constant 0 : index
    %c0_10 = arith.constant 0 : index
    %14 = vector.load %arg6[%c0_9, %c0_10] : memref<32x32xbf16, #tpu.memory_space<vmem>>, vector<32x32xbf16>
    %cst_11 = arith.constant dense<0.000000e+00> : vector<1024x32xf32>
    %15 = tpu.matmul %6, %14, %cst_11 {dimension_numbers = #tpu.dot_dimension_numbers<[1], [0], [0], [1], [0, 0, 1, 1], [], []>} : vector<1024x32xbf16>, vector<32x32xbf16>, vector<1024x32xf32> -> vector<1024x32xf32>
    %c0_12 = arith.constant 0 : index
    %c0_13 = arith.constant 0 : index
    %16 = vector.load %arg8[%c0_12, %c0_13] : memref<1x32xf32, #tpu.memory_space<vmem>>, vector<1x32xf32>
    %17 = vector.broadcast %16 : vector<1x32xf32> to vector<1024x32xf32>
    %18 = arith.addf %15, %17 : vector<1024x32xf32>
    %cst_14 = arith.constant 0.000000e+00 : f32
    %19 = vector.broadcast %cst_14 : f32 to vector<1024x32xf32>
    %20 = arith.maximumf %18, %19 : vector<1024x32xf32>
    %c0_15 = arith.constant 0 : index
    %c0_16 = arith.constant 0 : index
    %21 = vector.load %arg9[%c0_15, %c0_16] : memref<1x32xf32, #tpu.memory_space<vmem>>, vector<1x32xf32>
    %22 = vector.broadcast %21 : vector<1x32xf32> to vector<1024x32xf32>
    %23 = arith.mulf %13, %22 : vector<1024x32xf32>
    %cst_17 = arith.constant dense<0.000000e+00> : vector<1024xf32>
    %24 = vector.multi_reduction <add>, %23, %cst_17 [1] : vector<1024x32xf32> to vector<1024xf32>
    %25 = vector.shape_cast %24 : vector<1024xf32> to vector<1024x1xf32>
    %c0_18 = arith.constant 0 : index
    %26 = memref.load %arg11[%c0_18] : memref<2xf32, #tpu.memory_space<smem>>
    %27 = vector.broadcast %26 : f32 to vector<1024x1xf32>
    %28 = arith.addf %25, %27 : vector<1024x1xf32>
    %c0_19 = arith.constant 0 : index
    %c0_20 = arith.constant 0 : index
    %29 = vector.load %arg10[%c0_19, %c0_20] : memref<1x32xf32, #tpu.memory_space<vmem>>, vector<1x32xf32>
    %30 = vector.broadcast %29 : vector<1x32xf32> to vector<1024x32xf32>
    %31 = arith.mulf %20, %30 : vector<1024x32xf32>
    %cst_21 = arith.constant dense<0.000000e+00> : vector<1024xf32>
    %32 = vector.multi_reduction <add>, %31, %cst_21 [1] : vector<1024x32xf32> to vector<1024xf32>
    %33 = vector.shape_cast %32 : vector<1024xf32> to vector<1024x1xf32>
    %c1 = arith.constant 1 : index
    %34 = memref.load %arg11[%c1] : memref<2xf32, #tpu.memory_space<smem>>
    %35 = vector.broadcast %34 : f32 to vector<1024x1xf32>
    %36 = arith.addf %33, %35 : vector<1024x1xf32>
    %c0_22 = arith.constant 0 : index
    %c0_23 = arith.constant 0 : index
    %37 = vector.load %arg4[%c0_22, %c0_23] : memref<1024x2xf32, #tpu.memory_space<vmem>>, vector<1024x1xf32>
    %c0_24 = arith.constant 0 : index
    %c1_25 = arith.constant 1 : index
    %38 = vector.load %arg4[%c0_24, %c1_25] : memref<1024x2xf32, #tpu.memory_space<vmem>>, vector<1024x1xf32>
    %cst_26 = arith.constant 1.000000e+00 : f32
    %39 = vector.broadcast %cst_26 : f32 to vector<1024x1xf32>
    %40 = arith.subf %39, %38 : vector<1024x1xf32>
    %cst_27 = arith.constant 9.900000e-01 : f32
    %41 = vector.broadcast %cst_27 : f32 to vector<1024x1xf32>
    %42 = arith.mulf %41, %40 : vector<1024x1xf32>
    %43 = arith.mulf %42, %36 : vector<1024x1xf32>
    %44 = arith.addf %37, %43 : vector<1024x1xf32>
    %45 = arith.subf %28, %44 : vector<1024x1xf32>
    %46 = tpu.iota {dimensions = array<i32: 0>} : vector<1024x1xi32>
    %c1_i32 = arith.constant 1 : i32
    %47 = arith.muli %arg0, %c1_i32 : i32
    %48 = arith.addi %47, %arg1 : i32
    %c1024_i32 = arith.constant 1024 : i32
    %49 = arith.muli %48, %c1024_i32 : i32
    %50 = vector.broadcast %49 : i32 to vector<1024x1xi32>
    %51 = arith.addi %46, %50 : vector<1024x1xi32>
    %c2048_i32 = arith.constant 2048 : i32
    %52 = vector.broadcast %c2048_i32 : i32 to vector<1024x1xi32>
    %53 = arith.cmpi slt, %51, %52 : vector<1024x1xi32>
    %54 = arith.mulf %45, %45 : vector<1024x1xf32>
    %cst_28 = arith.constant 0.000000e+00 : f32
    %55 = vector.broadcast %cst_28 : f32 to vector<1024x1xf32>
    %56 = arith.select %53, %54, %55 : vector<1024x1xi1>, vector<1024x1xf32>
    %c0_29 = arith.constant 0 : index
    %c0_30 = arith.constant 0 : index
    %57 = vector.load %arg12[%c0_29, %c0_30] : memref<1x128xf32, #tpu.memory_space<vmem>>, vector<1x128xf32>
    %cst_31 = arith.constant dense<0.000000e+00> : vector<1xf32>
    %58 = vector.multi_reduction <add>, %56, %cst_31 [0] : vector<1024x1xf32> to vector<1xf32>
    %59 = vector.shape_cast %58 : vector<1xf32> to vector<1x1xf32>
    %60 = vector.broadcast %59 : vector<1x1xf32> to vector<1x128xf32>
    %61 = arith.addf %57, %60 : vector<1x128xf32>
    %c0_32 = arith.constant 0 : index
    %c0_33 = arith.constant 0 : index
    %62 = vector.load %arg12[%c0_32, %c0_33] : memref<1x128xf32, #tpu.memory_space<vmem>>, vector<1x128xf32>
    tpu.vector_store %arg12[%c0_32, %c0_33], %61 {strides = array<i32>} : memref<1x128xf32, #tpu.memory_space<vmem>>, vector<1x128xf32>,
    return
  }
  func.func @transform_0(%arg0: i32, %arg1: i32) -> (i32, i32) {
    %c1_i32 = arith.constant 1 : i32
    %0 = arith.muli %arg0, %c1_i32 : i32
    %1 = arith.addi %0, %arg1 : i32
    %c1_i32_0 = arith.constant 1 : i32
    %2 = arith.minsi %1, %c1_i32_0 : i32
    %c0_i32 = arith.constant 0 : i32
    %c0_i32_1 = arith.constant 0 : i32
    return %2, %c0_i32 : i32, i32
  }
  func.func @transform_1(%arg0: i32, %arg1: i32) -> (i32, i32) {
    %c1_i32 = arith.constant 1 : i32
    %0 = arith.muli %arg0, %c1_i32 : i32
    %1 = arith.addi %0, %arg1 : i32
    %c1_i32_0 = arith.constant 1 : i32
    %2 = arith.minsi %1, %c1_i32_0 : i32
    %c0_i32 = arith.constant 0 : i32
    %c0_i32_1 = arith.constant 0 : i32
    return %2, %c0_i32 : i32, i32
  }
  func.func @transform_2(%arg0: i32, %arg1: i32) -> (i32, i32) {
    %c1_i32 = arith.constant 1 : i32
    %0 = arith.muli %arg0, %c1_i32 : i32
    %1 = arith.addi %0, %arg1 : i32
    %c1_i32_0 = arith.constant 1 : i32
    %2 = arith.minsi %1, %c1_i32_0 : i32
    %c0_i32 = arith.constant 0 : i32
    %c0_i32_1 = arith.constant 0 : i32
    return %2, %c0_i32 : i32, i32
  }
  func.func @transform_3(%arg0: i32, %arg1: i32) -> (i32, i32) {
    %c0_i32 = arith.constant 0 : i32
    %c0_i32_0 = arith.constant 0 : i32
    %c0_i32_1 = arith.constant 0 : i32
    return %c0_i32, %c0_i32_0 : i32, i32
  }
  func.func @transform_4(%arg0: i32, %arg1: i32) -> (i32, i32) {
    %c0_i32 = arith.constant 0 : i32
    %c0_i32_0 = arith.constant 0 : i32
    %c0_i32_1 = arith.constant 0 : i32
    return %c0_i32, %c0_i32_0 : i32, i32
  }
  func.func @transform_5(%arg0: i32, %arg1: i32) -> (i32, i32) {
    %c0_i32 = arith.constant 0 : i32
    %c0_i32_0 = arith.constant 0 : i32
    %c0_i32_1 = arith.constant 0 : i32
    return %c0_i32, %c0_i32_0 : i32, i32
  }
  func.func @transform_6(%arg0: i32, %arg1: i32) -> (i32, i32) {
    %c0_i32 = arith.constant 0 : i32
    %c0_i32_0 = arith.constant 0 : i32
    %c0_i32_1 = arith.constant 0 : i32
    return %c0_i32, %c0_i32_0 : i32, i32
  }
  func.func @transform_7(%arg0: i32, %arg1: i32) -> (i32, i32) {
    %c0_i32 = arith.constant 0 : i32
    %c0_i32_0 = arith.constant 0 : i32
    %c0_i32_1 = arith.constant 0 : i32
    return %c0_i32, %c0_i32_0 : i32, i32
  }
  func.func @transform_8(%arg0: i32, %arg1: i32) -> (i32, i32) {
    %c0_i32 = arith.constant 0 : i32
    %c0_i32_0 = arith.constant 0 : i32
    %c0_i32_1 = arith.constant 0 : i32
    return %c0_i32, %c0_i32_0 : i32, i32
  }
  func.func @transform_9(%arg0: i32, %arg1: i32) -> i32 {
    %c0_i32 = arith.constant 0 : i32
    %c0_i32_0 = arith.constant 0 : i32
    return %c0_i32 : i32
  }
  func.func @transform_10(%arg0: i32, %arg1: i32) -> (i32, i32) {
    %c0_i32 = arith.constant 0 : i32
    %c0_i32_0 = arith.constant 0 : i32
    return %c0_i32, %arg0 : i32, i32
  }
}

</mosaic_0001>

<llo_original>
// kernel: td0_value_loss.1
$region0: #{td0_value_loss.1}
  #allocation0 [shape = 'u32[]', space=smem, size = 0x4, offset = 0x4, fixed_abs, tag = 'smem constant byte address 0x4 - core index']
  #allocation1 [shape = 'u32[72,128]{1,0:T(1,128)}', space=vmem, size = 0x9000, scoped, tag = 'internal scratch']
  %s0 = inlined_call_operand.vmem [shape: f32[2048,32], index: 0, kind: input, shape index: {}]
  %s1 = inlined_call_operand.vmem [shape: f32[2048,32], index: 1, kind: input, shape index: {}]
  %s2 = inlined_call_operand.vmem [shape: f32[2048,2], index: 2, kind: input, shape index: {}]
  %s3 = inlined_call_operand.vmem [shape: bf16[32,32], index: 3, kind: input, shape index: {}]
  %s4 = inlined_call_operand.vmem [shape: bf16[32,32], index: 4, kind: input, shape index: {}]
  %s5 = inlined_call_operand.vmem [shape: f32[1,32], index: 5, kind: input, shape index: {}]
  %s6 = inlined_call_operand.vmem [shape: f32[1,32], index: 6, kind: input, shape index: {}]
  %s7 = inlined_call_operand.vmem [shape: f32[1,32], index: 7, kind: input, shape index: {}]
  %s8 = inlined_call_operand.vmem [shape: f32[1,32], index: 8, kind: input, shape index: {}]
  %s9 = inlined_call_operand.vmem [shape: f32[2], index: 9, kind: input, shape index: {}]
  %s10 = inlined_call_operand.vmem [shape: f32[1,256], index: 10, kind: output, shape index: {}]
  %s11 = sld [smem:[#allocation0]]
  $region81: #{td0_value_loss.1} parent=0
    _
  %s13 = ssub.s32 1, %s11
  %s14 = scalar_select 0, %s13, %s11
  $region1: #{td0_value_loss.1} parent=0
    #allocation2 [shape = 'u8[512]{0}', space=smem, size = 0x200, scoped, tag = 'input window, operand 9, single buffered']
    #allocation3 [shape = 's32[2]{0}', space=sflag, size = 0x8, scoped, tag = 'scoped memory for td0_value_loss.1']
    %15 = vsyncpa [#allocation3], 0
    loop: start=0, step=1, limit=4
    $region2: #{td0_value_loss.1} parent=1 // loop_pre_header
      _
    $region3: #{td0_value_loss.1} parent=1 // loop_header
      %s17 = sphi 0, %s21
      %p18 = scmp.ge.s32.totalorder %s17, 4
      %s24 = sphi 0, %s36
      %s25 = sphi 0, %s32
      %s26 = sphi 0, %s24
      %s27 = sphi 0, %s25
      %s28 = sphi 0, %s26
      %s29 = sphi 0, %s27
      %s45 = sphi 0, %s47
      %s48 = sphi 0, %s45
      %s49 = sphi 0, %s48
      %s65 = sphi 0, %s49
      %s77 = sphi 0, %s79
      %s80 = sphi 0, %s77
      %s81 = sphi 0, %s80
      %s97 = sphi 0, %s81
      %s109 = sphi 0, %s111
      %s112 = sphi 0, %s109
      %s113 = sphi 0, %s112
      %s129 = sphi 0, %s113
      %s133 = sphi 0, %s133
      %s135 = sphi 0, %s133
      %s136 = sphi 0, %s135
      %s150 = sphi 0, %s136
      %s154 = sphi 0, %s154
      %s156 = sphi 0, %s154
      %s157 = sphi 0, %s156
      %s171 = sphi 0, %s157
      %s175 = sphi 0, %s175
      %s177 = sphi 0, %s175
      %s178 = sphi 0, %s177
      %s192 = sphi 0, %s178
      %s196 = sphi 0, %s196
      %s198 = sphi 0, %s196
      %s199 = sphi 0, %s198
      %s213 = sphi 0, %s199
      %s217 = sphi 0, %s217
      %s219 = sphi 0, %s217
      %s220 = sphi 0, %s219
      %s234 = sphi 0, %s220
      %s238 = sphi 0, %s238
      %s240 = sphi 0, %s238
      %s241 = sphi 0, %s240
      %s255 = sphi 0, %s241
      %s259 = sphi 0, %s259
      %s261 = sphi 0, %s259
      %s262 = sphi 0, %s261
      %s276 = sphi 0, %s262
      %s282 = sphi 0, %s284
      %s285 = sphi 0, %s282
      %s286 = sphi 0, %s285
      %s302 = sphi 0, %s286
    $region4: #{td0_value_loss.1} parent=1 // loop_header_branch
      %20 = sbr.rel (%p18) target = $region8
    $region5: #{td0_value_loss.1} parent=1 // loop_body
      %s22 = ssub.s32 %s17, 1
      %s23 = ssub.s32 %s17, 2
      %s30 = sadd.s32 1, %s25
      %p31 = scmp.ge.s32.totalorder %s30, 1
      %s32 = scalar_select %p31, 0, %s30
      %s33 = sadd.s32 1, %s24
      %s34 = scalar_select %p31, %s33, %s24
      %p35 = scmp.ge.s32.totalorder %s34, 2
      %s36 = scalar_select %p35, 0, %s34
      %s37 = sadd.s32 %s24, %s25
      %p38 = scmp.lt.s32.totalorder %s37, 1
      %s39 = scalar_select %p38, %s37, 1
      %s40 = sadd.s32 %s36, %s32
      %p41 = scmp.lt.s32.totalorder %s40, 1
      %s42 = scalar_select %p41, %s40, 1
      %s43 = ssub.s32 %s39, %s42
      %p44 = scmp.eq.s32.totalorder %s43, 0
      %s46 = sadd.s32 %s45, 1
      %s47 = scalar_select %p44, %s45, %s46
      %p50 = pneg %p44
      %p51 = scmp.eq.s32.totalorder %s17, 1
      %p52 = por %p50, %p51
      %p53 = scmp.ne.s32.totalorder %s45, %s48
      %p54 = scmp.eq.s32.totalorder %s17, 0
      %p55 = por %p53, %p54
      %p56 = scmp.ne.s32.totalorder %s45, %s48
      %p57 = scmp.eq.s32.totalorder %s22, 1
      %p58 = por %p56, %p57
      %p59 = scmp.ne.s32.totalorder %s48, %s49
      %p60 = scmp.eq.s32.totalorder %s22, 0
      %p61 = por %p59, %p60
      %p62 = scmp.ne.s32.totalorder %s48, %s49
      %p63 = scmp.eq.s32.totalorder %s23, 1
      %p64 = por %p62, %p63
      %p66 = scmp.ne.s32.totalorder %s49, %s65
      %p67 = scmp.eq.s32.totalorder %s23, 0
      %p68 = por %p66, %p67
      %s69 = sadd.s32 %s24, %s25
      %p70 = scmp.lt.s32.totalorder %s69, 1
      %s71 = scalar_select %p70, %s69, 1
      %s72 = sadd.s32 %s36, %s32
      %p73 = scmp.lt.s32.totalorder %s72, 1
      %s74 = scalar_select %p73, %s72, 1
      %s75 = ssub.s32 %s71, %s74
      %p76 = scmp.eq.s32.totalorder %s75, 0
      %s78 = sadd.s32 %s77, 1
      %s79 = scalar_select %p76, %s77, %s78
      %p82 = pneg %p76
      %p83 = scmp.eq.s32.totalorder %s17, 1
      %p84 = por %p82, %p83
      %p85 = scmp.ne.s32.totalorder %s77, %s80
      %p86 = scmp.eq.s32.totalorder %s17, 0
      %p87 = por %p85, %p86
      %p88 = scmp.ne.s32.totalorder %s77, %s80
      %p89 = scmp.eq.s32.totalorder %s22, 1
      %p90 = por %p88, %p89
      %p91 = scmp.ne.s32.totalorder %s80, %s81
      %p92 = scmp.eq.s32.totalorder %s22, 0
      %p93 = por %p91, %p92
      %p94 = scmp.ne.s32.totalorder %s80, %s81
      %p95 = scmp.eq.s32.totalorder %s23, 1
      %p96 = por %p94, %p95
      %p98 = scmp.ne.s32.totalorder %s81, %s97
      %p99 = scmp.eq.s32.totalorder %s23, 0
      %p100 = por %p98, %p99
      %s101 = sadd.s32 %s24, %s25
      %p102 = scmp.lt.s32.totalorder %s101, 1
      %s103 = scalar_select %p102, %s101, 1
      %s104 = sadd.s32 %s36, %s32
      %p105 = scmp.lt.s32.totalorder %s104, 1
      %s106 = scalar_select %p105, %s104, 1
      %s107 = ssub.s32 %s103, %s106
      %p108 = scmp.eq.s32.totalorder %s107, 0
      %s110 = sadd.s32 %s109, 1
      %s111 = scalar_select %p108, %s109, %s110
      %p114 = pneg %p108
      %p115 = scmp.eq.s32.totalorder %s17, 1
      %p116 = por %p114, %p115
      %p117 = scmp.ne.s32.totalorder %s109, %s112
      %p118 = scmp.eq.s32.totalorder %s17, 0
      %p119 = por %p117, %p118
      %p120 = scmp.ne.s32.totalorder %s109, %s112
      %p121 = scmp.eq.s32.totalorder %s22, 1
      %p122 = por %p120, %p121
      %p123 = scmp.ne.s32.totalorder %s112, %s113
      %p124 = scmp.eq.s32.totalorder %s22, 0
      %p125 = por %p123, %p124
      %p126 = scmp.ne.s32.totalorder %s112, %s113
      %p127 = scmp.eq.s32.totalorder %s23, 1
      %p128 = por %p126, %p127
      %p130 = scmp.ne.s32.totalorder %s113, %s129
      %p131 = scmp.eq.s32.totalorder %s23, 0
      %p132 = por %p130, %p131
      %s134 = sadd.s32 %s133, 1
      %p137 = scmp.eq.s32.totalorder %s17, 1
      %p138 = scmp.ne.s32.totalorder %s133, %s135
      %p139 = scmp.eq.s32.totalorder %s17, 0
      %p140 = por %p138, %p139
      %p141 = scmp.ne.s32.totalorder %s133, %s135
      %p142 = scmp.eq.s32.totalorder %s22, 1
      %p143 = por %p141, %p142
      %p144 = scmp.ne.s32.totalorder %s135, %s136
      %p145 = scmp.eq.s32.totalorder %s22, 0
      %p146 = por %p144, %p145
      %p147 = scmp.ne.s32.totalorder %s135, %s136
      %p148 = scmp.eq.s32.totalorder %s23, 1
      %p149 = por %p147, %p148
      %p151 = scmp.ne.s32.totalorder %s136, %s150
      %p152 = scmp.eq.s32.totalorder %s23, 0
      %p153 = por %p151, %p152
      %s155 = sadd.s32 %s154, 1
      %p158 = scmp.eq.s32.totalorder %s17, 1
      %p159 = scmp.ne.s32.totalorder %s154, %s156
      %p160 = scmp.eq.s32.totalorder %s17, 0
      %p161 = por %p159, %p160
      %p162 = scmp.ne.s32.totalorder %s154, %s156
      %p163 = scmp.eq.s32.totalorder %s22, 1
      %p164 = por %p162, %p163
      %p165 = scmp.ne.s32.totalorder %s156, %s157
      %p166 = scmp.eq.s32.totalorder %s22, 0
      %p167 = por %p165, %p166
      %p168 = scmp.ne.s32.totalorder %s156, %s157
      %p169 = scmp.eq.s32.totalorder %s23, 1
      %p170 = por %p168, %p169
      %p172 = scmp.ne.s32.totalorder %s157, %s171
      %p173 = scmp.eq.s32.totalorder %s23, 0
      %p174 = por %p172, %p173
      %s176 = sadd.s32 %s175, 1
      %p179 = scmp.eq.s32.totalorder %s17, 1
      %p180 = scmp.ne.s32.totalorder %s175, %s177
      %p181 = scmp.eq.s32.totalorder %s17, 0
      %p182 = por %p180, %p181
      %p183 = scmp.ne.s32.totalorder %s175, %s177
      %p184 = scmp.eq.s32.totalorder %s22, 1
      %p185 = por %p183, %p184
      %p186 = scmp.ne.s32.totalorder %s177, %s178
      %p187 = scmp.eq.s32.totalorder %s22, 0
      %p188 = por %p186, %p187
      %p189 = scmp.ne.s32.totalorder %s177, %s178
      %p190 = scmp.eq.s32.totalorder %s23, 1
      %p191 = por %p189, %p190
      %p193 = scmp.ne.s32.totalorder %s178, %s192
      %p194 = scmp.eq.s32.totalorder %s23, 0
      %p195 = por %p193, %p194
      %s197 = sadd.s32 %s196, 1
      %p200 = scmp.eq.s32.totalorder %s17, 1
      %p201 = scmp.ne.s32.totalorder %s196, %s198
      %p202 = scmp.eq.s32.totalorder %s17, 0
      %p203 = por %p201, %p202
      %p204 = scmp.ne.s32.totalorder %s196, %s198
      %p205 = scmp.eq.s32.totalorder %s22, 1
      %p206 = por %p204, %p205
      %p207 = scmp.ne.s32.totalorder %s198, %s199
      %p208 = scmp.eq.s32.totalorder %s22, 0
      %p209 = por %p207, %p208
      %p210 = scmp.ne.s32.totalorder %s198, %s199
      %p211 = scmp.eq.s32.totalorder %s23, 1
      %p212 = por %p210, %p211
      %p214 = scmp.ne.s32.totalorder %s199, %s213
      %p215 = scmp.eq.s32.totalorder %s23, 0
      %p216 = por %p214, %p215
      %s218 = sadd.s32 %s217, 1
      %p221 = scmp.eq.s32.totalorder %s17, 1
      %p222 = scmp.ne.s32.totalorder %s217, %s219
      %p223 = scmp.eq.s32.totalorder %s17, 0
      %p224 = por %p222, %p223
      %p225 = scmp.ne.s32.totalorder %s217, %s219
      %p226 = scmp.eq.s32.totalorder %s22, 1
      %p227 = por %p225, %p226
      %p228 = scmp.ne.s32.totalorder %s219, %s220
      %p229 = scmp.eq.s32.totalorder %s22, 0
      %p230 = por %p228, %p229
      %p231 = scmp.ne.s32.totalorder %s219, %s220
      %p232 = scmp.eq.s32.totalorder %s23, 1
      %p233 = por %p231, %p232
      %p235 = scmp.ne.s32.totalorder %s220, %s234
      %p236 = scmp.eq.s32.totalorder %s23, 0
      %p237 = por %p235, %p236
      %s239 = sadd.s32 %s238, 1
      %p242 = scmp.eq.s32.totalorder %s17, 1
      %p243 = scmp.ne.s32.totalorder %s238, %s240
      %p244 = scmp.eq.s32.totalorder %s17, 0
      %p245 = por %p243, %p244
      %p246 = scmp.ne.s32.totalorder %s238, %s240
      %p247 = scmp.eq.s32.totalorder %s22, 1
      %p248 = por %p246, %p247
      %p249 = scmp.ne.s32.totalorder %s240, %s241
      %p250 = scmp.eq.s32.totalorder %s22, 0
      %p251 = por %p249, %p250
      %p252 = scmp.ne.s32.totalorder %s240, %s241
      %p253 = scmp.eq.s32.totalorder %s23, 1
      %p254 = por %p252, %p253
      %p256 = scmp.ne.s32.totalorder %s241, %s255
      %p257 = scmp.eq.s32.totalorder %s23, 0
      %p258 = por %p256, %p257
      %s260 = sadd.s32 %s259, 1
      %p263 = scmp.eq.s32.totalorder %s17, 1
      %p264 = scmp.ne.s32.totalorder %s259, %s261
      %p265 = scmp.eq.s32.totalorder %s17, 0
      %p266 = por %p264, %p265
      %p267 = scmp.ne.s32.totalorder %s259, %s261
      %p268 = scmp.eq.s32.totalorder %s22, 1
      %p269 = por %p267, %p268
      %p270 = scmp.ne.s32.totalorder %s261, %s262
      %p271 = scmp.eq.s32.totalorder %s22, 0
      %p272 = por %p270, %p271
      %p273 = scmp.ne.s32.totalorder %s261, %s262
      %p274 = scmp.eq.s32.totalorder %s23, 1
      %p275 = por %p273, %p274
      %p277 = scmp.ne.s32.totalorder %s262, %s276
      %p278 = scmp.eq.s32.totalorder %s23, 0
      %p279 = por %p277, %p278
      %s280 = ssub.s32 %s24, %s36
      %p281 = scmp.eq.s32.totalorder %s280, 0
      %s283 = sadd.s32 %s282, 1
      %s284 = scalar_select %p281, %s282, %s283
      %p287 = pneg %p281
      %p288 = scmp.eq.s32.totalorder %s17, 1
      %p289 = por %p287, %p288
      %p290 = scmp.ne.s32.totalorder %s282, %s285
      %p291 = scmp.eq.s32.totalorder %s17, 0
      %p292 = por %p290, %p291
      %p293 = scmp.ne.s32.totalorder %s282, %s285
      %p294 = scmp.eq.s32.totalorder %s22, 1
      %p295 = por %p293, %p294
      %p296 = scmp.ne.s32.totalorder %s285, %s286
      %p297 = scmp.eq.s32.totalorder %s22, 0
      %p298 = por %p296, %p297
      %p299 = scmp.ne.s32.totalorder %s285, %s286
      %p300 = scmp.eq.s32.totalorder %s23, 1
      %p301 = por %p299, %p300
      %p303 = scmp.ne.s32.totalorder %s286, %s302
      %p304 = scmp.eq.s32.totalorder %s23, 0
      %p305 = por %p303, %p304
      %p306 = scmp.le.s32.totalorder 1, %s17
      %p307 = scmp.lt.s32.totalorder %s17, 3
      %p308 = pnand %p306, %p307
      %p309 = pneg %p308
      // Predicated region
      $region9: #{td0_value_loss.1} parent=5 // pred_check
        _
      $region10: #{td0_value_loss.1} parent=5 // pred_check_branch
        %311 = sbr.rel (%p308) target = $region12
      $region11: #{td0_value_loss.1} parent=5 // pred_region
        %s312 = ssub.s32 %s17, 1
        // Predicated region
        $region13: #{td0_value_loss.1} parent=11 // pred_check
          %p313 = pneg %p146
        $region14: #{td0_value_loss.1} parent=11 // pred_check_branch
          %315 = sbr.rel (%p313) target = $region16
        $region15: #{td0_value_loss.1} parent=11 // pred_region
          _
        $region16: #{td0_value_loss.1} parent=11 // pred_fallthru
          _
        // Predicated region
        $region17: #{td0_value_loss.1} parent=11 // pred_check
          %p316 = pneg %p167
        $region18: #{td0_value_loss.1} parent=11 // pred_check_branch
          %318 = sbr.rel (%p316) target = $region20
        $region19: #{td0_value_loss.1} parent=11 // pred_region
          _
        $region20: #{td0_value_loss.1} parent=11 // pred_fallthru
          _
        // Predicated region
        $region21: #{td0_value_loss.1} parent=11 // pred_check
          %p319 = pneg %p188
        $region22: #{td0_value_loss.1} parent=11 // pred_check_branch
          %321 = sbr.rel (%p319) target = $region24
        $region23: #{td0_value_loss.1} parent=11 // pred_region
          _
        $region24: #{td0_value_loss.1} parent=11 // pred_fallthru
          _
        // Predicated region
        $region25: #{td0_value_loss.1} parent=11 // pred_check
          %p322 = pneg %p209
        $region26: #{td0_value_loss.1} parent=11 // pred_check_branch
          %324 = sbr.rel (%p322) target = $region28
        $region27: #{td0_value_loss.1} parent=11 // pred_region
          _
        $region28: #{td0_value_loss.1} parent=11 // pred_fallthru
          _
        // Predicated region
        $region29: #{td0_value_loss.1} parent=11 // pred_check
          %p325 = pneg %p230
        $region30: #{td0_value_loss.1} parent=11 // pred_check_branch
          %327 = sbr.rel (%p325) target = $region32
        $region31: #{td0_value_loss.1} parent=11 // pred_region
          _
        $region32: #{td0_value_loss.1} parent=11 // pred_fallthru
          _
        // Predicated region
        $region33: #{td0_value_loss.1} parent=11 // pred_check
          %p328 = pneg %p251
        $region34: #{td0_value_loss.1} parent=11 // pred_check_branch
          %330 = sbr.rel (%p328) target = $region36
        $region35: #{td0_value_loss.1} parent=11 // pred_region
          _
        $region36: #{td0_value_loss.1} parent=11 // pred_fallthru
          _
        // Predicated region
        $region37: #{td0_value_loss.1} parent=11 // pred_check
          %p331 = pneg %p272
        $region38: #{td0_value_loss.1} parent=11 // pred_check_branch
          %333 = sbr.rel (%p331) target = $region40
        $region39: #{td0_value_loss.1} parent=11 // pred_region
          %335 = vsyncadd [#allocation3], 0
          %s337 = sshll.u32 %s9, 4
          %s338 = int_to_ptr.vmem [resolvable:$true] %s337
          %340 = dma.vmem_to_smem %s338, 16, [#allocation2], [#allocation3]
        $region40: #{td0_value_loss.1} parent=11 // pred_fallthru
          _
      $region12: #{td0_value_loss.1} parent=5 // pred_fallthru
        _
      %p341 = scmp.lt.s32.totalorder %s17, 2
      // Predicated region
      $region41: #{td0_value_loss.1} parent=5 // pred_check
        %p342 = pneg %p341
      $region42: #{td0_value_loss.1} parent=5 // pred_check_branch
        %344 = sbr.rel (%p342) target = $region44
      $region43: #{td0_value_loss.1} parent=5 // pred_region
        // Predicated region
        $region45: #{td0_value_loss.1} parent=43 // pred_check
          %p345 = pneg %p55
        $region46: #{td0_value_loss.1} parent=43 // pred_check_branch
          %347 = sbr.rel (%p345) target = $region48
        $region47: #{td0_value_loss.1} parent=43 // pred_region
          %s348 = sadd.s32 %s24, %s25
          %p349 = scmp.lt.s32.totalorder %s348, 1
          %s350 = scalar_select %p349, %s348, 1
          %s351 = smul.u32 128, %s350
          %p352 = scmp.lt.s32.totalorder %s351, 255
          %s353 = scalar_select %p352, %s351, 255
          %s354 = smul.addr %s353, 8
          %s355 = scalar_lea.vmem %s0, %s354
          %s356 = sadd.s32 %s24, %s25
          %p357 = scmp.lt.s32.totalorder %s356, 1
          %s358 = scalar_select %p357, %s356, 1
          %s359 = smul.u32 128, %s358
        $region48: #{td0_value_loss.1} parent=43 // pred_fallthru
          _
        // Predicated region
        $region49: #{td0_value_loss.1} parent=43 // pred_check
          %p360 = pneg %p87
        $region50: #{td0_value_loss.1} parent=43 // pred_check_branch
          %362 = sbr.rel (%p360) target = $region52
        $region51: #{td0_value_loss.1} parent=43 // pred_region
          %s363 = sadd.s32 %s24, %s25
          %p364 = scmp.lt.s32.totalorder %s363, 1
          %s365 = scalar_select %p364, %s363, 1
          %s366 = smul.u32 128, %s365
          %p367 = scmp.lt.s32.totalorder %s366, 255
          %s368 = scalar_select %p367, %s366, 255
          %s369 = smul.addr %s368, 8
          %s370 = scalar_lea.vmem %s1, %s369
          %s371 = sadd.s32 %s24, %s25
          %p372 = scmp.lt.s32.totalorder %s371, 1
          %s373 = scalar_select %p372, %s371, 1
          %s374 = smul.u32 128, %s373
        $region52: #{td0_value_loss.1} parent=43 // pred_fallthru
          _
        // Predicated region
        $region53: #{td0_value_loss.1} parent=43 // pred_check
          %p375 = pneg %p119
        $region54: #{td0_value_loss.1} parent=43 // pred_check_branch
          %377 = sbr.rel (%p375) target = $region56
        $region55: #{td0_value_loss.1} parent=43 // pred_region
          %s378 = sadd.s32 %s24, %s25
          %p379 = scmp.lt.s32.totalorder %s378, 1
          %s380 = scalar_select %p379, %s378, 1
          %s381 = smul.u32 128, %s380
          %p382 = scmp.lt.s32.totalorder %s381, 255
          %s383 = scalar_select %p382, %s381, 255
          %s384 = smul.addr %s383, 8
          %s385 = scalar_lea.vmem %s2, %s384
          %s386 = sadd.s32 %s24, %s25
          %p387 = scmp.lt.s32.totalorder %s386, 1
          %s388 = scalar_select %p387, %s386, 1
          %s389 = smul.u32 128, %s388
        $region56: #{td0_value_loss.1} parent=43 // pred_fallthru
          _
      $region44: #{td0_value_loss.1} parent=5 // pred_fallthru
        _
      %p390 = scmp.le.s32.totalorder 1, %s17
      %p391 = scmp.lt.s32.totalorder %s17, 3
      %p392 = pnand %p390, %p391
      %p393 = pneg %p392
      // Predicated region
      $region57: #{td0_value_loss.1} parent=5 // pred_check
        _
      $region58: #{td0_value_loss.1} parent=5 // pred_check_branch
        %395 = sbr.rel (%p392) target = $region60
      $region59: #{td0_value_loss.1} parent=5 // pred_region
        %s396 = ssub.s32 %s17, 1
        // Predicated region
        $region61: #{td0_value_loss.1} parent=59 // pred_check
          %p397 = pneg %p272
        $region62: #{td0_value_loss.1} parent=59 // pred_check_branch
          %399 = sbr.rel (%p397) target = $region64
        $region63: #{td0_value_loss.1} parent=59 // pred_region
          %401 = dma.done [#allocation3], 16
        $region64: #{td0_value_loss.1} parent=59 // pred_fallthru
          _
        %402 = sfence
        %s403 = sadd.s32 %s26, %s27
        %p404 = scmp.lt.s32.totalorder %s403, 1
        %s405 = scalar_select %p404, %s403, 1
        %s406 = smul.u32 128, %s405
        %p407 = scmp.lt.s32.totalorder %s406, 255
        %s408 = scalar_select %p407, %s406, 255
        %s409 = smul.addr %s408, 8
        %s410 = scalar_lea.vmem %s0, %s409
        %p411 = pneg %p61
        %p412 = pneg %p58
        %s413 = sadd.s32 %s26, %s27
        %p414 = scmp.lt.s32.totalorder %s413, 1
        %s415 = scalar_select %p414, %s413, 1
        %s416 = smul.u32 128, %s415
        %p417 = scmp.lt.s32.totalorder %s416, 255
        %s418 = scalar_select %p417, %s416, 255
        %s419 = smul.addr %s418, 8
        %s420 = scalar_lea.vmem %s1, %s419
        %p421 = pneg %p93
        %p422 = pneg %p90
        %s423 = sadd.s32 %s26, %s27
        %p424 = scmp.lt.s32.totalorder %s423, 1
        %s425 = scalar_select %p424, %s423, 1
        %s426 = smul.u32 128, %s425
        %p427 = scmp.lt.s32.totalorder %s426, 255
        %s428 = scalar_select %p427, %s426, 255
        %s429 = smul.addr %s428, 8
        %s430 = scalar_lea.vmem %s2, %s429
        %p431 = pneg %p125
        %p432 = pneg %p122
        %p433 = pneg %p146
        %p434 = pneg %p143
        %p435 = pneg %p167
        %p436 = pneg %p164
        %p437 = pneg %p188
        %p438 = pneg %p185
        %p439 = pneg %p209
        %p440 = pneg %p206
        %p441 = pneg %p230
        %p442 = pneg %p227
        %p443 = pneg %p251
        %p444 = pneg %p248
        %p445 = pneg %p272
        %p446 = pneg %p269
        %p447 = pneg %p298
        %p448 = pneg %p295
        %p449 = scmp.lt.s32.totalorder %s26, 1
        %s450 = scalar_select %p449, %s26, 1
        %s451 = scalar_lea.vmem %s10, %s450
        %s452 = sadd.s32 %s26, %s27
        %p453 = scmp.lt.s32.totalorder %s452, 1
        %s454 = scalar_select %p453, %s452, 1
        %s455 = smul.u32 128, %s454
        %p456 = scmp.lt.s32.totalorder %s455, 255
        %s457 = scalar_select %p456, %s455, 255
        %s458 = smul.addr %s457, 8
        %s459 = scalar_lea.vmem %s0, %s458
        %s460 = sadd.s32 %s26, %s27
        %p461 = scmp.lt.s32.totalorder %s460, 1
        %s462 = scalar_select %p461, %s460, 1
        %s463 = smul.u32 128, %s462
        %s464 = sadd.s32 %s26, %s27
        %p465 = scmp.lt.s32.totalorder %s464, 1
        %s466 = scalar_select %p465, %s464, 1
        %s467 = smul.u32 128, %s466
        %p468 = scmp.lt.s32.totalorder %s467, 255
        %s469 = scalar_select %p468, %s467, 255
        %s470 = smul.addr %s469, 8
        %s471 = scalar_lea.vmem %s1, %s470
        %s472 = sadd.s32 %s26, %s27
        %p473 = scmp.lt.s32.totalorder %s472, 1
        %s474 = scalar_select %p473, %s472, 1
        %s475 = smul.u32 128, %s474
        %s476 = sadd.s32 %s26, %s27
        %p477 = scmp.lt.s32.totalorder %s476, 1
        %s478 = scalar_select %p477, %s476, 1
        %s479 = smul.u32 128, %s478
        %p480 = scmp.lt.s32.totalorder %s479, 255
        %s481 = scalar_select %p480, %s479, 255
        %s482 = smul.addr %s481, 8
        %s483 = scalar_lea.vmem %s2, %s482
        %s484 = sadd.s32 %s26, %s27
        %p485 = scmp.lt.s32.totalorder %s484, 1
        %s486 = scalar_select %p485, %s484, 1
        %s487 = smul.u32 128, %s486
        %p488 = scmp.lt.s32.totalorder %s26, 1
        %s489 = scalar_select %p488, %s26, 1
        %s490 = scalar_lea.vmem %s10, %s489
        %p492 = scmp.eq.s32.totalorder %s27, 0
        // Predicated region
        $region65: #{td0_value_loss.1} parent=59 // pred_check
          %p493 = pneg %p492
        $region66: #{td0_value_loss.1} parent=59 // pred_check_branch
          %495 = sbr.rel (%p493) target = $region68
        $region67: #{td0_value_loss.1} parent=59 // pred_region
          %496 = vst [vmem:[%s490] sm:$0x1] 0.0
        $region68: #{td0_value_loss.1} parent=59 // pred_fallthru
          _
        %v497 = vld [vmem:[%s459] sm:$0xff]
        %v498 = vld [vmem:[%s459 + $0x8] sm:$0xff]
        %v499 = vld [vmem:[%s459 + $0x10] sm:$0xff]
        %v500 = vld [vmem:[%s459 + $0x18] sm:$0xff]
        %v501 = vld [vmem:[%s459 + $0x20] sm:$0xff]
        %v502 = vld [vmem:[%s459 + $0x28] sm:$0xff]
        %v503 = vld [vmem:[%s459 + $0x30] sm:$0xff]
        %v504 = vld [vmem:[%s459 + $0x38] sm:$0xff]
        %v505 = vld [vmem:[%s459 + $0x40] sm:$0xff]
        %v506 = vld [vmem:[%s459 + $0x48] sm:$0xff]
        %v507 = vld [vmem:[%s459 + $0x50] sm:$0xff]
        %v508 = vld [vmem:[%s459 + $0x58] sm:$0xff]
        %v509 = vld [vmem:[%s459 + $0x60] sm:$0xff]
        %v510 = vld [vmem:[%s459 + $0x68] sm:$0xff]
        %v511 = vld [vmem:[%s459 + $0x70] sm:$0xff]
        %v512 = vld [vmem:[%s459 + $0x78] sm:$0xff]
        %v513 = vld [vmem:[%s459 + $0x80] sm:$0xff]
        %v514 = vld [vmem:[%s459 + $0x88] sm:$0xff]
        %v515 = vld [vmem:[%s459 + $0x90] sm:$0xff]
        %v516 = vld [vmem:[%s459 + $0x98] sm:$0xff]
        %v517 = vld [vmem:[%s459 + $0xa0] sm:$0xff]
        %v518 = vld [vmem:[%s459 + $0xa8] sm:$0xff]
        %v519 = vld [vmem:[%s459 + $0xb0] sm:$0xff]
        %v520 = vld [vmem:[%s459 + $0xb8] sm:$0xff]
        %v521 = vld [vmem:[%s459 + $0xc0] sm:$0xff]
        %v522 = vld [vmem:[%s459 + $0xc8] sm:$0xff]
        %v523 = vld [vmem:[%s459 + $0xd0] sm:$0xff]
        %v524 = vld [vmem:[%s459 + $0xd8] sm:$0xff]
        %v525 = vld [vmem:[%s459 + $0xe0] sm:$0xff]
        %v526 = vld [vmem:[%s459 + $0xe8] sm:$0xff]
        %v527 = vld [vmem:[%s459 + $0xf0] sm:$0xff]
        %v528 = vld [vmem:[%s459 + $0xf8] sm:$0xff]
        %v529 = vld [vmem:[%s459 + $0x100] sm:$0xff]
        %v530 = vld [vmem:[%s459 + $0x108] sm:$0xff]
        %v531 = vld [vmem:[%s459 + $0x110] sm:$0xff]
        %v532 = vld [vmem:[%s459 + $0x118] sm:$0xff]
        %v533 = vld [vmem:[%s459 + $0x120] sm:$0xff]
        %v534 = vld [vmem:[%s459 + $0x128] sm:$0xff]
        %v535 = vld [vmem:[%s459 + $0x130] sm:$0xff]
        %v536 = vld [vmem:[%s459 + $0x138] sm:$0xff]
        %v537 = vld [vmem:[%s459 + $0x140] sm:$0xff]
        %v538 = vld [vmem:[%s459 + $0x148] sm:$0xff]
        %v539 = vld [vmem:[%s459 + $0x150] sm:$0xff]
        %v540 = vld [vmem:[%s459 + $0x158] sm:$0xff]
        %v541 = vld [vmem:[%s459 + $0x160] sm:$0xff]
        %v542 = vld [vmem:[%s459 + $0x168] sm:$0xff]
        %v543 = vld [vmem:[%s459 + $0x170] sm:$0xff]
        %v544 = vld [vmem:[%s459 + $0x178] sm:$0xff]
        %v545 = vld [vmem:[%s459 + $0x180] sm:$0xff]
        %v546 = vld [vmem:[%s459 + $0x188] sm:$0xff]
        %v547 = vld [vmem:[%s459 + $0x190] sm:$0xff]
        %v548 = vld [vmem:[%s459 + $0x198] sm:$0xff]
        %v549 = vld [vmem:[%s459 + $0x1a0] sm:$0xff]
        %v550 = vld [vmem:[%s459 + $0x1a8] sm:$0xff]
        %v551 = vld [vmem:[%s459 + $0x1b0] sm:$0xff]
        %v552 = vld [vmem:[%s459 + $0x1b8] sm:$0xff]
        %v553 = vld [vmem:[%s459 + $0x1c0] sm:$0xff]
        %v554 = vld [vmem:[%s459 + $0x1c8] sm:$0xff]
        %v555 = vld [vmem:[%s459 + $0x1d0] sm:$0xff]
        %v556 = vld [vmem:[%s459 + $0x1d8] sm:$0xff]
        %v557 = vld [vmem:[%s459 + $0x1e0] sm:$0xff]
        %v558 = vld [vmem:[%s459 + $0x1e8] sm:$0xff]
        %v559 = vld [vmem:[%s459 + $0x1f0] sm:$0xff]
        %v560 = vld [vmem:[%s459 + $0x1f8] sm:$0xff]
        %v561 = vld [vmem:[%s459 + $0x200] sm:$0xff]
        %v562 = vld [vmem:[%s459 + $0x208] sm:$0xff]
        %v563 = vld [vmem:[%s459 + $0x210] sm:$0xff]
        %v564 = vld [vmem:[%s459 + $0x218] sm:$0xff]
        %v565 = vld [vmem:[%s459 + $0x220] sm:$0xff]
        %v566 = vld [vmem:[%s459 + $0x228] sm:$0xff]
        %v567 = vld [vmem:[%s459 + $0x230] sm:$0xff]
        %v568 = vld [vmem:[%s459 + $0x238] sm:$0xff]
        %v569 = vld [vmem:[%s459 + $0x240] sm:$0xff]
        %v570 = vld [vmem:[%s459 + $0x248] sm:$0xff]
        %v571 = vld [vmem:[%s459 + $0x250] sm:$0xff]
        %v572 = vld [vmem:[%s459 + $0x258] sm:$0xff]
        %v573 = vld [vmem:[%s459 + $0x260] sm:$0xff]
        %v574 = vld [vmem:[%s459 + $0x268] sm:$0xff]
        %v575 = vld [vmem:[%s459 + $0x270] sm:$0xff]
        %v576 = vld [vmem:[%s459 + $0x278] sm:$0xff]
        %v577 = vld [vmem:[%s459 + $0x280] sm:$0xff]
        %v578 = vld [vmem:[%s459 + $0x288] sm:$0xff]
        %v579 = vld [vmem:[%s459 + $0x290] sm:$0xff]
        %v580 = vld [vmem:[%s459 + $0x298] sm:$0xff]
        %v581 = vld [vmem:[%s459 + $0x2a0] sm:$0xff]
        %v582 = vld [vmem:[%s459 + $0x2a8] sm:$0xff]
        %v583 = vld [vmem:[%s459 + $0x2b0] sm:$0xff]
        %v584 = vld [vmem:[%s459 + $0x2b8] sm:$0xff]
        %v585 = vld [vmem:[%s459 + $0x2c0] sm:$0xff]
        %v586 = vld [vmem:[%s459 + $0x2c8] sm:$0xff]
        %v587 = vld [vmem:[%s459 + $0x2d0] sm:$0xff]
        %v588 = vld [vmem:[%s459 + $0x2d8] sm:$0xff]
        %v589 = vld [vmem:[%s459 + $0x2e0] sm:$0xff]
        %v590 = vld [vmem:[%s459 + $0x2e8] sm:$0xff]
        %v591 = vld [vmem:[%s459 + $0x2f0] sm:$0xff]
        %v592 = vld [vmem:[%s459 + $0x2f8] sm:$0xff]
        %v593 = vld [vmem:[%s459 + $0x300] sm:$0xff]
        %v594 = vld [vmem:[%s459 + $0x308] sm:$0xff]
        %v595 = vld [vmem:[%s459 + $0x310] sm:$0xff]
        %v596 = vld [vmem:[%s459 + $0x318] sm:$0xff]
        %v597 = vld [vmem:[%s459 + $0x320] sm:$0xff]
        %v598 = vld [vmem:[%s459 + $0x328] sm:$0xff]
        %v599 = vld [vmem:[%s459 + $0x330] sm:$0xff]
        %v600 = vld [vmem:[%s459 + $0x338] sm:$0xff]
        %v601 = vld [vmem:[%s459 + $0x340] sm:$0xff]
        %v602 = vld [vmem:[%s459 + $0x348] sm:$0xff]
        %v603 = vld [vmem:[%s459 + $0x350] sm:$0xff]
        %v604 = vld [vmem:[%s459 + $0x358] sm:$0xff]
        %v605 = vld [vmem:[%s459 + $0x360] sm:$0xff]
        %v606 = vld [vmem:[%s459 + $0x368] sm:$0xff]
        %v607 = vld [vmem:[%s459 + $0x370] sm:$0xff]
        %v608 = vld [vmem:[%s459 + $0x378] sm:$0xff]
        %v609 = vld [vmem:[%s459 + $0x380] sm:$0xff]
        %v610 = vld [vmem:[%s459 + $0x388] sm:$0xff]
        %v611 = vld [vmem:[%s459 + $0x390] sm:$0xff]
        %v612 = vld [vmem:[%s459 + $0x398] sm:$0xff]
        %v613 = vld [vmem:[%s459 + $0x3a0] sm:$0xff]
        %v614 = vld [vmem:[%s459 + $0x3a8] sm:$0xff]
        %v615 = vld [vmem:[%s459 + $0x3b0] sm:$0xff]
        %v616 = vld [vmem:[%s459 + $0x3b8] sm:$0xff]
        %v617 = vld [vmem:[%s459 + $0x3c0] sm:$0xff]
        %v618 = vld [vmem:[%s459 + $0x3c8] sm:$0xff]
        %v619 = vld [vmem:[%s459 + $0x3d0] sm:$0xff]
        %v620 = vld [vmem:[%s459 + $0x3d8] sm:$0xff]
        %v621 = vld [vmem:[%s459 + $0x3e0] sm:$0xff]
        %v622 = vld [vmem:[%s459 + $0x3e8] sm:$0xff]
        %v623 = vld [vmem:[%s459 + $0x3f0] sm:$0xff]
        %v624 = vld [vmem:[%s459 + $0x3f8] sm:$0xff]
        %v625 = vpack.c.bf16 %v498, %v497
        %v626 = vpack.c.bf16 %v500, %v499
        %v627 = vpack.c.bf16 %v502, %v501
        %v628 = vpack.c.bf16 %v504, %v503
        %v629 = vpack.c.bf16 %v506, %v505
        %v630 = vpack.c.bf16 %v508, %v507
        %v631 = vpack.c.bf16 %v510, %v509
        %v632 = vpack.c.bf16 %v512, %v511
        %v633 = vpack.c.bf16 %v514, %v513
        %v634 = vpack.c.bf16 %v516, %v515
        %v635 = vpack.c.bf16 %v518, %v517
        %v636 = vpack.c.bf16 %v520, %v519
        %v637 = vpack.c.bf16 %v522, %v521
        %v638 = vpack.c.bf16 %v524, %v523
        %v639 = vpack.c.bf16 %v526, %v525
        %v640 = vpack.c.bf16 %v528, %v527
        %v641 = vpack.c.bf16 %v530, %v529
        %v642 = vpack.c.bf16 %v532, %v531
        %v643 = vpack.c.bf16 %v534, %v533
        %v644 = vpack.c.bf16 %v536, %v535
        %v645 = vpack.c.bf16 %v538, %v537
        %v646 = vpack.c.bf16 %v540, %v539
        %v647 = vpack.c.bf16 %v542, %v541
        %v648 = vpack.c.bf16 %v544, %v543
        %v649 = vpack.c.bf16 %v546, %v545
        %v650 = vpack.c.bf16 %v548, %v547
        %v651 = vpack.c.bf16 %v550, %v549
        %v652 = vpack.c.bf16 %v552, %v551
        %v653 = vpack.c.bf16 %v554, %v553
        %v654 = vpack.c.bf16 %v556, %v555
        %v655 = vpack.c.bf16 %v558, %v557
        %v656 = vpack.c.bf16 %v560, %v559
        %v657 = vpack.c.bf16 %v562, %v561
        %v658 = vpack.c.bf16 %v564, %v563
        %v659 = vpack.c.bf16 %v566, %v565
        %v660 = vpack.c.bf16 %v568, %v567
        %v661 = vpack.c.bf16 %v570, %v569
        %v662 = vpack.c.bf16 %v572, %v571
        %v663 = vpack.c.bf16 %v574, %v573
        %v664 = vpack.c.bf16 %v576, %v575
        %v665 = vpack.c.bf16 %v578, %v577
        %v666 = vpack.c.bf16 %v580, %v579
        %v667 = vpack.c.bf16 %v582, %v581
        %v668 = vpack.c.bf16 %v584, %v583
        %v669 = vpack.c.bf16 %v586, %v585
        %v670 = vpack.c.bf16 %v588, %v587
        %v671 = vpack.c.bf16 %v590, %v589
        %v672 = vpack.c.bf16 %v592, %v591
        %v673 = vpack.c.bf16 %v594, %v593
        %v674 = vpack.c.bf16 %v596, %v595
        %v675 = vpack.c.bf16 %v598, %v597
        %v676 = vpack.c.bf16 %v600, %v599
        %v677 = vpack.c.bf16 %v602, %v601
        %v678 = vpack.c.bf16 %v604, %v603
        %v679 = vpack.c.bf16 %v606, %v605
        %v680 = vpack.c.bf16 %v608, %v607
        %v681 = vpack.c.bf16 %v610, %v609
        %v682 = vpack.c.bf16 %v612, %v611
        %v683 = vpack.c.bf16 %v614, %v613
        %v684 = vpack.c.bf16 %v616, %v615
        %v685 = vpack.c.bf16 %v618, %v617
        %v686 = vpack.c.bf16 %v620, %v619
        %v687 = vpack.c.bf16 %v622, %v621
        %v688 = vpack.c.bf16 %v624, %v623
        %v689 = vld [vmem:[%s471] sm:$0xff]
        %v690 = vld [vmem:[%s471 + $0x8] sm:$0xff]
        %v691 = vld [vmem:[%s471 + $0x10] sm:$0xff]
        %v692 = vld [vmem:[%s471 + $0x18] sm:$0xff]
        %v693 = vld [vmem:[%s471 + $0x20] sm:$0xff]
        %v694 = vld [vmem:[%s471 + $0x28] sm:$0xff]
        %v695 = vld [vmem:[%s471 + $0x30] sm:$0xff]
        %v696 = vld [vmem:[%s471 + $0x38] sm:$0xff]
        %v697 = vld [vmem:[%s471 + $0x40] sm:$0xff]
        %v698 = vld [vmem:[%s471 + $0x48] sm:$0xff]
        %v699 = vld [vmem:[%s471 + $0x50] sm:$0xff]
        %v700 = vld [vmem:[%s471 + $0x58] sm:$0xff]
        %v701 = vld [vmem:[%s471 + $0x60] sm:$0xff]
        %v702 = vld [vmem:[%s471 + $0x68] sm:$0xff]
        %v703 = vld [vmem:[%s471 + $0x70] sm:$0xff]
        %v704 = vld [vmem:[%s471 + $0x78] sm:$0xff]
        %v705 = vld [vmem:[%s471 + $0x80] sm:$0xff]
        %v706 = vld [vmem:[%s471 + $0x88] sm:$0xff]
        %v707 = vld [vmem:[%s471 + $0x90] sm:$0xff]
        %v708 = vld [vmem:[%s471 + $0x98] sm:$0xff]
        %v709 = vld [vmem:[%s471 + $0xa0] sm:$0xff]
        %v710 = vld [vmem:[%s471 + $0xa8] sm:$0xff]
        %v711 = vld [vmem:[%s471 + $0xb0] sm:$0xff]
        %v712 = vld [vmem:[%s471 + $0xb8] sm:$0xff]
        %v713 = vld [vmem:[%s471 + $0xc0] sm:$0xff]
        %v714 = vld [vmem:[%s471 + $0xc8] sm:$0xff]
        %v715 = vld [vmem:[%s471 + $0xd0] sm:$0xff]
        %v716 = vld [vmem:[%s471 + $0xd8] sm:$0xff]
        %v717 = vld [vmem:[%s471 + $0xe0] sm:$0xff]
        %v718 = vld [vmem:[%s471 + $0xe8] sm:$0xff]
        %v719 = vld [vmem:[%s471 + $0xf0] sm:$0xff]
        %v720 = vld [vmem:[%s471 + $0xf8] sm:$0xff]
        %v721 = vld [vmem:[%s471 + $0x100] sm:$0xff]
        %v722 = vld [vmem:[%s471 + $0x108] sm:$0xff]
        %v723 = vld [vmem:[%s471 + $0x110] sm:$0xff]
        %v724 = vld [vmem:[%s471 + $0x118] sm:$0xff]
        %v725 = vld [vmem:[%s471 + $0x120] sm:$0xff]
        %v726 = vld [vmem:[%s471 + $0x128] sm:$0xff]
        %v727 = vld [vmem:[%s471 + $0x130] sm:$0xff]
        %v728 = vld [vmem:[%s471 + $0x138] sm:$0xff]
        %v729 = vld [vmem:[%s471 + $0x140] sm:$0xff]
        %v730 = vld [vmem:[%s471 + $0x148] sm:$0xff]
        %v731 = vld [vmem:[%s471 + $0x150] sm:$0xff]
        %v732 = vld [vmem:[%s471 + $0x158] sm:$0xff]
        %v733 = vld [vmem:[%s471 + $0x160] sm:$0xff]
        %v734 = vld [vmem:[%s471 + $0x168] sm:$0xff]
        %v735 = vld [vmem:[%s471 + $0x170] sm:$0xff]
        %v736 = vld [vmem:[%s471 + $0x178] sm:$0xff]
        %v737 = vld [vmem:[%s471 + $0x180] sm:$0xff]
        %v738 = vld [vmem:[%s471 + $0x188] sm:$0xff]
        %v739 = vld [vmem:[%s471 + $0x190] sm:$0xff]
        %v740 = vld [vmem:[%s471 + $0x198] sm:$0xff]
        %v741 = vld [vmem:[%s471 + $0x1a0] sm:$0xff]
        %v742 = vld [vmem:[%s471 + $0x1a8] sm:$0xff]
        %v743 = vld [vmem:[%s471 + $0x1b0] sm:$0xff]
        %v744 = vld [vmem:[%s471 + $0x1b8] sm:$0xff]
        %v745 = vld [vmem:[%s471 + $0x1c0] sm:$0xff]
        %v746 = vld [vmem:[%s471 + $0x1c8] sm:$0xff]
        %v747 = vld [vmem:[%s471 + $0x1d0] sm:$0xff]
        %v748 = vld [vmem:[%s471 + $0x1d8] sm:$0xff]
        %v749 = vld [vmem:[%s471 + $0x1e0] sm:$0xff]
        %v750 = vld [vmem:[%s471 + $0x1e8] sm:$0xff]
        %v751 = vld [vmem:[%s471 + $0x1f0] sm:$0xff]
        %v752 = vld [vmem:[%s471 + $0x1f8] sm:$0xff]
        %v753 = vld [vmem:[%s471 + $0x200] sm:$0xff]
        %v754 = vld [vmem:[%s471 + $0x208] sm:$0xff]
        %v755 = vld [vmem:[%s471 + $0x210] sm:$0xff]
        %v756 = vld [vmem:[%s471 + $0x218] sm:$0xff]
        %v757 = vld [vmem:[%s471 + $0x220] sm:$0xff]
        %v758 = vld [vmem:[%s471 + $0x228] sm:$0xff]
        %v759 = vld [vmem:[%s471 + $0x230] sm:$0xff]
        %v760 = vld [vmem:[%s471 + $0x238] sm:$0xff]
        %v761 = vld [vmem:[%s471 + $0x240] sm:$0xff]
        %v762 = vld [vmem:[%s471 + $0x248] sm:$0xff]
        %v763 = vld [vmem:[%s471 + $0x250] sm:$0xff]
        %v764 = vld [vmem:[%s471 + $0x258] sm:$0xff]
        %v765 = vld [vmem:[%s471 + $0x260] sm:$0xff]
        %v766 = vld [vmem:[%s471 + $0x268] sm:$0xff]
        %v767 = vld [vmem:[%s471 + $0x270] sm:$0xff]
        %v768 = vld [vmem:[%s471 + $0x278] sm:$0xff]
        %v769 = vld [vmem:[%s471 + $0x280] sm:$0xff]
        %v770 = vld [vmem:[%s471 + $0x288] sm:$0xff]
        %v771 = vld [vmem:[%s471 + $0x290] sm:$0xff]
        %v772 = vld [vmem:[%s471 + $0x298] sm:$0xff]
        %v773 = vld [vmem:[%s471 + $0x2a0] sm:$0xff]
        %v774 = vld [vmem:[%s471 + $0x2a8] sm:$0xff]
        %v775 = vld [vmem:[%s471 + $0x2b0] sm:$0xff]
        %v776 = vld [vmem:[%s471 + $0x2b8] sm:$0xff]
        %v777 = vld [vmem:[%s471 + $0x2c0] sm:$0xff]
        %v778 = vld [vmem:[%s471 + $0x2c8] sm:$0xff]
        %v779 = vld [vmem:[%s471 + $0x2d0] sm:$0xff]
        %v780 = vld [vmem:[%s471 + $0x2d8] sm:$0xff]
        %v781 = vld [vmem:[%s471 + $0x2e0] sm:$0xff]
        %v782 = vld [vmem:[%s471 + $0x2e8] sm:$0xff]
        %v783 = vld [vmem:[%s471 + $0x2f0] sm:$0xff]
        %v784 = vld [vmem:[%s471 + $0x2f8] sm:$0xff]
        %v785 = vld [vmem:[%s471 + $0x300] sm:$0xff]
        %v786 = vld [vmem:[%s471 + $0x308] sm:$0xff]
        %v787 = vld [vmem:[%s471 + $0x310] sm:$0xff]
        %v788 = vld [vmem:[%s471 + $0x318] sm:$0xff]
        %v789 = vld [vmem:[%s471 + $0x320] sm:$0xff]
        %v790 = vld [vmem:[%s471 + $0x328] sm:$0xff]
        %v791 = vld [vmem:[%s471 + $0x330] sm:$0xff]
        %v792 = vld [vmem:[%s471 + $0x338] sm:$0xff]
        %v793 = vld [vmem:[%s471 + $0x340] sm:$0xff]
        %v794 = vld [vmem:[%s471 + $0x348] sm:$0xff]
        %v795 = vld [vmem:[%s471 + $0x350] sm:$0xff]
        %v796 = vld [vmem:[%s471 + $0x358] sm:$0xff]
        %v797 = vld [vmem:[%s471 + $0x360] sm:$0xff]
        %v798 = vld [vmem:[%s471 + $0x368] sm:$0xff]
        %v799 = vld [vmem:[%s471 + $0x370] sm:$0xff]
        %v800 = vld [vmem:[%s471 + $0x378] sm:$0xff]
        %v801 = vld [vmem:[%s471 + $0x380] sm:$0xff]
        %v802 = vld [vmem:[%s471 + $0x388] sm:$0xff]
        %v803 = vld [vmem:[%s471 + $0x390] sm:$0xff]
        %v804 = vld [vmem:[%s471 + $0x398] sm:$0xff]
        %v805 = vld [vmem:[%s471 + $0x3a0] sm:$0xff]
        %v806 = vld [vmem:[%s471 + $0x3a8] sm:$0xff]
        %v807 = vld [vmem:[%s471 + $0x3b0] sm:$0xff]
        %v808 = vld [vmem:[%s471 + $0x3b8] sm:$0xff]
        %v809 = vld [vmem:[%s471 + $0x3c0] sm:$0xff]
        %v810 = vld [vmem:[%s471 + $0x3c8] sm:$0xff]
        %v811 = vld [vmem:[%s471 + $0x3d0] sm:$0xff]
        %v812 = vld [vmem:[%s471 + $0x3d8] sm:$0xff]
        %v813 = vld [vmem:[%s471 + $0x3e0] sm:$0xff]
        %v814 = vld [vmem:[%s471 + $0x3e8] sm:$0xff]
        %v815 = vld [vmem:[%s471 + $0x3f0] sm:$0xff]
        %v816 = vld [vmem:[%s471 + $0x3f8] sm:$0xff]
        %v817 = vpack.c.bf16 %v690, %v689
        %v818 = vpack.c.bf16 %v692, %v691
        %v819 = vpack.c.bf16 %v694, %v693
        %v820 = vpack.c.bf16 %v696, %v695
        %v821 = vpack.c.bf16 %v698, %v697
        %v822 = vpack.c.bf16 %v700, %v699
        %v823 = vpack.c.bf16 %v702, %v701
        %v824 = vpack.c.bf16 %v704, %v703
        %v825 = vpack.c.bf16 %v706, %v705
        %v826 = vpack.c.bf16 %v708, %v707
        %v827 = vpack.c.bf16 %v710, %v709
        %v828 = vpack.c.bf16 %v712, %v711
        %v829 = vpack.c.bf16 %v714, %v713
        %v830 = vpack.c.bf16 %v716, %v715
        %v831 = vpack.c.bf16 %v718, %v717
        %v832 = vpack.c.bf16 %v720, %v719
        %v833 = vpack.c.bf16 %v722, %v721
        %v834 = vpack.c.bf16 %v724, %v723
        %v835 = vpack.c.bf16 %v726, %v725
        %v836 = vpack.c.bf16 %v728, %v727
        %v837 = vpack.c.bf16 %v730, %v729
        %v838 = vpack.c.bf16 %v732, %v731
        %v839 = vpack.c.bf16 %v734, %v733
        %v840 = vpack.c.bf16 %v736, %v735
        %v841 = vpack.c.bf16 %v738, %v737
        %v842 = vpack.c.bf16 %v740, %v739
        %v843 = vpack.c.bf16 %v742, %v741
        %v844 = vpack.c.bf16 %v744, %v743
        %v845 = vpack.c.bf16 %v746, %v745
        %v846 = vpack.c.bf16 %v748, %v747
        %v847 = vpack.c.bf16 %v750, %v749
        %v848 = vpack.c.bf16 %v752, %v751
        %v849 = vpack.c.bf16 %v754, %v753
        %v850 = vpack.c.bf16 %v756, %v755
        %v851 = vpack.c.bf16 %v758, %v757
        %v852 = vpack.c.bf16 %v760, %v759
        %v853 = vpack.c.bf16 %v762, %v761
        %v854 = vpack.c.bf16 %v764, %v763
        %v855 = vpack.c.bf16 %v766, %v765
        %v856 = vpack.c.bf16 %v768, %v767
        %v857 = vpack.c.bf16 %v770, %v769
        %v858 = vpack.c.bf16 %v772, %v771
        %v859 = vpack.c.bf16 %v774, %v773
        %v860 = vpack.c.bf16 %v776, %v775
        %v861 = vpack.c.bf16 %v778, %v777
        %v862 = vpack.c.bf16 %v780, %v779
        %v863 = vpack.c.bf16 %v782, %v781
        %v864 = vpack.c.bf16 %v784, %v783
        %v865 = vpack.c.bf16 %v786, %v785
        %v866 = vpack.c.bf16 %v788, %v787
        %v867 = vpack.c.bf16 %v790, %v789
        %v868 = vpack.c.bf16 %v792, %v791
        %v869 = vpack.c.bf16 %v794, %v793
        %v870 = vpack.c.bf16 %v796, %v795
        %v871 = vpack.c.bf16 %v798, %v797
        %v872 = vpack.c.bf16 %v800, %v799
        %v873 = vpack.c.bf16 %v802, %v801
        %v874 = vpack.c.bf16 %v804, %v803
        %v875 = vpack.c.bf16 %v806, %v805
        %v876 = vpack.c.bf16 %v808, %v807
        %v877 = vpack.c.bf16 %v810, %v809
        %v878 = vpack.c.bf16 %v812, %v811
        %v879 = vpack.c.bf16 %v814, %v813
        %v880 = vpack.c.bf16 %v816, %v815
        %v881 = vld [vmem:[%s3] sm:$0xf]
        %v882 = vld [vmem:[%s3 + $0x4] sm:$0xf]
        %v883 = vld [vmem:[%s3 + $0x8] sm:$0xf]
        %v884 = vld [vmem:[%s3 + $0xc] sm:$0xf]
        %v885 = vld [vmem:[%s5] sm:$0x1]
        %v887 = vperm.slane %v885, 0
        %v893 = vunpack.c.l.b16 %v881
        %v894 = vunpack.c.l.b16 %v882
        %v895 = vunpack.c.l.b16 %v883
        %v896 = vunpack.c.l.b16 %v884
        %v897 = vpack.c.b16 %v894, %v893
        %v898 = vpack.c.b16 %v896, %v895
        %vm901 = vcmask 261120
        %v903 = vsel %vm901, %v625, 0
        %v906 = vsel %vm901, %v626, 0
        %v909 = vsel %vm901, %v627, 0
        %v912 = vsel %vm901, %v628, 0
        %v915 = vsel %vm901, %v629, 0
        %v918 = vsel %vm901, %v630, 0
        %v921 = vsel %vm901, %v631, 0
        %v924 = vsel %vm901, %v632, 0
        %v927 = vsel %vm901, %v633, 0
        %v930 = vsel %vm901, %v634, 0
        %v933 = vsel %vm901, %v635, 0
        %v936 = vsel %vm901, %v636, 0
        %v939 = vsel %vm901, %v637, 0
        %v942 = vsel %vm901, %v638, 0
        %v945 = vsel %vm901, %v639, 0
        %v948 = vsel %vm901, %v640, 0
        %v951 = vsel %vm901, %v641, 0
        %v954 = vsel %vm901, %v642, 0
        %v957 = vsel %vm901, %v643, 0
        %v960 = vsel %vm901, %v644, 0
        %v963 = vsel %vm901, %v645, 0
        %v966 = vsel %vm901, %v646, 0
        %v969 = vsel %vm901, %v647, 0
        %v972 = vsel %vm901, %v648, 0
        %v975 = vsel %vm901, %v649, 0
        %v978 = vsel %vm901, %v650, 0
        %v981 = vsel %vm901, %v651, 0
        %v984 = vsel %vm901, %v652, 0
        %v987 = vsel %vm901, %v653, 0
        %v990 = vsel %vm901, %v654, 0
        %v993 = vsel %vm901, %v655, 0
        %v996 = vsel %vm901, %v656, 0
        %v999 = vsel %vm901, %v657, 0
        %v1002 = vsel %vm901, %v658, 0
        %v1005 = vsel %vm901, %v659, 0
        %v1008 = vsel %vm901, %v660, 0
        %v1011 = vsel %vm901, %v661, 0
        %v1014 = vsel %vm901, %v662, 0
        %v1017 = vsel %vm901, %v663, 0
        %v1020 = vsel %vm901, %v664, 0
        %v1023 = vsel %vm901, %v665, 0
        %v1026 = vsel %vm901, %v666, 0
        %v1029 = vsel %vm901, %v667, 0
        %v1032 = vsel %vm901, %v668, 0
        %v1035 = vsel %vm901, %v669, 0
        %v1038 = vsel %vm901, %v670, 0
        %v1041 = vsel %vm901, %v671, 0
        %v1044 = vsel %vm901, %v672, 0
        %v1047 = vsel %vm901, %v673, 0
        %v1050 = vsel %vm901, %v674, 0
        %v1053 = vsel %vm901, %v675, 0
        %v1056 = vsel %vm901, %v676, 0
        %v1059 = vsel %vm901, %v677, 0
        %v1062 = vsel %vm901, %v678, 0
        %v1065 = vsel %vm901, %v679, 0
        %v1068 = vsel %vm901, %v680, 0
        %v1071 = vsel %vm901, %v681, 0
        %v1074 = vsel %vm901, %v682, 0
        %v1077 = vsel %vm901, %v683, 0
        %v1080 = vsel %vm901, %v684, 0
        %v1083 = vsel %vm901, %v685, 0
        %v1086 = vsel %vm901, %v686, 0
        %v1089 = vsel %vm901, %v687, 0
        %v1092 = vsel %vm901, %v688, 0
        %1094 = vmatpush.bf16.msra.mxu0 0
        %1095 = vmatpush.bf16.msra.mxu0 0
        %1096 = vmatpush.bf16.msra.mxu0 0
        %1097 = vmatpush.bf16.msra.mxu0 0
        %1098 = vmatpush.bf16.msra.mxu0 0
        %1099 = vmatpush.bf16.msra.mxu0 0
        %1100 = vmatpush.bf16.msra.mxu0 %v898
        %1101 = vmatpush.bf16.msra.mxu0 %v897
        %1102 = vmatmul.bf16.gmra.mxu0 %v903
        %v1103 = vpop.f32.mrf.mxu0
        %v1104 = vadd.f32 %v887, %v1103
        %v1105 = vpop.f32.mrf.mxu0
        %v1106 = vadd.f32 %v887, %v1105
        %1107 = vmatmul.bf16.gmra.mxu0 %v906
        %v1108 = vpop.f32.mrf.mxu0
        %v1109 = vadd.f32 %v887, %v1108
        %v1110 = vpop.f32.mrf.mxu0
        %v1111 = vadd.f32 %v887, %v1110
        %1112 = vmatmul.bf16.gmra.mxu0 %v909
        %v1113 = vpop.f32.mrf.mxu0
        %v1114 = vadd.f32 %v887, %v1113
        %v1115 = vpop.f32.mrf.mxu0
        %v1116 = vadd.f32 %v887, %v1115
        %1117 = vmatmul.bf16.gmra.mxu0 %v912
        %v1118 = vpop.f32.mrf.mxu0
        %v1119 = vadd.f32 %v887, %v1118
        %v1120 = vpop.f32.mrf.mxu0
        %v1121 = vadd.f32 %v887, %v1120
        %1122 = vmatmul.bf16.gmra.mxu0 %v915
        %v1123 = vpop.f32.mrf.mxu0
        %v1124 = vadd.f32 %v887, %v1123
        %v1125 = vpop.f32.mrf.mxu0
        %v1126 = vadd.f32 %v887, %v1125
        %1127 = vmatmul.bf16.gmra.mxu0 %v918
        %v1128 = vpop.f32.mrf.mxu0
        %v1129 = vadd.f32 %v887, %v1128
        %v1130 = vpop.f32.mrf.mxu0
        %v1131 = vadd.f32 %v887, %v1130
        %1132 = vmatmul.bf16.gmra.mxu0 %v921
        %v1133 = vpop.f32.mrf.mxu0
        %v1134 = vadd.f32 %v887, %v1133
        %v1135 = vpop.f32.mrf.mxu0
        %v1136 = vadd.f32 %v887, %v1135
        %1137 = vmatmul.bf16.gmra.mxu0 %v924
        %v1138 = vpop.f32.mrf.mxu0
        %v1139 = vadd.f32 %v887, %v1138
        %v1140 = vpop.f32.mrf.mxu0
        %v1141 = vadd.f32 %v887, %v1140
        %1142 = vmatmul.bf16.gmra.mxu0 %v927
        %v1143 = vpop.f32.mrf.mxu0
        %v1144 = vadd.f32 %v887, %v1143
        %v1145 = vpop.f32.mrf.mxu0
        %v1146 = vadd.f32 %v887, %v1145
        %1147 = vmatmul.bf16.gmra.mxu0 %v930
        %v1148 = vpop.f32.mrf.mxu0
        %v1149 = vadd.f32 %v887, %v1148
        %v1150 = vpop.f32.mrf.mxu0
        %v1151 = vadd.f32 %v887, %v1150
        %1152 = vmatmul.bf16.gmra.mxu0 %v933
        %v1153 = vpop.f32.mrf.mxu0
        %v1154 = vadd.f32 %v887, %v1153
        %v1155 = vpop.f32.mrf.mxu0
        %v1156 = vadd.f32 %v887, %v1155
        %1157 = vmatmul.bf16.gmra.mxu0 %v936
        %v1158 = vpop.f32.mrf.mxu0
        %v1159 = vadd.f32 %v887, %v1158
        %v1160 = vpop.f32.mrf.mxu0
        %v1161 = vadd.f32 %v887, %v1160
        %1162 = vmatmul.bf16.gmra.mxu0 %v939
        %v1163 = vpop.f32.mrf.mxu0
        %v1164 = vadd.f32 %v887, %v1163
        %v1165 = vpop.f32.mrf.mxu0
        %v1166 = vadd.f32 %v887, %v1165
        %1167 = vmatmul.bf16.gmra.mxu0 %v942
        %v1168 = vpop.f32.mrf.mxu0
        %v1169 = vadd.f32 %v887, %v1168
        %v1170 = vpop.f32.mrf.mxu0
        %v1171 = vadd.f32 %v887, %v1170
        %1172 = vmatmul.bf16.gmra.mxu0 %v945
        %v1173 = vpop.f32.mrf.mxu0
        %v1174 = vadd.f32 %v887, %v1173
        %v1175 = vpop.f32.mrf.mxu0
        %v1176 = vadd.f32 %v887, %v1175
        %1177 = vmatmul.bf16.gmra.mxu0 %v948
        %v1178 = vpop.f32.mrf.mxu0
        %v1179 = vadd.f32 %v887, %v1178
        %v1180 = vpop.f32.mrf.mxu0
        %v1181 = vadd.f32 %v887, %v1180
        %1182 = vmatmul.bf16.gmra.mxu0 %v951
        %v1183 = vpop.f32.mrf.mxu0
        %v1184 = vadd.f32 %v887, %v1183
        %v1185 = vpop.f32.mrf.mxu0
        %v1186 = vadd.f32 %v887, %v1185
        %1187 = vmatmul.bf16.gmra.mxu0 %v954
        %v1188 = vpop.f32.mrf.mxu0
        %v1189 = vadd.f32 %v887, %v1188
        %v1190 = vpop.f32.mrf.mxu0
        %v1191 = vadd.f32 %v887, %v1190
        %1192 = vmatmul.bf16.gmra.mxu0 %v957
        %v1193 = vpop.f32.mrf.mxu0
        %v1194 = vadd.f32 %v887, %v1193
        %v1195 = vpop.f32.mrf.mxu0
        %v1196 = vadd.f32 %v887, %v1195
        %1197 = vmatmul.bf16.gmra.mxu0 %v960
        %v1198 = vpop.f32.mrf.mxu0
        %v1199 = vadd.f32 %v887, %v1198
        %v1200 = vpop.f32.mrf.mxu0
        %v1201 = vadd.f32 %v887, %v1200
        %1202 = vmatmul.bf16.gmra.mxu0 %v963
        %v1203 = vpop.f32.mrf.mxu0
        %v1204 = vadd.f32 %v887, %v1203
        %v1205 = vpop.f32.mrf.mxu0
        %v1206 = vadd.f32 %v887, %v1205
        %1207 = vmatmul.bf16.gmra.mxu0 %v966
        %v1208 = vpop.f32.mrf.mxu0
        %v1209 = vadd.f32 %v887, %v1208
        %v1210 = vpop.f32.mrf.mxu0
        %v1211 = vadd.f32 %v887, %v1210
        %1212 = vmatmul.bf16.gmra.mxu0 %v969
        %v1213 = vpop.f32.mrf.mxu0
        %v1214 = vadd.f32 %v887, %v1213
        %v1215 = vpop.f32.mrf.mxu0
        %v1216 = vadd.f32 %v887, %v1215
        %1217 = vmatmul.bf16.gmra.mxu0 %v972
        %v1218 = vpop.f32.mrf.mxu0
        %v1219 = vadd.f32 %v887, %v1218
        %v1220 = vpop.f32.mrf.mxu0
        %v1221 = vadd.f32 %v887, %v1220
        %1222 = vmatmul.bf16.gmra.mxu0 %v975
        %v1223 = vpop.f32.mrf.mxu0
        %v1224 = vadd.f32 %v887, %v1223
        %v1225 = vpop.f32.mrf.mxu0
        %v1226 = vadd.f32 %v887, %v1225
        %1227 = vmatmul.bf16.gmra.mxu0 %v978
        %v1228 = vpop.f32.mrf.mxu0
        %v1229 = vadd.f32 %v887, %v1228
        %v1230 = vpop.f32.mrf.mxu0
        %v1231 = vadd.f32 %v887, %v1230
        %1232 = vmatmul.bf16.gmra.mxu0 %v981
        %v1233 = vpop.f32.mrf.mxu0
        %v1234 = vadd.f32 %v887, %v1233
        %v1235 = vpop.f32.mrf.mxu0
        %v1236 = vadd.f32 %v887, %v1235
        %1237 = vmatmul.bf16.gmra.mxu0 %v984
        %v1238 = vpop.f32.mrf.mxu0
        %v1239 = vadd.f32 %v887, %v1238
        %v1240 = vpop.f32.mrf.mxu0
        %v1241 = vadd.f32 %v887, %v1240
        %1242 = vmatmul.bf16.gmra.mxu0 %v987
        %v1243 = vpop.f32.mrf.mxu0
        %v1244 = vadd.f32 %v887, %v1243
        %v1245 = vpop.f32.mrf.mxu0
        %v1246 = vadd.f32 %v887, %v1245
        %1247 = vmatmul.bf16.gmra.mxu0 %v990
        %v1248 = vpop.f32.mrf.mxu0
        %v1249 = vadd.f32 %v887, %v1248
        %v1250 = vpop.f32.mrf.mxu0
        %v1251 = vadd.f32 %v887, %v1250
        %1252 = vmatmul.bf16.gmra.mxu0 %v993
        %v1253 = vpop.f32.mrf.mxu0
        %v1254 = vadd.f32 %v887, %v1253
        %v1255 = vpop.f32.mrf.mxu0
        %v1256 = vadd.f32 %v887, %v1255
        %1257 = vmatmul.bf16.gmra.mxu0 %v996
        %v1258 = vpop.f32.mrf.mxu0
        %v1259 = vadd.f32 %v887, %v1258
        %v1260 = vpop.f32.mrf.mxu0
        %v1261 = vadd.f32 %v887, %v1260
        %1262 = vmatmul.bf16.gmra.mxu0 %v999
        %v1263 = vpop.f32.mrf.mxu0
        %v1264 = vadd.f32 %v887, %v1263
        %v1265 = vpop.f32.mrf.mxu0
        %v1266 = vadd.f32 %v887, %v1265
        %1267 = vmatmul.bf16.gmra.mxu0 %v1002
        %v1268 = vpop.f32.mrf.mxu0
        %v1269 = vadd.f32 %v887, %v1268
        %v1270 = vpop.f32.mrf.mxu0
        %v1271 = vadd.f32 %v887, %v1270
        %1272 = vmatmul.bf16.gmra.mxu0 %v1005
        %v1273 = vpop.f32.mrf.mxu0
        %v1274 = vadd.f32 %v887, %v1273
        %v1275 = vpop.f32.mrf.mxu0
        %v1276 = vadd.f32 %v887, %v1275
        %1277 = vmatmul.bf16.gmra.mxu0 %v1008
        %v1278 = vpop.f32.mrf.mxu0
        %v1279 = vadd.f32 %v887, %v1278
        %v1280 = vpop.f32.mrf.mxu0
        %v1281 = vadd.f32 %v887, %v1280
        %1282 = vmatmul.bf16.gmra.mxu0 %v1011
        %v1283 = vpop.f32.mrf.mxu0
        %v1284 = vadd.f32 %v887, %v1283
        %v1285 = vpop.f32.mrf.mxu0
        %v1286 = vadd.f32 %v887, %v1285
        %1287 = vmatmul.bf16.gmra.mxu0 %v1014
        %v1288 = vpop.f32.mrf.mxu0
        %v1289 = vadd.f32 %v887, %v1288
        %v1290 = vpop.f32.mrf.mxu0
        %v1291 = vadd.f32 %v887, %v1290
        %1292 = vmatmul.bf16.gmra.mxu0 %v1017
        %v1293 = vpop.f32.mrf.mxu0
        %v1294 = vadd.f32 %v887, %v1293
        %v1295 = vpop.f32.mrf.mxu0
        %v1296 = vadd.f32 %v887, %v1295
        %1297 = vmatmul.bf16.gmra.mxu0 %v1020
        %v1298 = vpop.f32.mrf.mxu0
        %v1299 = vadd.f32 %v887, %v1298
        %v1300 = vpop.f32.mrf.mxu0
        %v1301 = vadd.f32 %v887, %v1300
        %1302 = vmatmul.bf16.gmra.mxu0 %v1023
        %v1303 = vpop.f32.mrf.mxu0
        %v1304 = vadd.f32 %v887, %v1303
        %v1305 = vpop.f32.mrf.mxu0
        %v1306 = vadd.f32 %v887, %v1305
        %1307 = vmatmul.bf16.gmra.mxu0 %v1026
        %v1308 = vpop.f32.mrf.mxu0
        %v1309 = vadd.f32 %v887, %v1308
        %v1310 = vpop.f32.mrf.mxu0
        %v1311 = vadd.f32 %v887, %v1310
        %1312 = vmatmul.bf16.gmra.mxu0 %v1029
        %v1313 = vpop.f32.mrf.mxu0
        %v1314 = vadd.f32 %v887, %v1313
        %v1315 = vpop.f32.mrf.mxu0
        %v1316 = vadd.f32 %v887, %v1315
        %1317 = vmatmul.bf16.gmra.mxu0 %v1032
        %v1318 = vpop.f32.mrf.mxu0
        %v1319 = vadd.f32 %v887, %v1318
        %v1320 = vpop.f32.mrf.mxu0
        %v1321 = vadd.f32 %v887, %v1320
        %1322 = vmatmul.bf16.gmra.mxu0 %v1035
        %v1323 = vpop.f32.mrf.mxu0
        %v1324 = vadd.f32 %v887, %v1323
        %v1325 = vpop.f32.mrf.mxu0
        %v1326 = vadd.f32 %v887, %v1325
        %1327 = vmatmul.bf16.gmra.mxu0 %v1038
        %v1328 = vpop.f32.mrf.mxu0
        %v1329 = vadd.f32 %v887, %v1328
        %v1330 = vpop.f32.mrf.mxu0
        %v1331 = vadd.f32 %v887, %v1330
        %1332 = vmatmul.bf16.gmra.mxu0 %v1041
        %v1333 = vpop.f32.mrf.mxu0
        %v1334 = vadd.f32 %v887, %v1333
        %v1335 = vpop.f32.mrf.mxu0
        %v1336 = vadd.f32 %v887, %v1335
        %1337 = vmatmul.bf16.gmra.mxu0 %v1044
        %v1338 = vpop.f32.mrf.mxu0
        %v1339 = vadd.f32 %v887, %v1338
        %v1340 = vpop.f32.mrf.mxu0
        %v1341 = vadd.f32 %v887, %v1340
        %1342 = vmatmul.bf16.gmra.mxu0 %v1047
        %v1343 = vpop.f32.mrf.mxu0
        %v1344 = vadd.f32 %v887, %v1343
        %v1345 = vpop.f32.mrf.mxu0
        %v1346 = vadd.f32 %v887, %v1345
        %1347 = vmatmul.bf16.gmra.mxu0 %v1050
        %v1348 = vpop.f32.mrf.mxu0
        %v1349 = vadd.f32 %v887, %v1348
        %v1350 = vpop.f32.mrf.mxu0
        %v1351 = vadd.f32 %v887, %v1350
        %1352 = vmatmul.bf16.gmra.mxu0 %v1053
        %v1353 = vpop.f32.mrf.mxu0
        %v1354 = vadd.f32 %v887, %v1353
        %v1355 = vpop.f32.mrf.mxu0
        %v1356 = vadd.f32 %v887, %v1355
        %1357 = vmatmul.bf16.gmra.mxu0 %v1056
        %v1358 = vpop.f32.mrf.mxu0
        %v1359 = vadd.f32 %v887, %v1358
        %v1360 = vpop.f32.mrf.mxu0
        %v1361 = vadd.f32 %v887, %v1360
        %1362 = vmatmul.bf16.gmra.mxu0 %v1059
        %v1363 = vpop.f32.mrf.mxu0
        %v1364 = vadd.f32 %v887, %v1363
        %v1365 = vpop.f32.mrf.mxu0
        %v1366 = vadd.f32 %v887, %v1365
        %1367 = vmatmul.bf16.gmra.mxu0 %v1062
        %v1368 = vpop.f32.mrf.mxu0
        %v1369 = vadd.f32 %v887, %v1368
        %v1370 = vpop.f32.mrf.mxu0
        %v1371 = vadd.f32 %v887, %v1370
        %1372 = vmatmul.bf16.gmra.mxu0 %v1065
        %v1373 = vpop.f32.mrf.mxu0
        %v1374 = vadd.f32 %v887, %v1373
        %v1375 = vpop.f32.mrf.mxu0
        %v1376 = vadd.f32 %v887, %v1375
        %1377 = vmatmul.bf16.gmra.mxu0 %v1068
        %v1378 = vpop.f32.mrf.mxu0
        %v1379 = vadd.f32 %v887, %v1378
        %v1380 = vpop.f32.mrf.mxu0
        %v1381 = vadd.f32 %v887, %v1380
        %1382 = vmatmul.bf16.gmra.mxu0 %v1071
        %v1383 = vpop.f32.mrf.mxu0
        %v1384 = vadd.f32 %v887, %v1383
        %v1385 = vpop.f32.mrf.mxu0
        %v1386 = vadd.f32 %v887, %v1385
        %1387 = vmatmul.bf16.gmra.mxu0 %v1074
        %v1388 = vpop.f32.mrf.mxu0
        %v1389 = vadd.f32 %v887, %v1388
        %v1390 = vpop.f32.mrf.mxu0
        %v1391 = vadd.f32 %v887, %v1390
        %1392 = vmatmul.bf16.gmra.mxu0 %v1077
        %v1393 = vpop.f32.mrf.mxu0
        %v1394 = vadd.f32 %v887, %v1393
        %v1395 = vpop.f32.mrf.mxu0
        %v1396 = vadd.f32 %v887, %v1395
        %1397 = vmatmul.bf16.gmra.mxu0 %v1080
        %v1398 = vpop.f32.mrf.mxu0
        %v1399 = vadd.f32 %v887, %v1398
        %v1400 = vpop.f32.mrf.mxu0
        %v1401 = vadd.f32 %v887, %v1400
        %1402 = vmatmul.bf16.gmra.mxu0 %v1083
        %v1403 = vpop.f32.mrf.mxu0
        %v1404 = vadd.f32 %v887, %v1403
        %v1405 = vpop.f32.mrf.mxu0
        %v1406 = vadd.f32 %v887, %v1405
        %1407 = vmatmul.bf16.gmra.mxu0 %v1086
        %v1408 = vpop.f32.mrf.mxu0
        %v1409 = vadd.f32 %v887, %v1408
        %v1410 = vpop.f32.mrf.mxu0
        %v1411 = vadd.f32 %v887, %v1410
        %1412 = vmatmul.bf16.gmra.mxu0 %v1089
        %v1413 = vpop.f32.mrf.mxu0
        %v1414 = vadd.f32 %v887, %v1413
        %v1415 = vpop.f32.mrf.mxu0
        %v1416 = vadd.f32 %v887, %v1415
        %1417 = vmatmul.bf16.gmra.mxu0 %v1092
        %v1418 = vpop.f32.mrf.mxu0
        %v1419 = vadd.f32 %v887, %v1418
        %v1420 = vpop.f32.mrf.mxu0
        %v1421 = vadd.f32 %v887, %v1420
        %1422 = vdwg.mxu0
        %v1423 = vmax.f32 %v1104, 0.0
        %v1424 = vmax.f32 %v1106, 0.0
        %v1425 = vmax.f32 %v1109, 0.0
        %v1426 = vmax.f32 %v1111, 0.0
        %v1427 = vmax.f32 %v1114, 0.0
        %v1428 = vmax.f32 %v1116, 0.0
        %v1429 = vmax.f32 %v1119, 0.0
        %v1430 = vmax.f32 %v1121, 0.0
        %v1431 = vmax.f32 %v1124, 0.0
        %v1432 = vmax.f32 %v1126, 0.0
        %v1433 = vmax.f32 %v1129, 0.0
        %v1434 = vmax.f32 %v1131, 0.0
        %v1435 = vmax.f32 %v1134, 0.0
        %v1436 = vmax.f32 %v1136, 0.0
        %v1437 = vmax.f32 %v1139, 0.0
        %v1438 = vmax.f32 %v1141, 0.0
        %v1439 = vmax.f32 %v1144, 0.0
        %v1440 = vmax.f32 %v1146, 0.0
        %v1441 = vmax.f32 %v1149, 0.0
        %v1442 = vmax.f32 %v1151, 0.0
        %v1443 = vmax.f32 %v1154, 0.0
        %v1444 = vmax.f32 %v1156, 0.0
        %v1445 = vmax.f32 %v1159, 0.0
        %v1446 = vmax.f32 %v1161, 0.0
        %v1447 = vmax.f32 %v1164, 0.0
        %v1448 = vmax.f32 %v1166, 0.0
        %v1449 = vmax.f32 %v1169, 0.0
        %v1450 = vmax.f32 %v1171, 0.0
        %v1451 = vmax.f32 %v1174, 0.0
        %v1452 = vmax.f32 %v1176, 0.0
        %v1453 = vmax.f32 %v1179, 0.0
        %v1454 = vmax.f32 %v1181, 0.0
        %v1455 = vmax.f32 %v1184, 0.0
        %v1456 = vmax.f32 %v1186, 0.0
        %v1457 = vmax.f32 %v1189, 0.0
        %v1458 = vmax.f32 %v1191, 0.0
        %v1459 = vmax.f32 %v1194, 0.0
        %v1460 = vmax.f32 %v1196, 0.0
        %v1461 = vmax.f32 %v1199, 0.0
        %v1462 = vmax.f32 %v1201, 0.0
        %v1463 = vmax.f32 %v1204, 0.0
        %v1464 = vmax.f32 %v1206, 0.0
        %v1465 = vmax.f32 %v1209, 0.0
        %v1466 = vmax.f32 %v1211, 0.0
        %v1467 = vmax.f32 %v1214, 0.0
        %v1468 = vmax.f32 %v1216, 0.0
        %v1469 = vmax.f32 %v1219, 0.0
        %v1470 = vmax.f32 %v1221, 0.0
        %v1471 = vmax.f32 %v1224, 0.0
        %v1472 = vmax.f32 %v1226, 0.0
        %v1473 = vmax.f32 %v1229, 0.0
        %v1474 = vmax.f32 %v1231, 0.0
        %v1475 = vmax.f32 %v1234, 0.0
        %v1476 = vmax.f32 %v1236, 0.0
        %v1477 = vmax.f32 %v1239, 0.0
        %v1478 = vmax.f32 %v1241, 0.0
        %v1479 = vmax.f32 %v1244, 0.0
        %v1480 = vmax.f32 %v1246, 0.0
        %v1481 = vmax.f32 %v1249, 0.0
        %v1482 = vmax.f32 %v1251, 0.0
        %v1483 = vmax.f32 %v1254, 0.0
        %v1484 = vmax.f32 %v1256, 0.0
        %v1485 = vmax.f32 %v1259, 0.0
        %v1486 = vmax.f32 %v1261, 0.0
        %v1487 = vmax.f32 %v1264, 0.0
        %v1488 = vmax.f32 %v1266, 0.0
        %v1489 = vmax.f32 %v1269, 0.0
        %v1490 = vmax.f32 %v1271, 0.0
        %v1491 = vmax.f32 %v1274, 0.0
        %v1492 = vmax.f32 %v1276, 0.0
        %v1493 = vmax.f32 %v1279, 0.0
        %v1494 = vmax.f32 %v1281, 0.0
        %v1495 = vmax.f32 %v1284, 0.0
        %v1496 = vmax.f32 %v1286, 0.0
        %v1497 = vmax.f32 %v1289, 0.0
        %v1498 = vmax.f32 %v1291, 0.0
        %v1499 = vmax.f32 %v1294, 0.0
        %v1500 = vmax.f32 %v1296, 0.0
        %v1501 = vmax.f32 %v1299, 0.0
        %v1502 = vmax.f32 %v1301, 0.0
        %v1503 = vmax.f32 %v1304, 0.0
        %v1504 = vmax.f32 %v1306, 0.0
        %v1505 = vmax.f32 %v1309, 0.0
        %v1506 = vmax.f32 %v1311, 0.0
        %v1507 = vmax.f32 %v1314, 0.0
        %v1508 = vmax.f32 %v1316, 0.0
        %v1509 = vmax.f32 %v1319, 0.0
        %v1510 = vmax.f32 %v1321, 0.0
        %v1511 = vmax.f32 %v1324, 0.0
        %v1512 = vmax.f32 %v1326, 0.0
        %v1513 = vmax.f32 %v1329, 0.0
        %v1514 = vmax.f32 %v1331, 0.0
        %v1515 = vmax.f32 %v1334, 0.0
        %v1516 = vmax.f32 %v1336, 0.0
        %v1517 = vmax.f32 %v1339, 0.0
        %v1518 = vmax.f32 %v1341, 0.0
        %v1519 = vmax.f32 %v1344, 0.0
        %v1520 = vmax.f32 %v1346, 0.0
        %v1521 = vmax.f32 %v1349, 0.0
        %v1522 = vmax.f32 %v1351, 0.0
        %v1523 = vmax.f32 %v1354, 0.0
        %v1524 = vmax.f32 %v1356, 0.0
        %v1525 = vmax.f32 %v1359, 0.0
        %v1526 = vmax.f32 %v1361, 0.0
        %v1527 = vmax.f32 %v1364, 0.0
        %v1528 = vmax.f32 %v1366, 0.0
        %v1529 = vmax.f32 %v1369, 0.0
        %v1530 = vmax.f32 %v1371, 0.0
        %v1531 = vmax.f32 %v1374, 0.0
        %v1532 = vmax.f32 %v1376, 0.0
        %v1533 = vmax.f32 %v1379, 0.0
        %v1534 = vmax.f32 %v1381, 0.0
        %v1535 = vmax.f32 %v1384, 0.0
        %v1536 = vmax.f32 %v1386, 0.0
        %v1537 = vmax.f32 %v1389, 0.0
        %v1538 = vmax.f32 %v1391, 0.0
        %v1539 = vmax.f32 %v1394, 0.0
        %v1540 = vmax.f32 %v1396, 0.0
        %v1541 = vmax.f32 %v1399, 0.0
        %v1542 = vmax.f32 %v1401, 0.0
        %v1543 = vmax.f32 %v1404, 0.0
        %v1544 = vmax.f32 %v1406, 0.0
        %v1545 = vmax.f32 %v1409, 0.0
        %v1546 = vmax.f32 %v1411, 0.0
        %v1547 = vmax.f32 %v1414, 0.0
        %v1548 = vmax.f32 %v1416, 0.0
        %v1549 = vmax.f32 %v1419, 0.0
        %v1550 = vmax.f32 %v1421, 0.0
        %v1551 = vld [vmem:[%s4] sm:$0xf]
        %v1552 = vld [vmem:[%s4 + $0x4] sm:$0xf]
        %v1553 = vld [vmem:[%s4 + $0x8] sm:$0xf]
        %v1554 = vld [vmem:[%s4 + $0xc] sm:$0xf]
        %v1555 = vld [vmem:[%s6] sm:$0x1]
        %v1557 = vperm.slane %v1555, 0
        %v1563 = vunpack.c.l.b16 %v1551
        %v1564 = vunpack.c.l.b16 %v1552
        %v1565 = vunpack.c.l.b16 %v1553
        %v1566 = vunpack.c.l.b16 %v1554
        %v1567 = vpack.c.b16 %v1564, %v1563
        %v1568 = vpack.c.b16 %v1566, %v1565
        %v1572 = vsel %vm901, %v817, 0
        %v1575 = vsel %vm901, %v818, 0
        %v1578 = vsel %vm901, %v819, 0
        %v1581 = vsel %vm901, %v820, 0
        %v1584 = vsel %vm901, %v821, 0
        %v1587 = vsel %vm901, %v822, 0
        %v1590 = vsel %vm901, %v823, 0
        %v1593 = vsel %vm901, %v824, 0
        %v1596 = vsel %vm901, %v825, 0
        %v1599 = vsel %vm901, %v826, 0
        %v1602 = vsel %vm901, %v827, 0
        %v1605 = vsel %vm901, %v828, 0
        %v1608 = vsel %vm901, %v829, 0
        %v1611 = vsel %vm901, %v830, 0
        %v1614 = vsel %vm901, %v831, 0
        %v1617 = vsel %vm901, %v832, 0
        %v1620 = vsel %vm901, %v833, 0
        %v1623 = vsel %vm901, %v834, 0
        %v1626 = vsel %vm901, %v835, 0
        %v1629 = vsel %vm901, %v836, 0
        %v1632 = vsel %vm901, %v837, 0
        %v1635 = vsel %vm901, %v838, 0
        %v1638 = vsel %vm901, %v839, 0
        %v1641 = vsel %vm901, %v840, 0
        %v1644 = vsel %vm901, %v841, 0
        %v1647 = vsel %vm901, %v842, 0
        %v1650 = vsel %vm901, %v843, 0
        %v1653 = vsel %vm901, %v844, 0
        %v1656 = vsel %vm901, %v845, 0
        %v1659 = vsel %vm901, %v846, 0
        %v1662 = vsel %vm901, %v847, 0
        %v1665 = vsel %vm901, %v848, 0
        %v1668 = vsel %vm901, %v849, 0
        %v1671 = vsel %vm901, %v850, 0
        %v1674 = vsel %vm901, %v851, 0
        %v1677 = vsel %vm901, %v852, 0
        %v1680 = vsel %vm901, %v853, 0
        %v1683 = vsel %vm901, %v854, 0
        %v1686 = vsel %vm901, %v855, 0
        %v1689 = vsel %vm901, %v856, 0
        %v1692 = vsel %vm901, %v857, 0
        %v1695 = vsel %vm901, %v858, 0
        %v1698 = vsel %vm901, %v859, 0
        %v1701 = vsel %vm901, %v860, 0
        %v1704 = vsel %vm901, %v861, 0
        %v1707 = vsel %vm901, %v862, 0
        %v1710 = vsel %vm901, %v863, 0
        %v1713 = vsel %vm901, %v864, 0
        %v1716 = vsel %vm901, %v865, 0
        %v1719 = vsel %vm901, %v866, 0
        %v1722 = vsel %vm901, %v867, 0
        %v1725 = vsel %vm901, %v868, 0
        %v1728 = vsel %vm901, %v869, 0
        %v1731 = vsel %vm901, %v870, 0
        %v1734 = vsel %vm901, %v871, 0
        %v1737 = vsel %vm901, %v872, 0
        %v1740 = vsel %vm901, %v873, 0
        %v1743 = vsel %vm901, %v874, 0
        %v1746 = vsel %vm901, %v875, 0
        %v1749 = vsel %vm901, %v876, 0
        %v1752 = vsel %vm901, %v877, 0
        %v1755 = vsel %vm901, %v878, 0
        %v1758 = vsel %vm901, %v879, 0
        %v1761 = vsel %vm901, %v880, 0
        %1763 = vmatpush.bf16.msra.mxu0 0
        %1764 = vmatpush.bf16.msra.mxu0 0
        %1765 = vmatpush.bf16.msra.mxu0 0
        %1766 = vmatpush.bf16.msra.mxu0 0
        %1767 = vmatpush.bf16.msra.mxu0 0
        %1768 = vmatpush.bf16.msra.mxu0 0
        %1769 = vmatpush.bf16.msra.mxu0 %v1568
        %1770 = vmatpush.bf16.msra.mxu0 %v1567
        %1771 = vmatmul.bf16.gmra.mxu0 %v1572
        %v1772 = vpop.f32.mrf.mxu0
        %v1773 = vadd.f32 %v1557, %v1772
        %v1774 = vpop.f32.mrf.mxu0
        %v1775 = vadd.f32 %v1557, %v1774
        %1776 = vmatmul.bf16.gmra.mxu0 %v1575
        %v1777 = vpop.f32.mrf.mxu0
        %v1778 = vadd.f32 %v1557, %v1777
        %v1779 = vpop.f32.mrf.mxu0
        %v1780 = vadd.f32 %v1557, %v1779
        %1781 = vmatmul.bf16.gmra.mxu0 %v1578
        %v1782 = vpop.f32.mrf.mxu0
        %v1783 = vadd.f32 %v1557, %v1782
        %v1784 = vpop.f32.mrf.mxu0
        %v1785 = vadd.f32 %v1557, %v1784
        %1786 = vmatmul.bf16.gmra.mxu0 %v1581
        %v1787 = vpop.f32.mrf.mxu0
        %v1788 = vadd.f32 %v1557, %v1787
        %v1789 = vpop.f32.mrf.mxu0
        %v1790 = vadd.f32 %v1557, %v1789
        %1791 = vmatmul.bf16.gmra.mxu0 %v1584
        %v1792 = vpop.f32.mrf.mxu0
        %v1793 = vadd.f32 %v1557, %v1792
        %v1794 = vpop.f32.mrf.mxu0
        %v1795 = vadd.f32 %v1557, %v1794
        %1796 = vmatmul.bf16.gmra.mxu0 %v1587
        %v1797 = vpop.f32.mrf.mxu0
        %v1798 = vadd.f32 %v1557, %v1797
        %v1799 = vpop.f32.mrf.mxu0
        %v1800 = vadd.f32 %v1557, %v1799
        %1801 = vmatmul.bf16.gmra.mxu0 %v1590
        %v1802 = vpop.f32.mrf.mxu0
        %v1803 = vadd.f32 %v1557, %v1802
        %v1804 = vpop.f32.mrf.mxu0
        %v1805 = vadd.f32 %v1557, %v1804
        %1806 = vmatmul.bf16.gmra.mxu0 %v1593
        %v1807 = vpop.f32.mrf.mxu0
        %v1808 = vadd.f32 %v1557, %v1807
        %v1809 = vpop.f32.mrf.mxu0
        %v1810 = vadd.f32 %v1557, %v1809
        %1811 = vmatmul.bf16.gmra.mxu0 %v1596
        %v1812 = vpop.f32.mrf.mxu0
        %v1813 = vadd.f32 %v1557, %v1812
        %v1814 = vpop.f32.mrf.mxu0
        %v1815 = vadd.f32 %v1557, %v1814
        %1816 = vmatmul.bf16.gmra.mxu0 %v1599
        %v1817 = vpop.f32.mrf.mxu0
        %v1818 = vadd.f32 %v1557, %v1817
        %v1819 = vpop.f32.mrf.mxu0
        %v1820 = vadd.f32 %v1557, %v1819
        %1821 = vmatmul.bf16.gmra.mxu0 %v1602
        %v1822 = vpop.f32.mrf.mxu0
        %v1823 = vadd.f32 %v1557, %v1822
        %v1824 = vpop.f32.mrf.mxu0
        %v1825 = vadd.f32 %v1557, %v1824
        %1826 = vmatmul.bf16.gmra.mxu0 %v1605
        %v1827 = vpop.f32.mrf.mxu0
        %v1828 = vadd.f32 %v1557, %v1827
        %v1829 = vpop.f32.mrf.mxu0
        %v1830 = vadd.f32 %v1557, %v1829
        %1831 = vmatmul.bf16.gmra.mxu0 %v1608
        %v1832 = vpop.f32.mrf.mxu0
        %v1833 = vadd.f32 %v1557, %v1832
        %v1834 = vpop.f32.mrf.mxu0
        %v1835 = vadd.f32 %v1557, %v1834
        %1836 = vmatmul.bf16.gmra.mxu0 %v1611
        %v1837 = vpop.f32.mrf.mxu0
        %v1838 = vadd.f32 %v1557, %v1837
        %v1839 = vpop.f32.mrf.mxu0
        %v1840 = vadd.f32 %v1557, %v1839
        %1841 = vmatmul.bf16.gmra.mxu0 %v1614
        %v1842 = vpop.f32.mrf.mxu0
        %v1843 = vadd.f32 %v1557, %v1842
        %v1844 = vpop.f32.mrf.mxu0
        %v1845 = vadd.f32 %v1557, %v1844
        %1846 = vmatmul.bf16.gmra.mxu0 %v1617
        %v1847 = vpop.f32.mrf.mxu0
        %v1848 = vadd.f32 %v1557, %v1847
        %v1849 = vpop.f32.mrf.mxu0
        %v1850 = vadd.f32 %v1557, %v1849
        %1851 = vmatmul.bf16.gmra.mxu0 %v1620
        %v1852 = vpop.f32.mrf.mxu0
        %v1853 = vadd.f32 %v1557, %v1852
        %v1854 = vpop.f32.mrf.mxu0
        %v1855 = vadd.f32 %v1557, %v1854
        %1856 = vmatmul.bf16.gmra.mxu0 %v1623
        %v1857 = vpop.f32.mrf.mxu0
        %v1858 = vadd.f32 %v1557, %v1857
        %v1859 = vpop.f32.mrf.mxu0
        %v1860 = vadd.f32 %v1557, %v1859
        %1861 = vmatmul.bf16.gmra.mxu0 %v1626
        %v1862 = vpop.f32.mrf.mxu0
        %v1863 = vadd.f32 %v1557, %v1862
        %v1864 = vpop.f32.mrf.mxu0
        %v1865 = vadd.f32 %v1557, %v1864
        %1866 = vmatmul.bf16.gmra.mxu0 %v1629
        %v1867 = vpop.f32.mrf.mxu0
        %v1868 = vadd.f32 %v1557, %v1867
        %v1869 = vpop.f32.mrf.mxu0
        %v1870 = vadd.f32 %v1557, %v1869
        %1871 = vmatmul.bf16.gmra.mxu0 %v1632
        %v1872 = vpop.f32.mrf.mxu0
        %v1873 = vadd.f32 %v1557, %v1872
        %v1874 = vpop.f32.mrf.mxu0
        %v1875 = vadd.f32 %v1557, %v1874
        %1876 = vmatmul.bf16.gmra.mxu0 %v1635
        %v1877 = vpop.f32.mrf.mxu0
        %v1878 = vadd.f32 %v1557, %v1877
        %v1879 = vpop.f32.mrf.mxu0
        %v1880 = vadd.f32 %v1557, %v1879
        %1881 = vmatmul.bf16.gmra.mxu0 %v1638
        %v1882 = vpop.f32.mrf.mxu0
        %v1883 = vadd.f32 %v1557, %v1882
        %v1884 = vpop.f32.mrf.mxu0
        %v1885 = vadd.f32 %v1557, %v1884
        %1886 = vmatmul.bf16.gmra.mxu0 %v1641
        %v1887 = vpop.f32.mrf.mxu0
        %v1888 = vadd.f32 %v1557, %v1887
        %v1889 = vpop.f32.mrf.mxu0
        %v1890 = vadd.f32 %v1557, %v1889
        %1891 = vmatmul.bf16.gmra.mxu0 %v1644
        %v1892 = vpop.f32.mrf.mxu0
        %v1893 = vadd.f32 %v1557, %v1892
        %v1894 = vpop.f32.mrf.mxu0
        %v1895 = vadd.f32 %v1557, %v1894
        %1896 = vmatmul.bf16.gmra.mxu0 %v1647
        %v1897 = vpop.f32.mrf.mxu0
        %v1898 = vadd.f32 %v1557, %v1897
        %v1899 = vpop.f32.mrf.mxu0
        %v1900 = vadd.f32 %v1557, %v1899
        %1901 = vmatmul.bf16.gmra.mxu0 %v1650
        %v1902 = vpop.f32.mrf.mxu0
        %v1903 = vadd.f32 %v1557, %v1902
        %v1904 = vpop.f32.mrf.mxu0
        %v1905 = vadd.f32 %v1557, %v1904
        %1906 = vmatmul.bf16.gmra.mxu0 %v1653
        %v1907 = vpop.f32.mrf.mxu0
        %v1908 = vadd.f32 %v1557, %v1907
        %v1909 = vpop.f32.mrf.mxu0
        %v1910 = vadd.f32 %v1557, %v1909
        %1911 = vmatmul.bf16.gmra.mxu0 %v1656
        %v1912 = vpop.f32.mrf.mxu0
        %v1913 = vadd.f32 %v1557, %v1912
        %v1914 = vpop.f32.mrf.mxu0
        %v1915 = vadd.f32 %v1557, %v1914
        %1916 = vmatmul.bf16.gmra.mxu0 %v1659
        %v1917 = vpop.f32.mrf.mxu0
        %v1918 = vadd.f32 %v1557, %v1917
        %v1919 = vpop.f32.mrf.mxu0
        %v1920 = vadd.f32 %v1557, %v1919
        %1921 = vmatmul.bf16.gmra.mxu0 %v1662
        %v1922 = vpop.f32.mrf.mxu0
        %v1923 = vadd.f32 %v1557, %v1922
        %v1924 = vpop.f32.mrf.mxu0
        %v1925 = vadd.f32 %v1557, %v1924
        %1926 = vmatmul.bf16.gmra.mxu0 %v1665
        %v1927 = vpop.f32.mrf.mxu0
        %v1928 = vadd.f32 %v1557, %v1927
        %v1929 = vpop.f32.mrf.mxu0
        %v1930 = vadd.f32 %v1557, %v1929
        %1931 = vmatmul.bf16.gmra.mxu0 %v1668
        %v1932 = vpop.f32.mrf.mxu0
        %v1933 = vadd.f32 %v1557, %v1932
        %v1934 = vpop.f32.mrf.mxu0
        %v1935 = vadd.f32 %v1557, %v1934
        %1936 = vmatmul.bf16.gmra.mxu0 %v1671
        %v1937 = vpop.f32.mrf.mxu0
        %v1938 = vadd.f32 %v1557, %v1937
        %v1939 = vpop.f32.mrf.mxu0
        %v1940 = vadd.f32 %v1557, %v1939
        %1941 = vmatmul.bf16.gmra.mxu0 %v1674
        %v1942 = vpop.f32.mrf.mxu0
        %v1943 = vadd.f32 %v1557, %v1942
        %v1944 = vpop.f32.mrf.mxu0
        %v1945 = vadd.f32 %v1557, %v1944
        %1946 = vmatmul.bf16.gmra.mxu0 %v1677
        %v1947 = vpop.f32.mrf.mxu0
        %v1948 = vadd.f32 %v1557, %v1947
        %v1949 = vpop.f32.mrf.mxu0
        %v1950 = vadd.f32 %v1557, %v1949
        %1951 = vmatmul.bf16.gmra.mxu0 %v1680
        %v1952 = vpop.f32.mrf.mxu0
        %v1953 = vadd.f32 %v1557, %v1952
        %v1954 = vpop.f32.mrf.mxu0
        %v1955 = vadd.f32 %v1557, %v1954
        %1956 = vmatmul.bf16.gmra.mxu0 %v1683
        %v1957 = vpop.f32.mrf.mxu0
        %v1958 = vadd.f32 %v1557, %v1957
        %v1959 = vpop.f32.mrf.mxu0
        %v1960 = vadd.f32 %v1557, %v1959
        %1961 = vmatmul.bf16.gmra.mxu0 %v1686
        %v1962 = vpop.f32.mrf.mxu0
        %v1963 = vadd.f32 %v1557, %v1962
        %v1964 = vpop.f32.mrf.mxu0
        %v1965 = vadd.f32 %v1557, %v1964
        %1966 = vmatmul.bf16.gmra.mxu0 %v1689
        %v1967 = vpop.f32.mrf.mxu0
        %v1968 = vadd.f32 %v1557, %v1967
        %v1969 = vpop.f32.mrf.mxu0
        %v1970 = vadd.f32 %v1557, %v1969
        %1971 = vmatmul.bf16.gmra.mxu0 %v1692
        %v1972 = vpop.f32.mrf.mxu0
        %v1973 = vadd.f32 %v1557, %v1972
        %v1974 = vpop.f32.mrf.mxu0
        %v1975 = vadd.f32 %v1557, %v1974
        %1976 = vmatmul.bf16.gmra.mxu0 %v1695
        %v1977 = vpop.f32.mrf.mxu0
        %v1978 = vadd.f32 %v1557, %v1977
        %v1979 = vpop.f32.mrf.mxu0
        %v1980 = vadd.f32 %v1557, %v1979
        %1981 = vmatmul.bf16.gmra.mxu0 %v1698
        %v1982 = vpop.f32.mrf.mxu0
        %v1983 = vadd.f32 %v1557, %v1982
        %v1984 = vpop.f32.mrf.mxu0
        %v1985 = vadd.f32 %v1557, %v1984
        %1986 = vmatmul.bf16.gmra.mxu0 %v1701
        %v1987 = vpop.f32.mrf.mxu0
        %v1988 = vadd.f32 %v1557, %v1987
        %v1989 = vpop.f32.mrf.mxu0
        %v1990 = vadd.f32 %v1557, %v1989
        %1991 = vmatmul.bf16.gmra.mxu0 %v1704
        %v1992 = vpop.f32.mrf.mxu0
        %v1993 = vadd.f32 %v1557, %v1992
        %v1994 = vpop.f32.mrf.mxu0
        %v1995 = vadd.f32 %v1557, %v1994
        %1996 = vmatmul.bf16.gmra.mxu0 %v1707
        %v1997 = vpop.f32.mrf.mxu0
        %v1998 = vadd.f32 %v1557, %v1997
        %v1999 = vpop.f32.mrf.mxu0
        %v2000 = vadd.f32 %v1557, %v1999
        %2001 = vmatmul.bf16.gmra.mxu0 %v1710
        %v2002 = vpop.f32.mrf.mxu0
        %v2003 = vadd.f32 %v1557, %v2002
        %v2004 = vpop.f32.mrf.mxu0
        %v2005 = vadd.f32 %v1557, %v2004
        %2006 = vmatmul.bf16.gmra.mxu0 %v1713
        %v2007 = vpop.f32.mrf.mxu0
        %v2008 = vadd.f32 %v1557, %v2007
        %v2009 = vpop.f32.mrf.mxu0
        %v2010 = vadd.f32 %v1557, %v2009
        %2011 = vmatmul.bf16.gmra.mxu0 %v1716
        %v2012 = vpop.f32.mrf.mxu0
        %v2013 = vadd.f32 %v1557, %v2012
        %v2014 = vpop.f32.mrf.mxu0
        %v2015 = vadd.f32 %v1557, %v2014
        %2016 = vmatmul.bf16.gmra.mxu0 %v1719
        %v2017 = vpop.f32.mrf.mxu0
        %v2018 = vadd.f32 %v1557, %v2017
        %v2019 = vpop.f32.mrf.mxu0
        %v2020 = vadd.f32 %v1557, %v2019
        %2021 = vmatmul.bf16.gmra.mxu0 %v1722
        %v2022 = vpop.f32.mrf.mxu0
        %v2023 = vadd.f32 %v1557, %v2022
        %v2024 = vpop.f32.mrf.mxu0
        %v2025 = vadd.f32 %v1557, %v2024
        %2026 = vmatmul.bf16.gmra.mxu0 %v1725
        %v2027 = vpop.f32.mrf.mxu0
        %v2028 = vadd.f32 %v1557, %v2027
        %v2029 = vpop.f32.mrf.mxu0
        %v2030 = vadd.f32 %v1557, %v2029
        %2031 = vmatmul.bf16.gmra.mxu0 %v1728
        %v2032 = vpop.f32.mrf.mxu0
        %v2033 = vadd.f32 %v1557, %v2032
        %v2034 = vpop.f32.mrf.mxu0
        %v2035 = vadd.f32 %v1557, %v2034
        %2036 = vmatmul.bf16.gmra.mxu0 %v1731
        %v2037 = vpop.f32.mrf.mxu0
        %v2038 = vadd.f32 %v1557, %v2037
        %v2039 = vpop.f32.mrf.mxu0
        %v2040 = vadd.f32 %v1557, %v2039
        %2041 = vmatmul.bf16.gmra.mxu0 %v1734
        %v2042 = vpop.f32.mrf.mxu0
        %v2043 = vadd.f32 %v1557, %v2042
        %v2044 = vpop.f32.mrf.mxu0
        %v2045 = vadd.f32 %v1557, %v2044
        %2046 = vmatmul.bf16.gmra.mxu0 %v1737
        %v2047 = vpop.f32.mrf.mxu0
        %v2048 = vadd.f32 %v1557, %v2047
        %v2049 = vpop.f32.mrf.mxu0
        %v2050 = vadd.f32 %v1557, %v2049
        %2051 = vmatmul.bf16.gmra.mxu0 %v1740
        %v2052 = vpop.f32.mrf.mxu0
        %v2053 = vadd.f32 %v1557, %v2052
        %v2054 = vpop.f32.mrf.mxu0
        %v2055 = vadd.f32 %v1557, %v2054
        %2056 = vmatmul.bf16.gmra.mxu0 %v1743
        %v2057 = vpop.f32.mrf.mxu0
        %v2058 = vadd.f32 %v1557, %v2057
        %v2059 = vpop.f32.mrf.mxu0
        %v2060 = vadd.f32 %v1557, %v2059
        %2061 = vmatmul.bf16.gmra.mxu0 %v1746
        %v2062 = vpop.f32.mrf.mxu0
        %v2063 = vadd.f32 %v1557, %v2062
        %v2064 = vpop.f32.mrf.mxu0
        %v2065 = vadd.f32 %v1557, %v2064
        %2066 = vmatmul.bf16.gmra.mxu0 %v1749
        %v2067 = vpop.f32.mrf.mxu0
        %v2068 = vadd.f32 %v1557, %v2067
        %v2069 = vpop.f32.mrf.mxu0
        %v2070 = vadd.f32 %v1557, %v2069
        %2071 = vmatmul.bf16.gmra.mxu0 %v1752
        %v2072 = vpop.f32.mrf.mxu0
        %v2073 = vadd.f32 %v1557, %v2072
        %v2074 = vpop.f32.mrf.mxu0
        %v2075 = vadd.f32 %v1557, %v2074
        %2076 = vmatmul.bf16.gmra.mxu0 %v1755
        %v2077 = vpop.f32.mrf.mxu0
        %v2078 = vadd.f32 %v1557, %v2077
        %v2079 = vpop.f32.mrf.mxu0
        %v2080 = vadd.f32 %v1557, %v2079
        %2081 = vmatmul.bf16.gmra.mxu0 %v1758
        %v2082 = vpop.f32.mrf.mxu0
        %v2083 = vadd.f32 %v1557, %v2082
        %v2084 = vpop.f32.mrf.mxu0
        %v2085 = vadd.f32 %v1557, %v2084
        %2086 = vmatmul.bf16.gmra.mxu0 %v1761
        %v2087 = vpop.f32.mrf.mxu0
        %v2088 = vadd.f32 %v1557, %v2087
        %v2089 = vpop.f32.mrf.mxu0
        %v2090 = vadd.f32 %v1557, %v2089
        %2091 = vdwg.mxu0
        %v2092 = vmax.f32 %v1773, 0.0
        %v2093 = vmax.f32 %v1775, 0.0
        %v2094 = vmax.f32 %v1778, 0.0
        %v2095 = vmax.f32 %v1780, 0.0
        %v2096 = vmax.f32 %v1783, 0.0
        %v2097 = vmax.f32 %v1785, 0.0
        %v2098 = vmax.f32 %v1788, 0.0
        %v2099 = vmax.f32 %v1790, 0.0
        %v2100 = vmax.f32 %v1793, 0.0
        %v2101 = vmax.f32 %v1795, 0.0
        %v2102 = vmax.f32 %v1798, 0.0
        %v2103 = vmax.f32 %v1800, 0.0
        %v2104 = vmax.f32 %v1803, 0.0
        %v2105 = vmax.f32 %v1805, 0.0
        %v2106 = vmax.f32 %v1808, 0.0
        %v2107 = vmax.f32 %v1810, 0.0
        %v2108 = vmax.f32 %v1813, 0.0
        %v2109 = vmax.f32 %v1815, 0.0
        %v2110 = vmax.f32 %v1818, 0.0
        %v2111 = vmax.f32 %v1820, 0.0
        %v2112 = vmax.f32 %v1823, 0.0
        %v2113 = vmax.f32 %v1825, 0.0
        %v2114 = vmax.f32 %v1828, 0.0
        %v2115 = vmax.f32 %v1830, 0.0
        %v2116 = vmax.f32 %v1833, 0.0
        %v2117 = vmax.f32 %v1835, 0.0
        %v2118 = vmax.f32 %v1838, 0.0
        %v2119 = vmax.f32 %v1840, 0.0
        %v2120 = vmax.f32 %v1843, 0.0
        %v2121 = vmax.f32 %v1845, 0.0
        %v2122 = vmax.f32 %v1848, 0.0
        %v2123 = vmax.f32 %v1850, 0.0
        %v2124 = vmax.f32 %v1853, 0.0
        %v2125 = vmax.f32 %v1855, 0.0
        %v2126 = vmax.f32 %v1858, 0.0
        %v2127 = vmax.f32 %v1860, 0.0
        %v2128 = vmax.f32 %v1863, 0.0
        %v2129 = vmax.f32 %v1865, 0.0
        %v2130 = vmax.f32 %v1868, 0.0
        %v2131 = vmax.f32 %v1870, 0.0
        %v2132 = vmax.f32 %v1873, 0.0
        %v2133 = vmax.f32 %v1875, 0.0
        %v2134 = vmax.f32 %v1878, 0.0
        %v2135 = vmax.f32 %v1880, 0.0
        %v2136 = vmax.f32 %v1883, 0.0
        %v2137 = vmax.f32 %v1885, 0.0
        %v2138 = vmax.f32 %v1888, 0.0
        %v2139 = vmax.f32 %v1890, 0.0
        %v2140 = vmax.f32 %v1893, 0.0
        %v2141 = vmax.f32 %v1895, 0.0
        %v2142 = vmax.f32 %v1898, 0.0
        %v2143 = vmax.f32 %v1900, 0.0
        %v2144 = vmax.f32 %v1903, 0.0
        %v2145 = vmax.f32 %v1905, 0.0
        %v2146 = vmax.f32 %v1908, 0.0
        %v2147 = vmax.f32 %v1910, 0.0
        %v2148 = vmax.f32 %v1913, 0.0
        %v2149 = vmax.f32 %v1915, 0.0
        %v2150 = vmax.f32 %v1918, 0.0
        %v2151 = vmax.f32 %v1920, 0.0
        %v2152 = vmax.f32 %v1923, 0.0
        %v2153 = vmax.f32 %v1925, 0.0
        %v2154 = vmax.f32 %v1928, 0.0
        %v2155 = vmax.f32 %v1930, 0.0
        %v2156 = vmax.f32 %v1933, 0.0
        %v2157 = vmax.f32 %v1935, 0.0
        %v2158 = vmax.f32 %v1938, 0.0
        %v2159 = vmax.f32 %v1940, 0.0
        %v2160 = vmax.f32 %v1943, 0.0
        %v2161 = vmax.f32 %v1945, 0.0
        %v2162 = vmax.f32 %v1948, 0.0
        %v2163 = vmax.f32 %v1950, 0.0
        %v2164 = vmax.f32 %v1953, 0.0
        %v2165 = vmax.f32 %v1955, 0.0
        %v2166 = vmax.f32 %v1958, 0.0
        %v2167 = vmax.f32 %v1960, 0.0
        %v2168 = vmax.f32 %v1963, 0.0
        %v2169 = vmax.f32 %v1965, 0.0
        %v2170 = vmax.f32 %v1968, 0.0
        %v2171 = vmax.f32 %v1970, 0.0
        %v2172 = vmax.f32 %v1973, 0.0
        %v2173 = vmax.f32 %v1975, 0.0
        %v2174 = vmax.f32 %v1978, 0.0
        %v2175 = vmax.f32 %v1980, 0.0
        %v2176 = vmax.f32 %v1983, 0.0
        %v2177 = vmax.f32 %v1985, 0.0
        %v2178 = vmax.f32 %v1988, 0.0
        %v2179 = vmax.f32 %v1990, 0.0
        %v2180 = vmax.f32 %v1993, 0.0
        %v2181 = vmax.f32 %v1995, 0.0
        %v2182 = vmax.f32 %v1998, 0.0
        %v2183 = vmax.f32 %v2000, 0.0
        %v2184 = vmax.f32 %v2003, 0.0
        %v2185 = vmax.f32 %v2005, 0.0
        %v2186 = vmax.f32 %v2008, 0.0
        %v2187 = vmax.f32 %v2010, 0.0
        %v2188 = vmax.f32 %v2013, 0.0
        %v2189 = vmax.f32 %v2015, 0.0
        %v2190 = vmax.f32 %v2018, 0.0
        %v2191 = vmax.f32 %v2020, 0.0
        %v2192 = vmax.f32 %v2023, 0.0
        %v2193 = vmax.f32 %v2025, 0.0
        %v2194 = vmax.f32 %v2028, 0.0
        %v2195 = vmax.f32 %v2030, 0.0
        %v2196 = vmax.f32 %v2033, 0.0
        %v2197 = vmax.f32 %v2035, 0.0
        %v2198 = vmax.f32 %v2038, 0.0
        %v2199 = vmax.f32 %v2040, 0.0
        %v2200 = vmax.f32 %v2043, 0.0
        %v2201 = vmax.f32 %v2045, 0.0
        %v2202 = vmax.f32 %v2048, 0.0
        %v2203 = vmax.f32 %v2050, 0.0
        %v2204 = vmax.f32 %v2053, 0.0
        %v2205 = vmax.f32 %v2055, 0.0
        %v2206 = vmax.f32 %v2058, 0.0
        %v2207 = vmax.f32 %v2060, 0.0
        %v2208 = vmax.f32 %v2063, 0.0
        %v2209 = vmax.f32 %v2065, 0.0
        %v2210 = vmax.f32 %v2068, 0.0
        %v2211 = vmax.f32 %v2070, 0.0
        %v2212 = vmax.f32 %v2073, 0.0
        %v2213 = vmax.f32 %v2075, 0.0
        %v2214 = vmax.f32 %v2078, 0.0
        %v2215 = vmax.f32 %v2080, 0.0
        %v2216 = vmax.f32 %v2083, 0.0
        %v2217 = vmax.f32 %v2085, 0.0
        %v2218 = vmax.f32 %v2088, 0.0
        %v2219 = vmax.f32 %v2090, 0.0
        %v2220 = vld [vmem:[%s7] sm:$0x1]
        %v2222 = vperm.slane %v2220, 0
        %v2224 = vmul.f32 %v1423, %v2222
        %v2225 = vmul.f32 %v1424, %v2222
        %v2226 = vmul.f32 %v1425, %v2222
        %v2227 = vmul.f32 %v1426, %v2222
        %v2228 = vmul.f32 %v1427, %v2222
        %v2229 = vmul.f32 %v1428, %v2222
        %v2230 = vmul.f32 %v1429, %v2222
        %v2231 = vmul.f32 %v1430, %v2222
        %v2232 = vmul.f32 %v1431, %v2222
        %v2233 = vmul.f32 %v1432, %v2222
        %v2234 = vmul.f32 %v1433, %v2222
        %v2235 = vmul.f32 %v1434, %v2222
        %v2236 = vmul.f32 %v1435, %v2222
        %v2237 = vmul.f32 %v1436, %v2222
        %v2238 = vmul.f32 %v1437, %v2222
        %v2239 = vmul.f32 %v1438, %v2222
        %v2240 = vmul.f32 %v1439, %v2222
        %v2241 = vmul.f32 %v1440, %v2222
        %v2242 = vmul.f32 %v1441, %v2222
        %v2243 = vmul.f32 %v1442, %v2222
        %v2244 = vmul.f32 %v1443, %v2222
        %v2245 = vmul.f32 %v1444, %v2222
        %v2246 = vmul.f32 %v1445, %v2222
        %v2247 = vmul.f32 %v1446, %v2222
        %v2248 = vmul.f32 %v1447, %v2222
        %v2249 = vmul.f32 %v1448, %v2222
        %v2250 = vmul.f32 %v1449, %v2222
        %v2251 = vmul.f32 %v1450, %v2222
        %v2252 = vmul.f32 %v1451, %v2222
        %v2253 = vmul.f32 %v1452, %v2222
        %v2254 = vmul.f32 %v1453, %v2222
        %v2255 = vmul.f32 %v1454, %v2222
        %v2256 = vmul.f32 %v1455, %v2222
        %v2257 = vmul.f32 %v1456, %v2222
        %v2258 = vmul.f32 %v1457, %v2222
        %v2259 = vmul.f32 %v1458, %v2222
        %v2260 = vmul.f32 %v1459, %v2222
        %v2261 = vmul.f32 %v1460, %v2222
        %v2262 = vmul.f32 %v1461, %v2222
        %v2263 = vmul.f32 %v1462, %v2222
        %v2264 = vmul.f32 %v1463, %v2222
        %v2265 = vmul.f32 %v1464, %v2222
        %v2266 = vmul.f32 %v1465, %v2222
        %v2267 = vmul.f32 %v1466, %v2222
        %v2268 = vmul.f32 %v1467, %v2222
        %v2269 = vmul.f32 %v1468, %v2222
        %v2270 = vmul.f32 %v1469, %v2222
        %v2271 = vmul.f32 %v1470, %v2222
        %v2272 = vmul.f32 %v1471, %v2222
        %v2273 = vmul.f32 %v1472, %v2222
        %v2274 = vmul.f32 %v1473, %v2222
        %v2275 = vmul.f32 %v1474, %v2222
        %v2276 = vmul.f32 %v1475, %v2222
        %v2277 = vmul.f32 %v1476, %v2222
        %v2278 = vmul.f32 %v1477, %v2222
        %v2279 = vmul.f32 %v1478, %v2222
        %v2280 = vmul.f32 %v1479, %v2222
        %v2281 = vmul.f32 %v1480, %v2222
        %v2282 = vmul.f32 %v1481, %v2222
        %v2283 = vmul.f32 %v1482, %v2222
        %v2284 = vmul.f32 %v1483, %v2222
        %v2285 = vmul.f32 %v1484, %v2222
        %v2286 = vmul.f32 %v1485, %v2222
        %v2287 = vmul.f32 %v1486, %v2222
        %v2288 = vmul.f32 %v1487, %v2222
        %v2289 = vmul.f32 %v1488, %v2222
        %v2290 = vmul.f32 %v1489, %v2222
        %v2291 = vmul.f32 %v1490, %v2222
        %v2292 = vmul.f32 %v1491, %v2222
        %v2293 = vmul.f32 %v1492, %v2222
        %v2294 = vmul.f32 %v1493, %v2222
        %v2295 = vmul.f32 %v1494, %v2222
        %v2296 = vmul.f32 %v1495, %v2222
        %v2297 = vmul.f32 %v1496, %v2222
        %v2298 = vmul.f32 %v1497, %v2222
        %v2299 = vmul.f32 %v1498, %v2222
        %v2300 = vmul.f32 %v1499, %v2222
        %v2301 = vmul.f32 %v1500, %v2222
        %v2302 = vmul.f32 %v1501, %v2222
        %v2303 = vmul.f32 %v1502, %v2222
        %v2304 = vmul.f32 %v1503, %v2222
        %v2305 = vmul.f32 %v1504, %v2222
        %v2306 = vmul.f32 %v1505, %v2222
        %v2307 = vmul.f32 %v1506, %v2222
        %v2308 = vmul.f32 %v1507, %v2222
        %v2309 = vmul.f32 %v1508, %v2222
        %v2310 = vmul.f32 %v1509, %v2222
        %v2311 = vmul.f32 %v1510, %v2222
        %v2312 = vmul.f32 %v1511, %v2222
        %v2313 = vmul.f32 %v1512, %v2222
        %v2314 = vmul.f32 %v1513, %v2222
        %v2315 = vmul.f32 %v1514, %v2222
        %v2316 = vmul.f32 %v1515, %v2222
        %v2317 = vmul.f32 %v1516, %v2222
        %v2318 = vmul.f32 %v1517, %v2222
        %v2319 = vmul.f32 %v1518, %v2222
        %v2320 = vmul.f32 %v1519, %v2222
        %v2321 = vmul.f32 %v1520, %v2222
        %v2322 = vmul.f32 %v1521, %v2222
        %v2323 = vmul.f32 %v1522, %v2222
        %v2324 = vmul.f32 %v1523, %v2222
        %v2325 = vmul.f32 %v1524, %v2222
        %v2326 = vmul.f32 %v1525, %v2222
        %v2327 = vmul.f32 %v1526, %v2222
        %v2328 = vmul.f32 %v1527, %v2222
        %v2329 = vmul.f32 %v1528, %v2222
        %v2330 = vmul.f32 %v1529, %v2222
        %v2331 = vmul.f32 %v1530, %v2222
        %v2332 = vmul.f32 %v1531, %v2222
        %v2333 = vmul.f32 %v1532, %v2222
        %v2334 = vmul.f32 %v1533, %v2222
        %v2335 = vmul.f32 %v1534, %v2222
        %v2336 = vmul.f32 %v1535, %v2222
        %v2337 = vmul.f32 %v1536, %v2222
        %v2338 = vmul.f32 %v1537, %v2222
        %v2339 = vmul.f32 %v1538, %v2222
        %v2340 = vmul.f32 %v1539, %v2222
        %v2341 = vmul.f32 %v1540, %v2222
        %v2342 = vmul.f32 %v1541, %v2222
        %v2343 = vmul.f32 %v1542, %v2222
        %v2344 = vmul.f32 %v1543, %v2222
        %v2345 = vmul.f32 %v1544, %v2222
        %v2346 = vmul.f32 %v1545, %v2222
        %v2347 = vmul.f32 %v1546, %v2222
        %v2348 = vmul.f32 %v1547, %v2222
        %v2349 = vmul.f32 %v1548, %v2222
        %v2350 = vmul.f32 %v1549, %v2222
        %v2351 = vmul.f32 %v1550, %v2222
        %v2352 = vsel %vm901, %v2224, 0.0
        %2353 = vadd.xlane.f32.xlu0 %v2352
        %v2354 = vpop.xlane.xlu0 %2353
        %v2355 = vsel %vm901, %v2225, 0.0
        %2356 = vadd.xlane.f32.xlu0 %v2355
        %v2357 = vpop.xlane.xlu0 %2356
        %v2358 = vsel %vm901, %v2226, 0.0
        %2359 = vadd.xlane.f32.xlu0 %v2358
        %v2360 = vpop.xlane.xlu0 %2359
        %v2361 = vsel %vm901, %v2227, 0.0
        %2362 = vadd.xlane.f32.xlu0 %v2361
        %v2363 = vpop.xlane.xlu0 %2362
        %v2364 = vsel %vm901, %v2228, 0.0
        %2365 = vadd.xlane.f32.xlu0 %v2364
        %v2366 = vpop.xlane.xlu0 %2365
        %v2367 = vsel %vm901, %v2229, 0.0
        %2368 = vadd.xlane.f32.xlu0 %v2367
        %v2369 = vpop.xlane.xlu0 %2368
        %v2370 = vsel %vm901, %v2230, 0.0
        %2371 = vadd.xlane.f32.xlu0 %v2370
        %v2372 = vpop.xlane.xlu0 %2371
        %v2373 = vsel %vm901, %v2231, 0.0
        %2374 = vadd.xlane.f32.xlu0 %v2373
        %v2375 = vpop.xlane.xlu0 %2374
        %v2376 = vsel %vm901, %v2232, 0.0
        %2377 = vadd.xlane.f32.xlu0 %v2376
        %v2378 = vpop.xlane.xlu0 %2377
        %v2379 = vsel %vm901, %v2233, 0.0
        %2380 = vadd.xlane.f32.xlu0 %v2379
        %v2381 = vpop.xlane.xlu0 %2380
        %v2382 = vsel %vm901, %v2234, 0.0
        %2383 = vadd.xlane.f32.xlu0 %v2382
        %v2384 = vpop.xlane.xlu0 %2383
        %v2385 = vsel %vm901, %v2235, 0.0
        %2386 = vadd.xlane.f32.xlu0 %v2385
        %v2387 = vpop.xlane.xlu0 %2386
        %v2388 = vsel %vm901, %v2236, 0.0
        %2389 = vadd.xlane.f32.xlu0 %v2388
        %v2390 = vpop.xlane.xlu0 %2389
        %v2391 = vsel %vm901, %v2237, 0.0
        %2392 = vadd.xlane.f32.xlu0 %v2391
        %v2393 = vpop.xlane.xlu0 %2392
        %v2394 = vsel %vm901, %v2238, 0.0
        %2395 = vadd.xlane.f32.xlu0 %v2394
        %v2396 = vpop.xlane.xlu0 %2395
        %v2397 = vsel %vm901, %v2239, 0.0
        %2398 = vadd.xlane.f32.xlu0 %v2397
        %v2399 = vpop.xlane.xlu0 %2398
        %v2400 = vsel %vm901, %v2240, 0.0
        %2401 = vadd.xlane.f32.xlu0 %v2400
        %v2402 = vpop.xlane.xlu0 %2401
        %v2403 = vsel %vm901, %v2241, 0.0
        %2404 = vadd.xlane.f32.xlu0 %v2403
        %v2405 = vpop.xlane.xlu0 %2404
        %v2406 = vsel %vm901, %v2242, 0.0
        %2407 = vadd.xlane.f32.xlu0 %v2406
        %v2408 = vpop.xlane.xlu0 %2407
        %v2409 = vsel %vm901, %v2243, 0.0
        %2410 = vadd.xlane.f32.xlu0 %v2409
        %v2411 = vpop.xlane.xlu0 %2410
        %v2412 = vsel %vm901, %v2244, 0.0
        %2413 = vadd.xlane.f32.xlu0 %v2412
        %v2414 = vpop.xlane.xlu0 %2413
        %v2415 = vsel %vm901, %v2245, 0.0
        %2416 = vadd.xlane.f32.xlu0 %v2415
        %v2417 = vpop.xlane.xlu0 %2416
        %v2418 = vsel %vm901, %v2246, 0.0
        %2419 = vadd.xlane.f32.xlu0 %v2418
        %v2420 = vpop.xlane.xlu0 %2419
        %v2421 = vsel %vm901, %v2247, 0.0
        %2422 = vadd.xlane.f32.xlu0 %v2421
        %v2423 = vpop.xlane.xlu0 %2422
        %v2424 = vsel %vm901, %v2248, 0.0
        %2425 = vadd.xlane.f32.xlu0 %v2424
        %v2426 = vpop.xlane.xlu0 %2425
        %v2427 = vsel %vm901, %v2249, 0.0
        %2428 = vadd.xlane.f32.xlu0 %v2427
        %v2429 = vpop.xlane.xlu0 %2428
        %v2430 = vsel %vm901, %v2250, 0.0
        %2431 = vadd.xlane.f32.xlu0 %v2430
        %v2432 = vpop.xlane.xlu0 %2431
        %v2433 = vsel %vm901, %v2251, 0.0
        %2434 = vadd.xlane.f32.xlu0 %v2433
        %v2435 = vpop.xlane.xlu0 %2434
        %v2436 = vsel %vm901, %v2252, 0.0
        %2437 = vadd.xlane.f32.xlu0 %v2436
        %v2438 = vpop.xlane.xlu0 %2437
        %v2439 = vsel %vm901, %v2253, 0.0
        %2440 = vadd.xlane.f32.xlu0 %v2439
        %v2441 = vpop.xlane.xlu0 %2440
        %v2442 = vsel %vm901, %v2254, 0.0
        %2443 = vadd.xlane.f32.xlu0 %v2442
        %v2444 = vpop.xlane.xlu0 %2443
        %v2445 = vsel %vm901, %v2255, 0.0
        %2446 = vadd.xlane.f32.xlu0 %v2445
        %v2447 = vpop.xlane.xlu0 %2446
        %v2448 = vsel %vm901, %v2256, 0.0
        %2449 = vadd.xlane.f32.xlu0 %v2448
        %v2450 = vpop.xlane.xlu0 %2449
        %v2451 = vsel %vm901, %v2257, 0.0
        %2452 = vadd.xlane.f32.xlu0 %v2451
        %v2453 = vpop.xlane.xlu0 %2452
        %v2454 = vsel %vm901, %v2258, 0.0
        %2455 = vadd.xlane.f32.xlu0 %v2454
        %v2456 = vpop.xlane.xlu0 %2455
        %v2457 = vsel %vm901, %v2259, 0.0
        %2458 = vadd.xlane.f32.xlu0 %v2457
        %v2459 = vpop.xlane.xlu0 %2458
        %v2460 = vsel %vm901, %v2260, 0.0
        %2461 = vadd.xlane.f32.xlu0 %v2460
        %v2462 = vpop.xlane.xlu0 %2461
        %v2463 = vsel %vm901, %v2261, 0.0
        %2464 = vadd.xlane.f32.xlu0 %v2463
        %v2465 = vpop.xlane.xlu0 %2464
        %v2466 = vsel %vm901, %v2262, 0.0
        %2467 = vadd.xlane.f32.xlu0 %v2466
        %v2468 = vpop.xlane.xlu0 %2467
        %v2469 = vsel %vm901, %v2263, 0.0
        %2470 = vadd.xlane.f32.xlu0 %v2469
        %v2471 = vpop.xlane.xlu0 %2470
        %v2472 = vsel %vm901, %v2264, 0.0
        %2473 = vadd.xlane.f32.xlu0 %v2472
        %v2474 = vpop.xlane.xlu0 %2473
        %v2475 = vsel %vm901, %v2265, 0.0
        %2476 = vadd.xlane.f32.xlu0 %v2475
        %v2477 = vpop.xlane.xlu0 %2476
        %v2478 = vsel %vm901, %v2266, 0.0
        %2479 = vadd.xlane.f32.xlu0 %v2478
        %v2480 = vpop.xlane.xlu0 %2479
        %v2481 = vsel %vm901, %v2267, 0.0
        %2482 = vadd.xlane.f32.xlu0 %v2481
        %v2483 = vpop.xlane.xlu0 %2482
        %v2484 = vsel %vm901, %v2268, 0.0
        %2485 = vadd.xlane.f32.xlu0 %v2484
        %v2486 = vpop.xlane.xlu0 %2485
        %v2487 = vsel %vm901, %v2269, 0.0
        %2488 = vadd.xlane.f32.xlu0 %v2487
        %v2489 = vpop.xlane.xlu0 %2488
        %v2490 = vsel %vm901, %v2270, 0.0
        %2491 = vadd.xlane.f32.xlu0 %v2490
        %v2492 = vpop.xlane.xlu0 %2491
        %v2493 = vsel %vm901, %v2271, 0.0
        %2494 = vadd.xlane.f32.xlu0 %v2493
        %v2495 = vpop.xlane.xlu0 %2494
        %v2496 = vsel %vm901, %v2272, 0.0
        %2497 = vadd.xlane.f32.xlu0 %v2496
        %v2498 = vpop.xlane.xlu0 %2497
        %v2499 = vsel %vm901, %v2273, 0.0
        %2500 = vadd.xlane.f32.xlu0 %v2499
        %v2501 = vpop.xlane.xlu0 %2500
        %v2502 = vsel %vm901, %v2274, 0.0
        %2503 = vadd.xlane.f32.xlu0 %v2502
        %v2504 = vpop.xlane.xlu0 %2503
        %v2505 = vsel %vm901, %v2275, 0.0
        %2506 = vadd.xlane.f32.xlu0 %v2505
        %v2507 = vpop.xlane.xlu0 %2506
        %v2508 = vsel %vm901, %v2276, 0.0
        %2509 = vadd.xlane.f32.xlu0 %v2508
        %v2510 = vpop.xlane.xlu0 %2509
        %v2511 = vsel %vm901, %v2277, 0.0
        %2512 = vadd.xlane.f32.xlu0 %v2511
        %v2513 = vpop.xlane.xlu0 %2512
        %v2514 = vsel %vm901, %v2278, 0.0
        %2515 = vadd.xlane.f32.xlu0 %v2514
        %v2516 = vpop.xlane.xlu0 %2515
        %v2517 = vsel %vm901, %v2279, 0.0
        %2518 = vadd.xlane.f32.xlu0 %v2517
        %v2519 = vpop.xlane.xlu0 %2518
        %v2520 = vsel %vm901, %v2280, 0.0
        %2521 = vadd.xlane.f32.xlu0 %v2520
        %v2522 = vpop.xlane.xlu0 %2521
        %v2523 = vsel %vm901, %v2281, 0.0
        %2524 = vadd.xlane.f32.xlu0 %v2523
        %v2525 = vpop.xlane.xlu0 %2524
        %v2526 = vsel %vm901, %v2282, 0.0
        %2527 = vadd.xlane.f32.xlu0 %v2526
        %v2528 = vpop.xlane.xlu0 %2527
        %v2529 = vsel %vm901, %v2283, 0.0
        %2530 = vadd.xlane.f32.xlu0 %v2529
        %v2531 = vpop.xlane.xlu0 %2530
        %v2532 = vsel %vm901, %v2284, 0.0
        %2533 = vadd.xlane.f32.xlu0 %v2532
        %v2534 = vpop.xlane.xlu0 %2533
        %v2535 = vsel %vm901, %v2285, 0.0
        %2536 = vadd.xlane.f32.xlu0 %v2535
        %v2537 = vpop.xlane.xlu0 %2536
        %v2538 = vsel %vm901, %v2286, 0.0
        %2539 = vadd.xlane.f32.xlu0 %v2538
        %v2540 = vpop.xlane.xlu0 %2539
        %v2541 = vsel %vm901, %v2287, 0.0
        %2542 = vadd.xlane.f32.xlu0 %v2541
        %v2543 = vpop.xlane.xlu0 %2542
        %v2544 = vsel %vm901, %v2288, 0.0
        %2545 = vadd.xlane.f32.xlu0 %v2544
        %v2546 = vpop.xlane.xlu0 %2545
        %v2547 = vsel %vm901, %v2289, 0.0
        %2548 = vadd.xlane.f32.xlu0 %v2547
        %v2549 = vpop.xlane.xlu0 %2548
        %v2550 = vsel %vm901, %v2290, 0.0
        %2551 = vadd.xlane.f32.xlu0 %v2550
        %v2552 = vpop.xlane.xlu0 %2551
        %v2553 = vsel %vm901, %v2291, 0.0
        %2554 = vadd.xlane.f32.xlu0 %v2553
        %v2555 = vpop.xlane.xlu0 %2554
        %v2556 = vsel %vm901, %v2292, 0.0
        %2557 = vadd.xlane.f32.xlu0 %v2556
        %v2558 = vpop.xlane.xlu0 %2557
        %v2559 = vsel %vm901, %v2293, 0.0
        %2560 = vadd.xlane.f32.xlu0 %v2559
        %v2561 = vpop.xlane.xlu0 %2560
        %v2562 = vsel %vm901, %v2294, 0.0
        %2563 = vadd.xlane.f32.xlu0 %v2562
        %v2564 = vpop.xlane.xlu0 %2563
        %v2565 = vsel %vm901, %v2295, 0.0
        %2566 = vadd.xlane.f32.xlu0 %v2565
        %v2567 = vpop.xlane.xlu0 %2566
        %v2568 = vsel %vm901, %v2296, 0.0
        %2569 = vadd.xlane.f32.xlu0 %v2568
        %v2570 = vpop.xlane.xlu0 %2569
        %v2571 = vsel %vm901, %v2297, 0.0
        %2572 = vadd.xlane.f32.xlu0 %v2571
        %v2573 = vpop.xlane.xlu0 %2572
        %v2574 = vsel %vm901, %v2298, 0.0
        %2575 = vadd.xlane.f32.xlu0 %v2574
        %v2576 = vpop.xlane.xlu0 %2575
        %v2577 = vsel %vm901, %v2299, 0.0
        %2578 = vadd.xlane.f32.xlu0 %v2577
        %v2579 = vpop.xlane.xlu0 %2578
        %v2580 = vsel %vm901, %v2300, 0.0
        %2581 = vadd.xlane.f32.xlu0 %v2580
        %v2582 = vpop.xlane.xlu0 %2581
        %v2583 = vsel %vm901, %v2301, 0.0
        %2584 = vadd.xlane.f32.xlu0 %v2583
        %v2585 = vpop.xlane.xlu0 %2584
        %v2586 = vsel %vm901, %v2302, 0.0
        %2587 = vadd.xlane.f32.xlu0 %v2586
        %v2588 = vpop.xlane.xlu0 %2587
        %v2589 = vsel %vm901, %v2303, 0.0
        %2590 = vadd.xlane.f32.xlu0 %v2589
        %v2591 = vpop.xlane.xlu0 %2590
        %v2592 = vsel %vm901, %v2304, 0.0
        %2593 = vadd.xlane.f32.xlu0 %v2592
        %v2594 = vpop.xlane.xlu0 %2593
        %v2595 = vsel %vm901, %v2305, 0.0
        %2596 = vadd.xlane.f32.xlu0 %v2595
        %v2597 = vpop.xlane.xlu0 %2596
        %v2598 = vsel %vm901, %v2306, 0.0
        %2599 = vadd.xlane.f32.xlu0 %v2598
        %v2600 = vpop.xlane.xlu0 %2599
        %v2601 = vsel %vm901, %v2307, 0.0
        %2602 = vadd.xlane.f32.xlu0 %v2601
        %v2603 = vpop.xlane.xlu0 %2602
        %v2604 = vsel %vm901, %v2308, 0.0
        %2605 = vadd.xlane.f32.xlu0 %v2604
        %v2606 = vpop.xlane.xlu0 %2605
        %v2607 = vsel %vm901, %v2309, 0.0
        %2608 = vadd.xlane.f32.xlu0 %v2607
        %v2609 = vpop.xlane.xlu0 %2608
        %v2610 = vsel %vm901, %v2310, 0.0
        %2611 = vadd.xlane.f32.xlu0 %v2610
        %v2612 = vpop.xlane.xlu0 %2611
        %v2613 = vsel %vm901, %v2311, 0.0
        %2614 = vadd.xlane.f32.xlu0 %v2613
        %v2615 = vpop.xlane.xlu0 %2614
        %v2616 = vsel %vm901, %v2312, 0.0
        %2617 = vadd.xlane.f32.xlu0 %v2616
        %v2618 = vpop.xlane.xlu0 %2617
        %v2619 = vsel %vm901, %v2313, 0.0
        %2620 = vadd.xlane.f32.xlu0 %v2619
        %v2621 = vpop.xlane.xlu0 %2620
        %v2622 = vsel %vm901, %v2314, 0.0
        %2623 = vadd.xlane.f32.xlu0 %v2622
        %v2624 = vpop.xlane.xlu0 %2623
        %v2625 = vsel %vm901, %v2315, 0.0
        %2626 = vadd.xlane.f32.xlu0 %v2625
        %v2627 = vpop.xlane.xlu0 %2626
        %v2628 = vsel %vm901, %v2316, 0.0
        %2629 = vadd.xlane.f32.xlu0 %v2628
        %v2630 = vpop.xlane.xlu0 %2629
        %v2631 = vsel %vm901, %v2317, 0.0
        %2632 = vadd.xlane.f32.xlu0 %v2631
        %v2633 = vpop.xlane.xlu0 %2632
        %v2634 = vsel %vm901, %v2318, 0.0
        %2635 = vadd.xlane.f32.xlu0 %v2634
        %v2636 = vpop.xlane.xlu0 %2635
        %v2637 = vsel %vm901, %v2319, 0.0
        %2638 = vadd.xlane.f32.xlu0 %v2637
        %v2639 = vpop.xlane.xlu0 %2638
        %v2640 = vsel %vm901, %v2320, 0.0
        %2641 = vadd.xlane.f32.xlu0 %v2640
        %v2642 = vpop.xlane.xlu0 %2641
        %v2643 = vsel %vm901, %v2321, 0.0
        %2644 = vadd.xlane.f32.xlu0 %v2643
        %v2645 = vpop.xlane.xlu0 %2644
        %v2646 = vsel %vm901, %v2322, 0.0
        %2647 = vadd.xlane.f32.xlu0 %v2646
        %v2648 = vpop.xlane.xlu0 %2647
        %v2649 = vsel %vm901, %v2323, 0.0
        %2650 = vadd.xlane.f32.xlu0 %v2649
        %v2651 = vpop.xlane.xlu0 %2650
        %v2652 = vsel %vm901, %v2324, 0.0
        %2653 = vadd.xlane.f32.xlu0 %v2652
        %v2654 = vpop.xlane.xlu0 %2653
        %v2655 = vsel %vm901, %v2325, 0.0
        %2656 = vadd.xlane.f32.xlu0 %v2655
        %v2657 = vpop.xlane.xlu0 %2656
        %v2658 = vsel %vm901, %v2326, 0.0
        %2659 = vadd.xlane.f32.xlu0 %v2658
        %v2660 = vpop.xlane.xlu0 %2659
        %v2661 = vsel %vm901, %v2327, 0.0
        %2662 = vadd.xlane.f32.xlu0 %v2661
        %v2663 = vpop.xlane.xlu0 %2662
        %v2664 = vsel %vm901, %v2328, 0.0
        %2665 = vadd.xlane.f32.xlu0 %v2664
        %v2666 = vpop.xlane.xlu0 %2665
        %v2667 = vsel %vm901, %v2329, 0.0
        %2668 = vadd.xlane.f32.xlu0 %v2667
        %v2669 = vpop.xlane.xlu0 %2668
        %v2670 = vsel %vm901, %v2330, 0.0
        %2671 = vadd.xlane.f32.xlu0 %v2670
        %v2672 = vpop.xlane.xlu0 %2671
        %v2673 = vsel %vm901, %v2331, 0.0
        %2674 = vadd.xlane.f32.xlu0 %v2673
        %v2675 = vpop.xlane.xlu0 %2674
        %v2676 = vsel %vm901, %v2332, 0.0
        %2677 = vadd.xlane.f32.xlu0 %v2676
        %v2678 = vpop.xlane.xlu0 %2677
        %v2679 = vsel %vm901, %v2333, 0.0
        %2680 = vadd.xlane.f32.xlu0 %v2679
        %v2681 = vpop.xlane.xlu0 %2680
        %v2682 = vsel %vm901, %v2334, 0.0
        %2683 = vadd.xlane.f32.xlu0 %v2682
        %v2684 = vpop.xlane.xlu0 %2683
        %v2685 = vsel %vm901, %v2335, 0.0
        %2686 = vadd.xlane.f32.xlu0 %v2685
        %v2687 = vpop.xlane.xlu0 %2686
        %v2688 = vsel %vm901, %v2336, 0.0
        %2689 = vadd.xlane.f32.xlu0 %v2688
        %v2690 = vpop.xlane.xlu0 %2689
        %v2691 = vsel %vm901, %v2337, 0.0
        %2692 = vadd.xlane.f32.xlu0 %v2691
        %v2693 = vpop.xlane.xlu0 %2692
        %v2694 = vsel %vm901, %v2338, 0.0
        %2695 = vadd.xlane.f32.xlu0 %v2694
        %v2696 = vpop.xlane.xlu0 %2695
        %v2697 = vsel %vm901, %v2339, 0.0
        %2698 = vadd.xlane.f32.xlu0 %v2697
        %v2699 = vpop.xlane.xlu0 %2698
        %v2700 = vsel %vm901, %v2340, 0.0
        %2701 = vadd.xlane.f32.xlu0 %v2700
        %v2702 = vpop.xlane.xlu0 %2701
        %v2703 = vsel %vm901, %v2341, 0.0
        %2704 = vadd.xlane.f32.xlu0 %v2703
        %v2705 = vpop.xlane.xlu0 %2704
        %v2706 = vsel %vm901, %v2342, 0.0
        %2707 = vadd.xlane.f32.xlu0 %v2706
        %v2708 = vpop.xlane.xlu0 %2707
        %v2709 = vsel %vm901, %v2343, 0.0
        %2710 = vadd.xlane.f32.xlu0 %v2709
        %v2711 = vpop.xlane.xlu0 %2710
        %v2712 = vsel %vm901, %v2344, 0.0
        %2713 = vadd.xlane.f32.xlu0 %v2712
        %v2714 = vpop.xlane.xlu0 %2713
        %v2715 = vsel %vm901, %v2345, 0.0
        %2716 = vadd.xlane.f32.xlu0 %v2715
        %v2717 = vpop.xlane.xlu0 %2716
        %v2718 = vsel %vm901, %v2346, 0.0
        %2719 = vadd.xlane.f32.xlu0 %v2718
        %v2720 = vpop.xlane.xlu0 %2719
        %v2721 = vsel %vm901, %v2347, 0.0
        %2722 = vadd.xlane.f32.xlu0 %v2721
        %v2723 = vpop.xlane.xlu0 %2722
        %v2724 = vsel %vm901, %v2348, 0.0
        %2725 = vadd.xlane.f32.xlu0 %v2724
        %v2726 = vpop.xlane.xlu0 %2725
        %v2727 = vsel %vm901, %v2349, 0.0
        %2728 = vadd.xlane.f32.xlu0 %v2727
        %v2729 = vpop.xlane.xlu0 %2728
        %v2730 = vsel %vm901, %v2350, 0.0
        %2731 = vadd.xlane.f32.xlu0 %v2730
        %v2732 = vpop.xlane.xlu0 %2731
        %v2733 = vsel %vm901, %v2351, 0.0
        %2734 = vadd.xlane.f32.xlu0 %v2733
        %v2735 = vpop.xlane.xlu0 %2734
        %s2736 = sld [smem:[#allocation2]]
        %v2737 = vstv %s2736
        %v2738 = vadd.f32 %v2354, %v2737
        %v2739 = vadd.f32 %v2357, %v2737
        %v2740 = vadd.f32 %v2360, %v2737
        %v2741 = vadd.f32 %v2363, %v2737
        %v2742 = vadd.f32 %v2366, %v2737
        %v2743 = vadd.f32 %v2369, %v2737
        %v2744 = vadd.f32 %v2372, %v2737
        %v2745 = vadd.f32 %v2375, %v2737
        %v2746 = vadd.f32 %v2378, %v2737
        %v2747 = vadd.f32 %v2381, %v2737
        %v2748 = vadd.f32 %v2384, %v2737
        %v2749 = vadd.f32 %v2387, %v2737
        %v2750 = vadd.f32 %v2390, %v2737
        %v2751 = vadd.f32 %v2393, %v2737
        %v2752 = vadd.f32 %v2396, %v2737
        %v2753 = vadd.f32 %v2399, %v2737
        %v2754 = vadd.f32 %v2402, %v2737
        %v2755 = vadd.f32 %v2405, %v2737
        %v2756 = vadd.f32 %v2408, %v2737
        %v2757 = vadd.f32 %v2411, %v2737
        %v2758 = vadd.f32 %v2414, %v2737
        %v2759 = vadd.f32 %v2417, %v2737
        %v2760 = vadd.f32 %v2420, %v2737
        %v2761 = vadd.f32 %v2423, %v2737
        %v2762 = vadd.f32 %v2426, %v2737
        %v2763 = vadd.f32 %v2429, %v2737
        %v2764 = vadd.f32 %v2432, %v2737
        %v2765 = vadd.f32 %v2435, %v2737
        %v2766 = vadd.f32 %v2438, %v2737
        %v2767 = vadd.f32 %v2441, %v2737
        %v2768 = vadd.f32 %v2444, %v2737
        %v2769 = vadd.f32 %v2447, %v2737
        %v2770 = vadd.f32 %v2450, %v2737
        %v2771 = vadd.f32 %v2453, %v2737
        %v2772 = vadd.f32 %v2456, %v2737
        %v2773 = vadd.f32 %v2459, %v2737
        %v2774 = vadd.f32 %v2462, %v2737
        %v2775 = vadd.f32 %v2465, %v2737
        %v2776 = vadd.f32 %v2468, %v2737
        %v2777 = vadd.f32 %v2471, %v2737
        %v2778 = vadd.f32 %v2474, %v2737
        %v2779 = vadd.f32 %v2477, %v2737
        %v2780 = vadd.f32 %v2480, %v2737
        %v2781 = vadd.f32 %v2483, %v2737
        %v2782 = vadd.f32 %v2486, %v2737
        %v2783 = vadd.f32 %v2489, %v2737
        %v2784 = vadd.f32 %v2492, %v2737
        %v2785 = vadd.f32 %v2495, %v2737
        %v2786 = vadd.f32 %v2498, %v2737
        %v2787 = vadd.f32 %v2501, %v2737
        %v2788 = vadd.f32 %v2504, %v2737
        %v2789 = vadd.f32 %v2507, %v2737
        %v2790 = vadd.f32 %v2510, %v2737
        %v2791 = vadd.f32 %v2513, %v2737
        %v2792 = vadd.f32 %v2516, %v2737
        %v2793 = vadd.f32 %v2519, %v2737
        %v2794 = vadd.f32 %v2522, %v2737
        %v2795 = vadd.f32 %v2525, %v2737
        %v2796 = vadd.f32 %v2528, %v2737
        %v2797 = vadd.f32 %v2531, %v2737
        %v2798 = vadd.f32 %v2534, %v2737
        %v2799 = vadd.f32 %v2537, %v2737
        %v2800 = vadd.f32 %v2540, %v2737
        %v2801 = vadd.f32 %v2543, %v2737
        %v2802 = vadd.f32 %v2546, %v2737
        %v2803 = vadd.f32 %v2549, %v2737
        %v2804 = vadd.f32 %v2552, %v2737
        %v2805 = vadd.f32 %v2555, %v2737
        %v2806 = vadd.f32 %v2558, %v2737
        %v2807 = vadd.f32 %v2561, %v2737
        %v2808 = vadd.f32 %v2564, %v2737
        %v2809 = vadd.f32 %v2567, %v2737
        %v2810 = vadd.f32 %v2570, %v2737
        %v2811 = vadd.f32 %v2573, %v2737
        %v2812 = vadd.f32 %v2576, %v2737
        %v2813 = vadd.f32 %v2579, %v2737
        %v2814 = vadd.f32 %v2582, %v2737
        %v2815 = vadd.f32 %v2585, %v2737
        %v2816 = vadd.f32 %v2588, %v2737
        %v2817 = vadd.f32 %v2591, %v2737
        %v2818 = vadd.f32 %v2594, %v2737
        %v2819 = vadd.f32 %v2597, %v2737
        %v2820 = vadd.f32 %v2600, %v2737
        %v2821 = vadd.f32 %v2603, %v2737
        %v2822 = vadd.f32 %v2606, %v2737
        %v2823 = vadd.f32 %v2609, %v2737
        %v2824 = vadd.f32 %v2612, %v2737
        %v2825 = vadd.f32 %v2615, %v2737
        %v2826 = vadd.f32 %v2618, %v2737
        %v2827 = vadd.f32 %v2621, %v2737
        %v2828 = vadd.f32 %v2624, %v2737
        %v2829 = vadd.f32 %v2627, %v2737
        %v2830 = vadd.f32 %v2630, %v2737
        %v2831 = vadd.f32 %v2633, %v2737
        %v2832 = vadd.f32 %v2636, %v2737
        %v2833 = vadd.f32 %v2639, %v2737
        %v2834 = vadd.f32 %v2642, %v2737
        %v2835 = vadd.f32 %v2645, %v2737
        %v2836 = vadd.f32 %v2648, %v2737
        %v2837 = vadd.f32 %v2651, %v2737
        %v2838 = vadd.f32 %v2654, %v2737
        %v2839 = vadd.f32 %v2657, %v2737
        %v2840 = vadd.f32 %v2660, %v2737
        %v2841 = vadd.f32 %v2663, %v2737
        %v2842 = vadd.f32 %v2666, %v2737
        %v2843 = vadd.f32 %v2669, %v2737
        %v2844 = vadd.f32 %v2672, %v2737
        %v2845 = vadd.f32 %v2675, %v2737
        %v2846 = vadd.f32 %v2678, %v2737
        %v2847 = vadd.f32 %v2681, %v2737
        %v2848 = vadd.f32 %v2684, %v2737
        %v2849 = vadd.f32 %v2687, %v2737
        %v2850 = vadd.f32 %v2690, %v2737
        %v2851 = vadd.f32 %v2693, %v2737
        %v2852 = vadd.f32 %v2696, %v2737
        %v2853 = vadd.f32 %v2699, %v2737
        %v2854 = vadd.f32 %v2702, %v2737
        %v2855 = vadd.f32 %v2705, %v2737
        %v2856 = vadd.f32 %v2708, %v2737
        %v2857 = vadd.f32 %v2711, %v2737
        %v2858 = vadd.f32 %v2714, %v2737
        %v2859 = vadd.f32 %v2717, %v2737
        %v2860 = vadd.f32 %v2720, %v2737
        %v2861 = vadd.f32 %v2723, %v2737
        %v2862 = vadd.f32 %v2726, %v2737
        %v2863 = vadd.f32 %v2729, %v2737
        %v2864 = vadd.f32 %v2732, %v2737
        %v2865 = vadd.f32 %v2735, %v2737
        %v2866 = vld [vmem:[%s8] sm:$0x1]
        %v2868 = vperm.slane %v2866, 0
        %v2870 = vmul.f32 %v2092, %v2868
        %v2871 = vmul.f32 %v2093, %v2868
        %v2872 = vmul.f32 %v2094, %v2868
        %v2873 = vmul.f32 %v2095, %v2868
        %v2874 = vmul.f32 %v2096, %v2868
        %v2875 = vmul.f32 %v2097, %v2868
        %v2876 = vmul.f32 %v2098, %v2868
        %v2877 = vmul.f32 %v2099, %v2868
        %v2878 = vmul.f32 %v2100, %v2868
        %v2879 = vmul.f32 %v2101, %v2868
        %v2880 = vmul.f32 %v2102, %v2868
        %v2881 = vmul.f32 %v2103, %v2868
        %v2882 = vmul.f32 %v2104, %v2868
        %v2883 = vmul.f32 %v2105, %v2868
        %v2884 = vmul.f32 %v2106, %v2868
        %v2885 = vmul.f32 %v2107, %v2868
        %v2886 = vmul.f32 %v2108, %v2868
        %v2887 = vmul.f32 %v2109, %v2868
        %v2888 = vmul.f32 %v2110, %v2868
        %v2889 = vmul.f32 %v2111, %v2868
        %v2890 = vmul.f32 %v2112, %v2868
        %v2891 = vmul.f32 %v2113, %v2868
        %v2892 = vmul.f32 %v2114, %v2868
        %v2893 = vmul.f32 %v2115, %v2868
        %v2894 = vmul.f32 %v2116, %v2868
        %v2895 = vmul.f32 %v2117, %v2868
        %v2896 = vmul.f32 %v2118, %v2868
        %v2897 = vmul.f32 %v2119, %v2868
        %v2898 = vmul.f32 %v2120, %v2868
        %v2899 = vmul.f32 %v2121, %v2868
        %v2900 = vmul.f32 %v2122, %v2868
        %v2901 = vmul.f32 %v2123, %v2868
        %v2902 = vmul.f32 %v2124, %v2868
        %v2903 = vmul.f32 %v2125, %v2868
        %v2904 = vmul.f32 %v2126, %v2868
        %v2905 = vmul.f32 %v2127, %v2868
        %v2906 = vmul.f32 %v2128, %v2868
        %v2907 = vmul.f32 %v2129, %v2868
        %v2908 = vmul.f32 %v2130, %v2868
        %v2909 = vmul.f32 %v2131, %v2868
        %v2910 = vmul.f32 %v2132, %v2868
        %v2911 = vmul.f32 %v2133, %v2868
        %v2912 = vmul.f32 %v2134, %v2868
        %v2913 = vmul.f32 %v2135, %v2868
        %v2914 = vmul.f32 %v2136, %v2868
        %v2915 = vmul.f32 %v2137, %v2868
        %v2916 = vmul.f32 %v2138, %v2868
        %v2917 = vmul.f32 %v2139, %v2868
        %v2918 = vmul.f32 %v2140, %v2868
        %v2919 = vmul.f32 %v2141, %v2868
        %v2920 = vmul.f32 %v2142, %v2868
        %v2921 = vmul.f32 %v2143, %v2868
        %v2922 = vmul.f32 %v2144, %v2868
        %v2923 = vmul.f32 %v2145, %v2868
        %v2924 = vmul.f32 %v2146, %v2868
        %v2925 = vmul.f32 %v2147, %v2868
        %v2926 = vmul.f32 %v2148, %v2868
        %v2927 = vmul.f32 %v2149, %v2868
        %v2928 = vmul.f32 %v2150, %v2868
        %v2929 = vmul.f32 %v2151, %v2868
        %v2930 = vmul.f32 %v2152, %v2868
        %v2931 = vmul.f32 %v2153, %v2868
        %v2932 = vmul.f32 %v2154, %v2868
        %v2933 = vmul.f32 %v2155, %v2868
        %v2934 = vmul.f32 %v2156, %v2868
        %v2935 = vmul.f32 %v2157, %v2868
        %v2936 = vmul.f32 %v2158, %v2868
        %v2937 = vmul.f32 %v2159, %v2868
        %v2938 = vmul.f32 %v2160, %v2868
        %v2939 = vmul.f32 %v2161, %v2868
        %v2940 = vmul.f32 %v2162, %v2868
        %v2941 = vmul.f32 %v2163, %v2868
        %v2942 = vmul.f32 %v2164, %v2868
        %v2943 = vmul.f32 %v2165, %v2868
        %v2944 = vmul.f32 %v2166, %v2868
        %v2945 = vmul.f32 %v2167, %v2868
        %v2946 = vmul.f32 %v2168, %v2868
        %v2947 = vmul.f32 %v2169, %v2868
        %v2948 = vmul.f32 %v2170, %v2868
        %v2949 = vmul.f32 %v2171, %v2868
        %v2950 = vmul.f32 %v2172, %v2868
        %v2951 = vmul.f32 %v2173, %v2868
        %v2952 = vmul.f32 %v2174, %v2868
        %v2953 = vmul.f32 %v2175, %v2868
        %v2954 = vmul.f32 %v2176, %v2868
        %v2955 = vmul.f32 %v2177, %v2868
        %v2956 = vmul.f32 %v2178, %v2868
        %v2957 = vmul.f32 %v2179, %v2868
        %v2958 = vmul.f32 %v2180, %v2868
        %v2959 = vmul.f32 %v2181, %v2868
        %v2960 = vmul.f32 %v2182, %v2868
        %v2961 = vmul.f32 %v2183, %v2868
        %v2962 = vmul.f32 %v2184, %v2868
        %v2963 = vmul.f32 %v2185, %v2868
        %v2964 = vmul.f32 %v2186, %v2868
        %v2965 = vmul.f32 %v2187, %v2868
        %v2966 = vmul.f32 %v2188, %v2868
        %v2967 = vmul.f32 %v2189, %v2868
        %v2968 = vmul.f32 %v2190, %v2868
        %v2969 = vmul.f32 %v2191, %v2868
        %v2970 = vmul.f32 %v2192, %v2868
        %v2971 = vmul.f32 %v2193, %v2868
        %v2972 = vmul.f32 %v2194, %v2868
        %v2973 = vmul.f32 %v2195, %v2868
        %v2974 = vmul.f32 %v2196, %v2868
        %v2975 = vmul.f32 %v2197, %v2868
        %v2976 = vmul.f32 %v2198, %v2868
        %v2977 = vmul.f32 %v2199, %v2868
        %v2978 = vmul.f32 %v2200, %v2868
        %v2979 = vmul.f32 %v2201, %v2868
        %v2980 = vmul.f32 %v2202, %v2868
        %v2981 = vmul.f32 %v2203, %v2868
        %v2982 = vmul.f32 %v2204, %v2868
        %v2983 = vmul.f32 %v2205, %v2868
        %v2984 = vmul.f32 %v2206, %v2868
        %v2985 = vmul.f32 %v2207, %v2868
        %v2986 = vmul.f32 %v2208, %v2868
        %v2987 = vmul.f32 %v2209, %v2868
        %v2988 = vmul.f32 %v2210, %v2868
        %v2989 = vmul.f32 %v2211, %v2868
        %v2990 = vmul.f32 %v2212, %v2868
        %v2991 = vmul.f32 %v2213, %v2868
        %v2992 = vmul.f32 %v2214, %v2868
        %v2993 = vmul.f32 %v2215, %v2868
        %v2994 = vmul.f32 %v2216, %v2868
        %v2995 = vmul.f32 %v2217, %v2868
        %v2996 = vmul.f32 %v2218, %v2868
        %v2997 = vmul.f32 %v2219, %v2868
        %v2998 = vsel %vm901, %v2870, 0.0
        %2999 = vadd.xlane.f32.xlu0 %v2998
        %v3000 = vpop.xlane.xlu0 %2999
        %v3001 = vsel %vm901, %v2871, 0.0
        %3002 = vadd.xlane.f32.xlu0 %v3001
        %v3003 = vpop.xlane.xlu0 %3002
        %v3004 = vsel %vm901, %v2872, 0.0
        %3005 = vadd.xlane.f32.xlu0 %v3004
        %v3006 = vpop.xlane.xlu0 %3005
        %v3007 = vsel %vm901, %v2873, 0.0
        %3008 = vadd.xlane.f32.xlu0 %v3007
        %v3009 = vpop.xlane.xlu0 %3008
        %v3010 = vsel %vm901, %v2874, 0.0
        %3011 = vadd.xlane.f32.xlu0 %v3010
        %v3012 = vpop.xlane.xlu0 %3011
        %v3013 = vsel %vm901, %v2875, 0.0
        %3014 = vadd.xlane.f32.xlu0 %v3013
        %v3015 = vpop.xlane.xlu0 %3014
        %v3016 = vsel %vm901, %v2876, 0.0
        %3017 = vadd.xlane.f32.xlu0 %v3016
        %v3018 = vpop.xlane.xlu0 %3017
        %v3019 = vsel %vm901, %v2877, 0.0
        %3020 = vadd.xlane.f32.xlu0 %v3019
        %v3021 = vpop.xlane.xlu0 %3020
        %v3022 = vsel %vm901, %v2878, 0.0
        %3023 = vadd.xlane.f32.xlu0 %v3022
        %v3024 = vpop.xlane.xlu0 %3023
        %v3025 = vsel %vm901, %v2879, 0.0
        %3026 = vadd.xlane.f32.xlu0 %v3025
        %v3027 = vpop.xlane.xlu0 %3026
        %v3028 = vsel %vm901, %v2880, 0.0
        %3029 = vadd.xlane.f32.xlu0 %v3028
        %v3030 = vpop.xlane.xlu0 %3029
        %v3031 = vsel %vm901, %v2881, 0.0
        %3032 = vadd.xlane.f32.xlu0 %v3031
        %v3033 = vpop.xlane.xlu0 %3032
        %v3034 = vsel %vm901, %v2882, 0.0
        %3035 = vadd.xlane.f32.xlu0 %v3034
        %v3036 = vpop.xlane.xlu0 %3035
        %v3037 = vsel %vm901, %v2883, 0.0
        %3038 = vadd.xlane.f32.xlu0 %v3037
        %v3039 = vpop.xlane.xlu0 %3038
        %v3040 = vsel %vm901, %v2884, 0.0
        %3041 = vadd.xlane.f32.xlu0 %v3040
        %v3042 = vpop.xlane.xlu0 %3041
        %v3043 = vsel %vm901, %v2885, 0.0
        %3044 = vadd.xlane.f32.xlu0 %v3043
        %v3045 = vpop.xlane.xlu0 %3044
        %v3046 = vsel %vm901, %v2886, 0.0
        %3047 = vadd.xlane.f32.xlu0 %v3046
        %v3048 = vpop.xlane.xlu0 %3047
        %v3049 = vsel %vm901, %v2887, 0.0
        %3050 = vadd.xlane.f32.xlu0 %v3049
        %v3051 = vpop.xlane.xlu0 %3050
        %v3052 = vsel %vm901, %v2888, 0.0
        %3053 = vadd.xlane.f32.xlu0 %v3052
        %v3054 = vpop.xlane.xlu0 %3053
        %v3055 = vsel %vm901, %v2889, 0.0
        %3056 = vadd.xlane.f32.xlu0 %v3055
        %v3057 = vpop.xlane.xlu0 %3056
        %v3058 = vsel %vm901, %v2890, 0.0
        %3059 = vadd.xlane.f32.xlu0 %v3058
        %v3060 = vpop.xlane.xlu0 %3059
        %v3061 = vsel %vm901, %v2891, 0.0
        %3062 = vadd.xlane.f32.xlu0 %v3061
        %v3063 = vpop.xlane.xlu0 %3062
        %v3064 = vsel %vm901, %v2892, 0.0
        %3065 = vadd.xlane.f32.xlu0 %v3064
        %v3066 = vpop.xlane.xlu0 %3065
        %v3067 = vsel %vm901, %v2893, 0.0
        %3068 = vadd.xlane.f32.xlu0 %v3067
        %v3069 = vpop.xlane.xlu0 %3068
        %v3070 = vsel %vm901, %v2894, 0.0
        %3071 = vadd.xlane.f32.xlu0 %v3070
        %v3072 = vpop.xlane.xlu0 %3071
        %v3073 = vsel %vm901, %v2895, 0.0
        %3074 = vadd.xlane.f32.xlu0 %v3073
        %v3075 = vpop.xlane.xlu0 %3074
        %v3076 = vsel %vm901, %v2896, 0.0
        %3077 = vadd.xlane.f32.xlu0 %v3076
        %v3078 = vpop.xlane.xlu0 %3077
        %v3079 = vsel %vm901, %v2897, 0.0
        %3080 = vadd.xlane.f32.xlu0 %v3079
        %v3081 = vpop.xlane.xlu0 %3080
        %v3082 = vsel %vm901, %v2898, 0.0
        %3083 = vadd.xlane.f32.xlu0 %v3082
        %v3084 = vpop.xlane.xlu0 %3083
        %v3085 = vsel %vm901, %v2899, 0.0
        %3086 = vadd.xlane.f32.xlu0 %v3085
        %v3087 = vpop.xlane.xlu0 %3086
        %v3088 = vsel %vm901, %v2900, 0.0
        %3089 = vadd.xlane.f32.xlu0 %v3088
        %v3090 = vpop.xlane.xlu0 %3089
        %v3091 = vsel %vm901, %v2901, 0.0
        %3092 = vadd.xlane.f32.xlu0 %v3091
        %v3093 = vpop.xlane.xlu0 %3092
        %v3094 = vsel %vm901, %v2902, 0.0
        %3095 = vadd.xlane.f32.xlu0 %v3094
        %v3096 = vpop.xlane.xlu0 %3095
        %v3097 = vsel %vm901, %v2903, 0.0
        %3098 = vadd.xlane.f32.xlu0 %v3097
        %v3099 = vpop.xlane.xlu0 %3098
        %v3100 = vsel %vm901, %v2904, 0.0
        %3101 = vadd.xlane.f32.xlu0 %v3100
        %v3102 = vpop.xlane.xlu0 %3101
        %v3103 = vsel %vm901, %v2905, 0.0
        %3104 = vadd.xlane.f32.xlu0 %v3103
        %v3105 = vpop.xlane.xlu0 %3104
        %v3106 = vsel %vm901, %v2906, 0.0
        %3107 = vadd.xlane.f32.xlu0 %v3106
        %v3108 = vpop.xlane.xlu0 %3107
        %v3109 = vsel %vm901, %v2907, 0.0
        %3110 = vadd.xlane.f32.xlu0 %v3109
        %v3111 = vpop.xlane.xlu0 %3110
        %v3112 = vsel %vm901, %v2908, 0.0
        %3113 = vadd.xlane.f32.xlu0 %v3112
        %v3114 = vpop.xlane.xlu0 %3113
        %v3115 = vsel %vm901, %v2909, 0.0
        %3116 = vadd.xlane.f32.xlu0 %v3115
        %v3117 = vpop.xlane.xlu0 %3116
        %v3118 = vsel %vm901, %v2910, 0.0
        %3119 = vadd.xlane.f32.xlu0 %v3118
        %v3120 = vpop.xlane.xlu0 %3119
        %v3121 = vsel %vm901, %v2911, 0.0
        %3122 = vadd.xlane.f32.xlu0 %v3121
        %v3123 = vpop.xlane.xlu0 %3122
        %v3124 = vsel %vm901, %v2912, 0.0
        %3125 = vadd.xlane.f32.xlu0 %v3124
        %v3126 = vpop.xlane.xlu0 %3125
        %v3127 = vsel %vm901, %v2913, 0.0
        %3128 = vadd.xlane.f32.xlu0 %v3127
        %v3129 = vpop.xlane.xlu0 %3128
        %v3130 = vsel %vm901, %v2914, 0.0
        %3131 = vadd.xlane.f32.xlu0 %v3130
        %v3132 = vpop.xlane.xlu0 %3131
        %v3133 = vsel %vm901, %v2915, 0.0
        %3134 = vadd.xlane.f32.xlu0 %v3133
        %v3135 = vpop.xlane.xlu0 %3134
        %v3136 = vsel %vm901, %v2916, 0.0
        %3137 = vadd.xlane.f32.xlu0 %v3136
        %v3138 = vpop.xlane.xlu0 %3137
        %v3139 = vsel %vm901, %v2917, 0.0
        %3140 = vadd.xlane.f32.xlu0 %v3139
        %v3141 = vpop.xlane.xlu0 %3140
        %v3142 = vsel %vm901, %v2918, 0.0
        %3143 = vadd.xlane.f32.xlu0 %v3142
        %v3144 = vpop.xlane.xlu0 %3143
        %v3145 = vsel %vm901, %v2919, 0.0
        %3146 = vadd.xlane.f32.xlu0 %v3145
        %v3147 = vpop.xlane.xlu0 %3146
        %v3148 = vsel %vm901, %v2920, 0.0
        %3149 = vadd.xlane.f32.xlu0 %v3148
        %v3150 = vpop.xlane.xlu0 %3149
        %v3151 = vsel %vm901, %v2921, 0.0
        %3152 = vadd.xlane.f32.xlu0 %v3151
        %v3153 = vpop.xlane.xlu0 %3152
        %v3154 = vsel %vm901, %v2922, 0.0
        %3155 = vadd.xlane.f32.xlu0 %v3154
        %v3156 = vpop.xlane.xlu0 %3155
        %v3157 = vsel %vm901, %v2923, 0.0
        %3158 = vadd.xlane.f32.xlu0 %v3157
        %v3159 = vpop.xlane.xlu0 %3158
        %v3160 = vsel %vm901, %v2924, 0.0
        %3161 = vadd.xlane.f32.xlu0 %v3160
        %v3162 = vpop.xlane.xlu0 %3161
        %v3163 = vsel %vm901, %v2925, 0.0
        %3164 = vadd.xlane.f32.xlu0 %v3163
        %v3165 = vpop.xlane.xlu0 %3164
        %v3166 = vsel %vm901, %v2926, 0.0
        %3167 = vadd.xlane.f32.xlu0 %v3166
        %v3168 = vpop.xlane.xlu0 %3167
        %v3169 = vsel %vm901, %v2927, 0.0
        %3170 = vadd.xlane.f32.xlu0 %v3169
        %v3171 = vpop.xlane.xlu0 %3170
        %v3172 = vsel %vm901, %v2928, 0.0
        %3173 = vadd.xlane.f32.xlu0 %v3172
        %v3174 = vpop.xlane.xlu0 %3173
        %v3175 = vsel %vm901, %v2929, 0.0
        %3176 = vadd.xlane.f32.xlu0 %v3175
        %v3177 = vpop.xlane.xlu0 %3176
        %v3178 = vsel %vm901, %v2930, 0.0
        %3179 = vadd.xlane.f32.xlu0 %v3178
        %v3180 = vpop.xlane.xlu0 %3179
        %v3181 = vsel %vm901, %v2931, 0.0
        %3182 = vadd.xlane.f32.xlu0 %v3181
        %v3183 = vpop.xlane.xlu0 %3182
        %v3184 = vsel %vm901, %v2932, 0.0
        %3185 = vadd.xlane.f32.xlu0 %v3184
        %v3186 = vpop.xlane.xlu0 %3185
        %v3187 = vsel %vm901, %v2933, 0.0
        %3188 = vadd.xlane.f32.xlu0 %v3187
        %v3189 = vpop.xlane.xlu0 %3188
        %v3190 = vsel %vm901, %v2934, 0.0
        %3191 = vadd.xlane.f32.xlu0 %v3190
        %v3192 = vpop.xlane.xlu0 %3191
        %v3193 = vsel %vm901, %v2935, 0.0
        %3194 = vadd.xlane.f32.xlu0 %v3193
        %v3195 = vpop.xlane.xlu0 %3194
        %v3196 = vsel %vm901, %v2936, 0.0
        %3197 = vadd.xlane.f32.xlu0 %v3196
        %v3198 = vpop.xlane.xlu0 %3197
        %v3199 = vsel %vm901, %v2937, 0.0
        %3200 = vadd.xlane.f32.xlu0 %v3199
        %v3201 = vpop.xlane.xlu0 %3200
        %v3202 = vsel %vm901, %v2938, 0.0
        %3203 = vadd.xlane.f32.xlu0 %v3202
        %v3204 = vpop.xlane.xlu0 %3203
        %v3205 = vsel %vm901, %v2939, 0.0
        %3206 = vadd.xlane.f32.xlu0 %v3205
        %v3207 = vpop.xlane.xlu0 %3206
        %v3208 = vsel %vm901, %v2940, 0.0
        %3209 = vadd.xlane.f32.xlu0 %v3208
        %v3210 = vpop.xlane.xlu0 %3209
        %v3211 = vsel %vm901, %v2941, 0.0
        %3212 = vadd.xlane.f32.xlu0 %v3211
        %v3213 = vpop.xlane.xlu0 %3212
        %v3214 = vsel %vm901, %v2942, 0.0
        %3215 = vadd.xlane.f32.xlu0 %v3214
        %v3216 = vpop.xlane.xlu0 %3215
        %v3217 = vsel %vm901, %v2943, 0.0
        %3218 = vadd.xlane.f32.xlu0 %v3217
        %v3219 = vpop.xlane.xlu0 %3218
        %v3220 = vsel %vm901, %v2944, 0.0
        %3221 = vadd.xlane.f32.xlu0 %v3220
        %v3222 = vpop.xlane.xlu0 %3221
        %v3223 = vsel %vm901, %v2945, 0.0
        %3224 = vadd.xlane.f32.xlu0 %v3223
        %v3225 = vpop.xlane.xlu0 %3224
        %v3226 = vsel %vm901, %v2946, 0.0
        %3227 = vadd.xlane.f32.xlu0 %v3226
        %v3228 = vpop.xlane.xlu0 %3227
        %v3229 = vsel %vm901, %v2947, 0.0
        %3230 = vadd.xlane.f32.xlu0 %v3229
        %v3231 = vpop.xlane.xlu0 %3230
        %v3232 = vsel %vm901, %v2948, 0.0
        %3233 = vadd.xlane.f32.xlu0 %v3232
        %v3234 = vpop.xlane.xlu0 %3233
        %v3235 = vsel %vm901, %v2949, 0.0
        %3236 = vadd.xlane.f32.xlu0 %v3235
        %v3237 = vpop.xlane.xlu0 %3236
        %v3238 = vsel %vm901, %v2950, 0.0
        %3239 = vadd.xlane.f32.xlu0 %v3238
        %v3240 = vpop.xlane.xlu0 %3239
        %v3241 = vsel %vm901, %v2951, 0.0
        %3242 = vadd.xlane.f32.xlu0 %v3241
        %v3243 = vpop.xlane.xlu0 %3242
        %v3244 = vsel %vm901, %v2952, 0.0
        %3245 = vadd.xlane.f32.xlu0 %v3244
        %v3246 = vpop.xlane.xlu0 %3245
        %v3247 = vsel %vm901, %v2953, 0.0
        %3248 = vadd.xlane.f32.xlu0 %v3247
        %v3249 = vpop.xlane.xlu0 %3248
        %v3250 = vsel %vm901, %v2954, 0.0
        %3251 = vadd.xlane.f32.xlu0 %v3250
        %v3252 = vpop.xlane.xlu0 %3251
        %v3253 = vsel %vm901, %v2955, 0.0
        %3254 = vadd.xlane.f32.xlu0 %v3253
        %v3255 = vpop.xlane.xlu0 %3254
        %v3256 = vsel %vm901, %v2956, 0.0
        %3257 = vadd.xlane.f32.xlu0 %v3256
        %v3258 = vpop.xlane.xlu0 %3257
        %v3259 = vsel %vm901, %v2957, 0.0
        %3260 = vadd.xlane.f32.xlu0 %v3259
        %v3261 = vpop.xlane.xlu0 %3260
        %v3262 = vsel %vm901, %v2958, 0.0
        %3263 = vadd.xlane.f32.xlu0 %v3262
        %v3264 = vpop.xlane.xlu0 %3263
        %v3265 = vsel %vm901, %v2959, 0.0
        %3266 = vadd.xlane.f32.xlu0 %v3265
        %v3267 = vpop.xlane.xlu0 %3266
        %v3268 = vsel %vm901, %v2960, 0.0
        %3269 = vadd.xlane.f32.xlu0 %v3268
        %v3270 = vpop.xlane.xlu0 %3269
        %v3271 = vsel %vm901, %v2961, 0.0
        %3272 = vadd.xlane.f32.xlu0 %v3271
        %v3273 = vpop.xlane.xlu0 %3272
        %v3274 = vsel %vm901, %v2962, 0.0
        %3275 = vadd.xlane.f32.xlu0 %v3274
        %v3276 = vpop.xlane.xlu0 %3275
        %v3277 = vsel %vm901, %v2963, 0.0
        %3278 = vadd.xlane.f32.xlu0 %v3277
        %v3279 = vpop.xlane.xlu0 %3278
        %v3280 = vsel %vm901, %v2964, 0.0
        %3281 = vadd.xlane.f32.xlu0 %v3280
        %v3282 = vpop.xlane.xlu0 %3281
        %v3283 = vsel %vm901, %v2965, 0.0
        %3284 = vadd.xlane.f32.xlu0 %v3283
        %v3285 = vpop.xlane.xlu0 %3284
        %v3286 = vsel %vm901, %v2966, 0.0
        %3287 = vadd.xlane.f32.xlu0 %v3286
        %v3288 = vpop.xlane.xlu0 %3287
        %v3289 = vsel %vm901, %v2967, 0.0
        %3290 = vadd.xlane.f32.xlu0 %v3289
        %v3291 = vpop.xlane.xlu0 %3290
        %v3292 = vsel %vm901, %v2968, 0.0
        %3293 = vadd.xlane.f32.xlu0 %v3292
        %v3294 = vpop.xlane.xlu0 %3293
        %v3295 = vsel %vm901, %v2969, 0.0
        %3296 = vadd.xlane.f32.xlu0 %v3295
        %v3297 = vpop.xlane.xlu0 %3296
        %v3298 = vsel %vm901, %v2970, 0.0
        %3299 = vadd.xlane.f32.xlu0 %v3298
        %v3300 = vpop.xlane.xlu0 %3299
        %v3301 = vsel %vm901, %v2971, 0.0
        %3302 = vadd.xlane.f32.xlu0 %v3301
        %v3303 = vpop.xlane.xlu0 %3302
        %v3304 = vsel %vm901, %v2972, 0.0
        %3305 = vadd.xlane.f32.xlu0 %v3304
        %v3306 = vpop.xlane.xlu0 %3305
        %v3307 = vsel %vm901, %v2973, 0.0
        %3308 = vadd.xlane.f32.xlu0 %v3307
        %v3309 = vpop.xlane.xlu0 %3308
        %v3310 = vsel %vm901, %v2974, 0.0
        %3311 = vadd.xlane.f32.xlu0 %v3310
        %v3312 = vpop.xlane.xlu0 %3311
        %v3313 = vsel %vm901, %v2975, 0.0
        %3314 = vadd.xlane.f32.xlu0 %v3313
        %v3315 = vpop.xlane.xlu0 %3314
        %v3316 = vsel %vm901, %v2976, 0.0
        %3317 = vadd.xlane.f32.xlu0 %v3316
        %v3318 = vpop.xlane.xlu0 %3317
        %v3319 = vsel %vm901, %v2977, 0.0
        %3320 = vadd.xlane.f32.xlu0 %v3319
        %v3321 = vpop.xlane.xlu0 %3320
        %v3322 = vsel %vm901, %v2978, 0.0
        %3323 = vadd.xlane.f32.xlu0 %v3322
        %v3324 = vpop.xlane.xlu0 %3323
        %v3325 = vsel %vm901, %v2979, 0.0
        %3326 = vadd.xlane.f32.xlu0 %v3325
        %v3327 = vpop.xlane.xlu0 %3326
        %v3328 = vsel %vm901, %v2980, 0.0
        %3329 = vadd.xlane.f32.xlu0 %v3328
        %v3330 = vpop.xlane.xlu0 %3329
        %v3331 = vsel %vm901, %v2981, 0.0
        %3332 = vadd.xlane.f32.xlu0 %v3331
        %v3333 = vpop.xlane.xlu0 %3332
        %v3334 = vsel %vm901, %v2982, 0.0
        %3335 = vadd.xlane.f32.xlu0 %v3334
        %v3336 = vpop.xlane.xlu0 %3335
        %v3337 = vsel %vm901, %v2983, 0.0
        %3338 = vadd.xlane.f32.xlu0 %v3337
        %v3339 = vpop.xlane.xlu0 %3338
        %v3340 = vsel %vm901, %v2984, 0.0
        %3341 = vadd.xlane.f32.xlu0 %v3340
        %v3342 = vpop.xlane.xlu0 %3341
        %v3343 = vsel %vm901, %v2985, 0.0
        %3344 = vadd.xlane.f32.xlu0 %v3343
        %v3345 = vpop.xlane.xlu0 %3344
        %v3346 = vsel %vm901, %v2986, 0.0
        %3347 = vadd.xlane.f32.xlu0 %v3346
        %v3348 = vpop.xlane.xlu0 %3347
        %v3349 = vsel %vm901, %v2987, 0.0
        %3350 = vadd.xlane.f32.xlu0 %v3349
        %v3351 = vpop.xlane.xlu0 %3350
        %v3352 = vsel %vm901, %v2988, 0.0
        %3353 = vadd.xlane.f32.xlu0 %v3352
        %v3354 = vpop.xlane.xlu0 %3353
        %v3355 = vsel %vm901, %v2989, 0.0
        %3356 = vadd.xlane.f32.xlu0 %v3355
        %v3357 = vpop.xlane.xlu0 %3356
        %v3358 = vsel %vm901, %v2990, 0.0
        %3359 = vadd.xlane.f32.xlu0 %v3358
        %v3360 = vpop.xlane.xlu0 %3359
        %v3361 = vsel %vm901, %v2991, 0.0
        %3362 = vadd.xlane.f32.xlu0 %v3361
        %v3363 = vpop.xlane.xlu0 %3362
        %v3364 = vsel %vm901, %v2992, 0.0
        %3365 = vadd.xlane.f32.xlu0 %v3364
        %v3366 = vpop.xlane.xlu0 %3365
        %v3367 = vsel %vm901, %v2993, 0.0
        %3368 = vadd.xlane.f32.xlu0 %v3367
        %v3369 = vpop.xlane.xlu0 %3368
        %v3370 = vsel %vm901, %v2994, 0.0
        %3371 = vadd.xlane.f32.xlu0 %v3370
        %v3372 = vpop.xlane.xlu0 %3371
        %v3373 = vsel %vm901, %v2995, 0.0
        %3374 = vadd.xlane.f32.xlu0 %v3373
        %v3375 = vpop.xlane.xlu0 %3374
        %v3376 = vsel %vm901, %v2996, 0.0
        %3377 = vadd.xlane.f32.xlu0 %v3376
        %v3378 = vpop.xlane.xlu0 %3377
        %v3379 = vsel %vm901, %v2997, 0.0
        %3380 = vadd.xlane.f32.xlu0 %v3379
        %v3381 = vpop.xlane.xlu0 %3380
        %s3382 = sld [smem:[#allocation2 + $0x1]]
        %v3383 = vstv %s3382
        %v3384 = vadd.f32 %v3000, %v3383
        %v3385 = vadd.f32 %v3003, %v3383
        %v3386 = vadd.f32 %v3006, %v3383
        %v3387 = vadd.f32 %v3009, %v3383
        %v3388 = vadd.f32 %v3012, %v3383
        %v3389 = vadd.f32 %v3015, %v3383
        %v3390 = vadd.f32 %v3018, %v3383
        %v3391 = vadd.f32 %v3021, %v3383
        %v3392 = vadd.f32 %v3024, %v3383
        %v3393 = vadd.f32 %v3027, %v3383
        %v3394 = vadd.f32 %v3030, %v3383
        %v3395 = vadd.f32 %v3033, %v3383
        %v3396 = vadd.f32 %v3036, %v3383
        %v3397 = vadd.f32 %v3039, %v3383
        %v3398 = vadd.f32 %v3042, %v3383
        %v3399 = vadd.f32 %v3045, %v3383
        %v3400 = vadd.f32 %v3048, %v3383
        %v3401 = vadd.f32 %v3051, %v3383
        %v3402 = vadd.f32 %v3054, %v3383
        %v3403 = vadd.f32 %v3057, %v3383
        %v3404 = vadd.f32 %v3060, %v3383
        %v3405 = vadd.f32 %v3063, %v3383
        %v3406 = vadd.f32 %v3066, %v3383
        %v3407 = vadd.f32 %v3069, %v3383
        %v3408 = vadd.f32 %v3072, %v3383
        %v3409 = vadd.f32 %v3075, %v3383
        %v3410 = vadd.f32 %v3078, %v3383
        %v3411 = vadd.f32 %v3081, %v3383
        %v3412 = vadd.f32 %v3084, %v3383
        %v3413 = vadd.f32 %v3087, %v3383
        %v3414 = vadd.f32 %v3090, %v3383
        %v3415 = vadd.f32 %v3093, %v3383
        %v3416 = vadd.f32 %v3096, %v3383
        %v3417 = vadd.f32 %v3099, %v3383
        %v3418 = vadd.f32 %v3102, %v3383
        %v3419 = vadd.f32 %v3105, %v3383
        %v3420 = vadd.f32 %v3108, %v3383
        %v3421 = vadd.f32 %v3111, %v3383
        %v3422 = vadd.f32 %v3114, %v3383
        %v3423 = vadd.f32 %v3117, %v3383
        %v3424 = vadd.f32 %v3120, %v3383
        %v3425 = vadd.f32 %v3123, %v3383
        %v3426 = vadd.f32 %v3126, %v3383
        %v3427 = vadd.f32 %v3129, %v3383
        %v3428 = vadd.f32 %v3132, %v3383
        %v3429 = vadd.f32 %v3135, %v3383
        %v3430 = vadd.f32 %v3138, %v3383
        %v3431 = vadd.f32 %v3141, %v3383
        %v3432 = vadd.f32 %v3144, %v3383
        %v3433 = vadd.f32 %v3147, %v3383
        %v3434 = vadd.f32 %v3150, %v3383
        %v3435 = vadd.f32 %v3153, %v3383
        %v3436 = vadd.f32 %v3156, %v3383
        %v3437 = vadd.f32 %v3159, %v3383
        %v3438 = vadd.f32 %v3162, %v3383
        %v3439 = vadd.f32 %v3165, %v3383
        %v3440 = vadd.f32 %v3168, %v3383
        %v3441 = vadd.f32 %v3171, %v3383
        %v3442 = vadd.f32 %v3174, %v3383
        %v3443 = vadd.f32 %v3177, %v3383
        %v3444 = vadd.f32 %v3180, %v3383
        %v3445 = vadd.f32 %v3183, %v3383
        %v3446 = vadd.f32 %v3186, %v3383
        %v3447 = vadd.f32 %v3189, %v3383
        %v3448 = vadd.f32 %v3192, %v3383
        %v3449 = vadd.f32 %v3195, %v3383
        %v3450 = vadd.f32 %v3198, %v3383
        %v3451 = vadd.f32 %v3201, %v3383
        %v3452 = vadd.f32 %v3204, %v3383
        %v3453 = vadd.f32 %v3207, %v3383
        %v3454 = vadd.f32 %v3210, %v3383
        %v3455 = vadd.f32 %v3213, %v3383
        %v3456 = vadd.f32 %v3216, %v3383
        %v3457 = vadd.f32 %v3219, %v3383
        %v3458 = vadd.f32 %v3222, %v3383
        %v3459 = vadd.f32 %v3225, %v3383
        %v3460 = vadd.f32 %v3228, %v3383
        %v3461 = vadd.f32 %v3231, %v3383
        %v3462 = vadd.f32 %v3234, %v3383
        %v3463 = vadd.f32 %v3237, %v3383
        %v3464 = vadd.f32 %v3240, %v3383
        %v3465 = vadd.f32 %v3243, %v3383
        %v3466 = vadd.f32 %v3246, %v3383
        %v3467 = vadd.f32 %v3249, %v3383
        %v3468 = vadd.f32 %v3252, %v3383
        %v3469 = vadd.f32 %v3255, %v3383
        %v3470 = vadd.f32 %v3258, %v3383
        %v3471 = vadd.f32 %v3261, %v3383
        %v3472 = vadd.f32 %v3264, %v3383
        %v3473 = vadd.f32 %v3267, %v3383
        %v3474 = vadd.f32 %v3270, %v3383
        %v3475 = vadd.f32 %v3273, %v3383
        %v3476 = vadd.f32 %v3276, %v3383
        %v3477 = vadd.f32 %v3279, %v3383
        %v3478 = vadd.f32 %v3282, %v3383
        %v3479 = vadd.f32 %v3285, %v3383
        %v3480 = vadd.f32 %v3288, %v3383
        %v3481 = vadd.f32 %v3291, %v3383
        %v3482 = vadd.f32 %v3294, %v3383
        %v3483 = vadd.f32 %v3297, %v3383
        %v3484 = vadd.f32 %v3300, %v3383
        %v3485 = vadd.f32 %v3303, %v3383
        %v3486 = vadd.f32 %v3306, %v3383
        %v3487 = vadd.f32 %v3309, %v3383
        %v3488 = vadd.f32 %v3312, %v3383
        %v3489 = vadd.f32 %v3315, %v3383
        %v3490 = vadd.f32 %v3318, %v3383
        %v3491 = vadd.f32 %v3321, %v3383
        %v3492 = vadd.f32 %v3324, %v3383
        %v3493 = vadd.f32 %v3327, %v3383
        %v3494 = vadd.f32 %v3330, %v3383
        %v3495 = vadd.f32 %v3333, %v3383
        %v3496 = vadd.f32 %v3336, %v3383
        %v3497 = vadd.f32 %v3339, %v3383
        %v3498 = vadd.f32 %v3342, %v3383
        %v3499 = vadd.f32 %v3345, %v3383
        %v3500 = vadd.f32 %v3348, %v3383
        %v3501 = vadd.f32 %v3351, %v3383
        %v3502 = vadd.f32 %v3354, %v3383
        %v3503 = vadd.f32 %v3357, %v3383
        %v3504 = vadd.f32 %v3360, %v3383
        %v3505 = vadd.f32 %v3363, %v3383
        %v3506 = vadd.f32 %v3366, %v3383
        %v3507 = vadd.f32 %v3369, %v3383
        %v3508 = vadd.f32 %v3372, %v3383
        %v3509 = vadd.f32 %v3375, %v3383
        %v3510 = vadd.f32 %v3378, %v3383
        %v3511 = vadd.f32 %v3381, %v3383
        %v3512 = vld [vmem:[%s483] sm:$0xff]
        %v3513 = vld [vmem:[%s483 + $0x8] sm:$0xff]
        %v3514 = vld [vmem:[%s483 + $0x10] sm:$0xff]
        %v3515 = vld [vmem:[%s483 + $0x18] sm:$0xff]
        %v3516 = vld [vmem:[%s483 + $0x20] sm:$0xff]
        %v3517 = vld [vmem:[%s483 + $0x28] sm:$0xff]
        %v3518 = vld [vmem:[%s483 + $0x30] sm:$0xff]
        %v3519 = vld [vmem:[%s483 + $0x38] sm:$0xff]
        %v3520 = vld [vmem:[%s483 + $0x40] sm:$0xff]
        %v3521 = vld [vmem:[%s483 + $0x48] sm:$0xff]
        %v3522 = vld [vmem:[%s483 + $0x50] sm:$0xff]
        %v3523 = vld [vmem:[%s483 + $0x58] sm:$0xff]
        %v3524 = vld [vmem:[%s483 + $0x60] sm:$0xff]
        %v3525 = vld [vmem:[%s483 + $0x68] sm:$0xff]
        %v3526 = vld [vmem:[%s483 + $0x70] sm:$0xff]
        %v3527 = vld [vmem:[%s483 + $0x78] sm:$0xff]
        %v3528 = vld [vmem:[%s483 + $0x80] sm:$0xff]
        %v3529 = vld [vmem:[%s483 + $0x88] sm:$0xff]
        %v3530 = vld [vmem:[%s483 + $0x90] sm:$0xff]
        %v3531 = vld [vmem:[%s483 + $0x98] sm:$0xff]
        %v3532 = vld [vmem:[%s483 + $0xa0] sm:$0xff]
        %v3533 = vld [vmem:[%s483 + $0xa8] sm:$0xff]
        %v3534 = vld [vmem:[%s483 + $0xb0] sm:$0xff]
        %v3535 = vld [vmem:[%s483 + $0xb8] sm:$0xff]
        %v3536 = vld [vmem:[%s483 + $0xc0] sm:$0xff]
        %v3537 = vld [vmem:[%s483 + $0xc8] sm:$0xff]
        %v3538 = vld [vmem:[%s483 + $0xd0] sm:$0xff]
        %v3539 = vld [vmem:[%s483 + $0xd8] sm:$0xff]
        %v3540 = vld [vmem:[%s483 + $0xe0] sm:$0xff]
        %v3541 = vld [vmem:[%s483 + $0xe8] sm:$0xff]
        %v3542 = vld [vmem:[%s483 + $0xf0] sm:$0xff]
        %v3543 = vld [vmem:[%s483 + $0xf8] sm:$0xff]
        %v3544 = vld [vmem:[%s483 + $0x100] sm:$0xff]
        %v3545 = vld [vmem:[%s483 + $0x108] sm:$0xff]
        %v3546 = vld [vmem:[%s483 + $0x110] sm:$0xff]
        %v3547 = vld [vmem:[%s483 + $0x118] sm:$0xff]
        %v3548 = vld [vmem:[%s483 + $0x120] sm:$0xff]
        %v3549 = vld [vmem:[%s483 + $0x128] sm:$0xff]
        %v3550 = vld [vmem:[%s483 + $0x130] sm:$0xff]
        %v3551 = vld [vmem:[%s483 + $0x138] sm:$0xff]
        %v3552 = vld [vmem:[%s483 + $0x140] sm:$0xff]
        %v3553 = vld [vmem:[%s483 + $0x148] sm:$0xff]
        %v3554 = vld [vmem:[%s483 + $0x150] sm:$0xff]
        %v3555 = vld [vmem:[%s483 + $0x158] sm:$0xff]
        %v3556 = vld [vmem:[%s483 + $0x160] sm:$0xff]
        %v3557 = vld [vmem:[%s483 + $0x168] sm:$0xff]
        %v3558 = vld [vmem:[%s483 + $0x170] sm:$0xff]
        %v3559 = vld [vmem:[%s483 + $0x178] sm:$0xff]
        %v3560 = vld [vmem:[%s483 + $0x180] sm:$0xff]
        %v3561 = vld [vmem:[%s483 + $0x188] sm:$0xff]
        %v3562 = vld [vmem:[%s483 + $0x190] sm:$0xff]
        %v3563 = vld [vmem:[%s483 + $0x198] sm:$0xff]
        %v3564 = vld [vmem:[%s483 + $0x1a0] sm:$0xff]
        %v3565 = vld [vmem:[%s483 + $0x1a8] sm:$0xff]
        %v3566 = vld [vmem:[%s483 + $0x1b0] sm:$0xff]
        %v3567 = vld [vmem:[%s483 + $0x1b8] sm:$0xff]
        %v3568 = vld [vmem:[%s483 + $0x1c0] sm:$0xff]
        %v3569 = vld [vmem:[%s483 + $0x1c8] sm:$0xff]
        %v3570 = vld [vmem:[%s483 + $0x1d0] sm:$0xff]
        %v3571 = vld [vmem:[%s483 + $0x1d8] sm:$0xff]
        %v3572 = vld [vmem:[%s483 + $0x1e0] sm:$0xff]
        %v3573 = vld [vmem:[%s483 + $0x1e8] sm:$0xff]
        %v3574 = vld [vmem:[%s483 + $0x1f0] sm:$0xff]
        %v3575 = vld [vmem:[%s483 + $0x1f8] sm:$0xff]
        %v3576 = vld [vmem:[%s483 + $0x200] sm:$0xff]
        %v3577 = vld [vmem:[%s483 + $0x208] sm:$0xff]
        %v3578 = vld [vmem:[%s483 + $0x210] sm:$0xff]
        %v3579 = vld [vmem:[%s483 + $0x218] sm:$0xff]
        %v3580 = vld [vmem:[%s483 + $0x220] sm:$0xff]
        %v3581 = vld [vmem:[%s483 + $0x228] sm:$0xff]
        %v3582 = vld [vmem:[%s483 + $0x230] sm:$0xff]
        %v3583 = vld [vmem:[%s483 + $0x238] sm:$0xff]
        %v3584 = vld [vmem:[%s483 + $0x240] sm:$0xff]
        %v3585 = vld [vmem:[%s483 + $0x248] sm:$0xff]
        %v3586 = vld [vmem:[%s483 + $0x250] sm:$0xff]
        %v3587 = vld [vmem:[%s483 + $0x258] sm:$0xff]
        %v3588 = vld [vmem:[%s483 + $0x260] sm:$0xff]
        %v3589 = vld [vmem:[%s483 + $0x268] sm:$0xff]
        %v3590 = vld [vmem:[%s483 + $0x270] sm:$0xff]
        %v3591 = vld [vmem:[%s483 + $0x278] sm:$0xff]
        %v3592 = vld [vmem:[%s483 + $0x280] sm:$0xff]
        %v3593 = vld [vmem:[%s483 + $0x288] sm:$0xff]
        %v3594 = vld [vmem:[%s483 + $0x290] sm:$0xff]
        %v3595 = vld [vmem:[%s483 + $0x298] sm:$0xff]
        %v3596 = vld [vmem:[%s483 + $0x2a0] sm:$0xff]
        %v3597 = vld [vmem:[%s483 + $0x2a8] sm:$0xff]
        %v3598 = vld [vmem:[%s483 + $0x2b0] sm:$0xff]
        %v3599 = vld [vmem:[%s483 + $0x2b8] sm:$0xff]
        %v3600 = vld [vmem:[%s483 + $0x2c0] sm:$0xff]
        %v3601 = vld [vmem:[%s483 + $0x2c8] sm:$0xff]
        %v3602 = vld [vmem:[%s483 + $0x2d0] sm:$0xff]
        %v3603 = vld [vmem:[%s483 + $0x2d8] sm:$0xff]
        %v3604 = vld [vmem:[%s483 + $0x2e0] sm:$0xff]
        %v3605 = vld [vmem:[%s483 + $0x2e8] sm:$0xff]
        %v3606 = vld [vmem:[%s483 + $0x2f0] sm:$0xff]
        %v3607 = vld [vmem:[%s483 + $0x2f8] sm:$0xff]
        %v3608 = vld [vmem:[%s483 + $0x300] sm:$0xff]
        %v3609 = vld [vmem:[%s483 + $0x308] sm:$0xff]
        %v3610 = vld [vmem:[%s483 + $0x310] sm:$0xff]
        %v3611 = vld [vmem:[%s483 + $0x318] sm:$0xff]
        %v3612 = vld [vmem:[%s483 + $0x320] sm:$0xff]
        %v3613 = vld [vmem:[%s483 + $0x328] sm:$0xff]
        %v3614 = vld [vmem:[%s483 + $0x330] sm:$0xff]
        %v3615 = vld [vmem:[%s483 + $0x338] sm:$0xff]
        %v3616 = vld [vmem:[%s483 + $0x340] sm:$0xff]
        %v3617 = vld [vmem:[%s483 + $0x348] sm:$0xff]
        %v3618 = vld [vmem:[%s483 + $0x350] sm:$0xff]
        %v3619 = vld [vmem:[%s483 + $0x358] sm:$0xff]
        %v3620 = vld [vmem:[%s483 + $0x360] sm:$0xff]
        %v3621 = vld [vmem:[%s483 + $0x368] sm:$0xff]
        %v3622 = vld [vmem:[%s483 + $0x370] sm:$0xff]
        %v3623 = vld [vmem:[%s483 + $0x378] sm:$0xff]
        %v3624 = vld [vmem:[%s483 + $0x380] sm:$0xff]
        %v3625 = vld [vmem:[%s483 + $0x388] sm:$0xff]
        %v3626 = vld [vmem:[%s483 + $0x390] sm:$0xff]
        %v3627 = vld [vmem:[%s483 + $0x398] sm:$0xff]
        %v3628 = vld [vmem:[%s483 + $0x3a0] sm:$0xff]
        %v3629 = vld [vmem:[%s483 + $0x3a8] sm:$0xff]
        %v3630 = vld [vmem:[%s483 + $0x3b0] sm:$0xff]
        %v3631 = vld [vmem:[%s483 + $0x3b8] sm:$0xff]
        %v3632 = vld [vmem:[%s483 + $0x3c0] sm:$0xff]
        %v3633 = vld [vmem:[%s483 + $0x3c8] sm:$0xff]
        %v3634 = vld [vmem:[%s483 + $0x3d0] sm:$0xff]
        %v3635 = vld [vmem:[%s483 + $0x3d8] sm:$0xff]
        %v3636 = vld [vmem:[%s483 + $0x3e0] sm:$0xff]
        %v3637 = vld [vmem:[%s483 + $0x3e8] sm:$0xff]
        %v3638 = vld [vmem:[%s483 + $0x3f0] sm:$0xff]
        %v3639 = vld [vmem:[%s483 + $0x3f8] sm:$0xff]
        %v3640 = vsub.f32 1.0, %v3512
        %v3641 = vsub.f32 1.0, %v3513
        %v3642 = vsub.f32 1.0, %v3514
        %v3643 = vsub.f32 1.0, %v3515
        %v3644 = vsub.f32 1.0, %v3516
        %v3645 = vsub.f32 1.0, %v3517
        %v3646 = vsub.f32 1.0, %v3518
        %v3647 = vsub.f32 1.0, %v3519
        %v3648 = vsub.f32 1.0, %v3520
        %v3649 = vsub.f32 1.0, %v3521
        %v3650 = vsub.f32 1.0, %v3522
        %v3651 = vsub.f32 1.0, %v3523
        %v3652 = vsub.f32 1.0, %v3524
        %v3653 = vsub.f32 1.0, %v3525
        %v3654 = vsub.f32 1.0, %v3526
        %v3655 = vsub.f32 1.0, %v3527
        %v3656 = vsub.f32 1.0, %v3528
        %v3657 = vsub.f32 1.0, %v3529
        %v3658 = vsub.f32 1.0, %v3530
        %v3659 = vsub.f32 1.0, %v3531
        %v3660 = vsub.f32 1.0, %v3532
        %v3661 = vsub.f32 1.0, %v3533
        %v3662 = vsub.f32 1.0, %v3534
        %v3663 = vsub.f32 1.0, %v3535
        %v3664 = vsub.f32 1.0, %v3536
        %v3665 = vsub.f32 1.0, %v3537
        %v3666 = vsub.f32 1.0, %v3538
        %v3667 = vsub.f32 1.0, %v3539
        %v3668 = vsub.f32 1.0, %v3540
        %v3669 = vsub.f32 1.0, %v3541
        %v3670 = vsub.f32 1.0, %v3542
        %v3671 = vsub.f32 1.0, %v3543
        %v3672 = vsub.f32 1.0, %v3544
        %v3673 = vsub.f32 1.0, %v3545
        %v3674 = vsub.f32 1.0, %v3546
        %v3675 = vsub.f32 1.0, %v3547
        %v3676 = vsub.f32 1.0, %v3548
        %v3677 = vsub.f32 1.0, %v3549
        %v3678 = vsub.f32 1.0, %v3550
        %v3679 = vsub.f32 1.0, %v3551
        %v3680 = vsub.f32 1.0, %v3552
        %v3681 = vsub.f32 1.0, %v3553
        %v3682 = vsub.f32 1.0, %v3554
        %v3683 = vsub.f32 1.0, %v3555
        %v3684 = vsub.f32 1.0, %v3556
        %v3685 = vsub.f32 1.0, %v3557
        %v3686 = vsub.f32 1.0, %v3558
        %v3687 = vsub.f32 1.0, %v3559
        %v3688 = vsub.f32 1.0, %v3560
        %v3689 = vsub.f32 1.0, %v3561
        %v3690 = vsub.f32 1.0, %v3562
        %v3691 = vsub.f32 1.0, %v3563
        %v3692 = vsub.f32 1.0, %v3564
        %v3693 = vsub.f32 1.0, %v3565
        %v3694 = vsub.f32 1.0, %v3566
        %v3695 = vsub.f32 1.0, %v3567
        %v3696 = vsub.f32 1.0, %v3568
        %v3697 = vsub.f32 1.0, %v3569
        %v3698 = vsub.f32 1.0, %v3570
        %v3699 = vsub.f32 1.0, %v3571
        %v3700 = vsub.f32 1.0, %v3572
        %v3701 = vsub.f32 1.0, %v3573
        %v3702 = vsub.f32 1.0, %v3574
        %v3703 = vsub.f32 1.0, %v3575
        %v3704 = vsub.f32 1.0, %v3576
        %v3705 = vsub.f32 1.0, %v3577
        %v3706 = vsub.f32 1.0, %v3578
        %v3707 = vsub.f32 1.0, %v3579
        %v3708 = vsub.f32 1.0, %v3580
        %v3709 = vsub.f32 1.0, %v3581
        %v3710 = vsub.f32 1.0, %v3582
        %v3711 = vsub.f32 1.0, %v3583
        %v3712 = vsub.f32 1.0, %v3584
        %v3713 = vsub.f32 1.0, %v3585
        %v3714 = vsub.f32 1.0, %v3586
        %v3715 = vsub.f32 1.0, %v3587
        %v3716 = vsub.f32 1.0, %v3588
        %v3717 = vsub.f32 1.0, %v3589
        %v3718 = vsub.f32 1.0, %v3590
        %v3719 = vsub.f32 1.0, %v3591
        %v3720 = vsub.f32 1.0, %v3592
        %v3721 = vsub.f32 1.0, %v3593
        %v3722 = vsub.f32 1.0, %v3594
        %v3723 = vsub.f32 1.0, %v3595
        %v3724 = vsub.f32 1.0, %v3596
        %v3725 = vsub.f32 1.0, %v3597
        %v3726 = vsub.f32 1.0, %v3598
        %v3727 = vsub.f32 1.0, %v3599
        %v3728 = vsub.f32 1.0, %v3600
        %v3729 = vsub.f32 1.0, %v3601
        %v3730 = vsub.f32 1.0, %v3602
        %v3731 = vsub.f32 1.0, %v3603
        %v3732 = vsub.f32 1.0, %v3604
        %v3733 = vsub.f32 1.0, %v3605
        %v3734 = vsub.f32 1.0, %v3606
        %v3735 = vsub.f32 1.0, %v3607
        %v3736 = vsub.f32 1.0, %v3608
        %v3737 = vsub.f32 1.0, %v3609
        %v3738 = vsub.f32 1.0, %v3610
        %v3739 = vsub.f32 1.0, %v3611
        %v3740 = vsub.f32 1.0, %v3612
        %v3741 = vsub.f32 1.0, %v3613
        %v3742 = vsub.f32 1.0, %v3614
        %v3743 = vsub.f32 1.0, %v3615
        %v3744 = vsub.f32 1.0, %v3616
        %v3745 = vsub.f32 1.0, %v3617
        %v3746 = vsub.f32 1.0, %v3618
        %v3747 = vsub.f32 1.0, %v3619
        %v3748 = vsub.f32 1.0, %v3620
        %v3749 = vsub.f32 1.0, %v3621
        %v3750 = vsub.f32 1.0, %v3622
        %v3751 = vsub.f32 1.0, %v3623
        %v3752 = vsub.f32 1.0, %v3624
        %v3753 = vsub.f32 1.0, %v3625
        %v3754 = vsub.f32 1.0, %v3626
        %v3755 = vsub.f32 1.0, %v3627
        %v3756 = vsub.f32 1.0, %v3628
        %v3757 = vsub.f32 1.0, %v3629
        %v3758 = vsub.f32 1.0, %v3630
        %v3759 = vsub.f32 1.0, %v3631
        %v3760 = vsub.f32 1.0, %v3632
        %v3761 = vsub.f32 1.0, %v3633
        %v3762 = vsub.f32 1.0, %v3634
        %v3763 = vsub.f32 1.0, %v3635
        %v3764 = vsub.f32 1.0, %v3636
        %v3765 = vsub.f32 1.0, %v3637
        %v3766 = vsub.f32 1.0, %v3638
        %v3767 = vsub.f32 1.0, %v3639
        %v3768 = vmul.f32 %v3640, 0.99
        %v3769 = vmul.f32 %v3641, 0.99
        %v3770 = vmul.f32 %v3642, 0.99
        %v3771 = vmul.f32 %v3643, 0.99
        %v3772 = vmul.f32 %v3644, 0.99
        %v3773 = vmul.f32 %v3645, 0.99
        %v3774 = vmul.f32 %v3646, 0.99
        %v3775 = vmul.f32 %v3647, 0.99
        %v3776 = vmul.f32 %v3648, 0.99
        %v3777 = vmul.f32 %v3649, 0.99
        %v3778 = vmul.f32 %v3650, 0.99
        %v3779 = vmul.f32 %v3651, 0.99
        %v3780 = vmul.f32 %v3652, 0.99
        %v3781 = vmul.f32 %v3653, 0.99
        %v3782 = vmul.f32 %v3654, 0.99
        %v3783 = vmul.f32 %v3655, 0.99
        %v3784 = vmul.f32 %v3656, 0.99
        %v3785 = vmul.f32 %v3657, 0.99
        %v3786 = vmul.f32 %v3658, 0.99
        %v3787 = vmul.f32 %v3659, 0.99
        %v3788 = vmul.f32 %v3660, 0.99
        %v3789 = vmul.f32 %v3661, 0.99
        %v3790 = vmul.f32 %v3662, 0.99
        %v3791 = vmul.f32 %v3663, 0.99
        %v3792 = vmul.f32 %v3664, 0.99
        %v3793 = vmul.f32 %v3665, 0.99
        %v3794 = vmul.f32 %v3666, 0.99
        %v3795 = vmul.f32 %v3667, 0.99
        %v3796 = vmul.f32 %v3668, 0.99
        %v3797 = vmul.f32 %v3669, 0.99
        %v3798 = vmul.f32 %v3670, 0.99
        %v3799 = vmul.f32 %v3671, 0.99
        %v3800 = vmul.f32 %v3672, 0.99
        %v3801 = vmul.f32 %v3673, 0.99
        %v3802 = vmul.f32 %v3674, 0.99
        %v3803 = vmul.f32 %v3675, 0.99
        %v3804 = vmul.f32 %v3676, 0.99
        %v3805 = vmul.f32 %v3677, 0.99
        %v3806 = vmul.f32 %v3678, 0.99
        %v3807 = vmul.f32 %v3679, 0.99
        %v3808 = vmul.f32 %v3680, 0.99
        %v3809 = vmul.f32 %v3681, 0.99
        %v3810 = vmul.f32 %v3682, 0.99
        %v3811 = vmul.f32 %v3683, 0.99
        %v3812 = vmul.f32 %v3684, 0.99
        %v3813 = vmul.f32 %v3685, 0.99
        %v3814 = vmul.f32 %v3686, 0.99
        %v3815 = vmul.f32 %v3687, 0.99
        %v3816 = vmul.f32 %v3688, 0.99
        %v3817 = vmul.f32 %v3689, 0.99
        %v3818 = vmul.f32 %v3690, 0.99
        %v3819 = vmul.f32 %v3691, 0.99
        %v3820 = vmul.f32 %v3692, 0.99
        %v3821 = vmul.f32 %v3693, 0.99
        %v3822 = vmul.f32 %v3694, 0.99
        %v3823 = vmul.f32 %v3695, 0.99
        %v3824 = vmul.f32 %v3696, 0.99
        %v3825 = vmul.f32 %v3697, 0.99
        %v3826 = vmul.f32 %v3698, 0.99
        %v3827 = vmul.f32 %v3699, 0.99
        %v3828 = vmul.f32 %v3700, 0.99
        %v3829 = vmul.f32 %v3701, 0.99
        %v3830 = vmul.f32 %v3702, 0.99
        %v3831 = vmul.f32 %v3703, 0.99
        %v3832 = vmul.f32 %v3704, 0.99
        %v3833 = vmul.f32 %v3705, 0.99
        %v3834 = vmul.f32 %v3706, 0.99
        %v3835 = vmul.f32 %v3707, 0.99
        %v3836 = vmul.f32 %v3708, 0.99
        %v3837 = vmul.f32 %v3709, 0.99
        %v3838 = vmul.f32 %v3710, 0.99
        %v3839 = vmul.f32 %v3711, 0.99
        %v3840 = vmul.f32 %v3712, 0.99
        %v3841 = vmul.f32 %v3713, 0.99
        %v3842 = vmul.f32 %v3714, 0.99
        %v3843 = vmul.f32 %v3715, 0.99
        %v3844 = vmul.f32 %v3716, 0.99
        %v3845 = vmul.f32 %v3717, 0.99
        %v3846 = vmul.f32 %v3718, 0.99
        %v3847 = vmul.f32 %v3719, 0.99
        %v3848 = vmul.f32 %v3720, 0.99
        %v3849 = vmul.f32 %v3721, 0.99
        %v3850 = vmul.f32 %v3722, 0.99
        %v3851 = vmul.f32 %v3723, 0.99
        %v3852 = vmul.f32 %v3724, 0.99
        %v3853 = vmul.f32 %v3725, 0.99
        %v3854 = vmul.f32 %v3726, 0.99
        %v3855 = vmul.f32 %v3727, 0.99
        %v3856 = vmul.f32 %v3728, 0.99
        %v3857 = vmul.f32 %v3729, 0.99
        %v3858 = vmul.f32 %v3730, 0.99
        %v3859 = vmul.f32 %v3731, 0.99
        %v3860 = vmul.f32 %v3732, 0.99
        %v3861 = vmul.f32 %v3733, 0.99
        %v3862 = vmul.f32 %v3734, 0.99
        %v3863 = vmul.f32 %v3735, 0.99
        %v3864 = vmul.f32 %v3736, 0.99
        %v3865 = vmul.f32 %v3737, 0.99
        %v3866 = vmul.f32 %v3738, 0.99
        %v3867 = vmul.f32 %v3739, 0.99
        %v3868 = vmul.f32 %v3740, 0.99
        %v3869 = vmul.f32 %v3741, 0.99
        %v3870 = vmul.f32 %v3742, 0.99
        %v3871 = vmul.f32 %v3743, 0.99
        %v3872 = vmul.f32 %v3744, 0.99
        %v3873 = vmul.f32 %v3745, 0.99
        %v3874 = vmul.f32 %v3746, 0.99
        %v3875 = vmul.f32 %v3747, 0.99
        %v3876 = vmul.f32 %v3748, 0.99
        %v3877 = vmul.f32 %v3749, 0.99
        %v3878 = vmul.f32 %v3750, 0.99
        %v3879 = vmul.f32 %v3751, 0.99
        %v3880 = vmul.f32 %v3752, 0.99
        %v3881 = vmul.f32 %v3753, 0.99
        %v3882 = vmul.f32 %v3754, 0.99
        %v3883 = vmul.f32 %v3755, 0.99
        %v3884 = vmul.f32 %v3756, 0.99
        %v3885 = vmul.f32 %v3757, 0.99
        %v3886 = vmul.f32 %v3758, 0.99
        %v3887 = vmul.f32 %v3759, 0.99
        %v3888 = vmul.f32 %v3760, 0.99
        %v3889 = vmul.f32 %v3761, 0.99
        %v3890 = vmul.f32 %v3762, 0.99
        %v3891 = vmul.f32 %v3763, 0.99
        %v3892 = vmul.f32 %v3764, 0.99
        %v3893 = vmul.f32 %v3765, 0.99
        %v3894 = vmul.f32 %v3766, 0.99
        %v3895 = vmul.f32 %v3767, 0.99
        %v3896 = vmul.f32 %v3768, %v3384
        %v3897 = vmul.f32 %v3769, %v3385
        %v3898 = vmul.f32 %v3770, %v3386
        %v3899 = vmul.f32 %v3771, %v3387
        %v3900 = vmul.f32 %v3772, %v3388
        %v3901 = vmul.f32 %v3773, %v3389
        %v3902 = vmul.f32 %v3774, %v3390
        %v3903 = vmul.f32 %v3775, %v3391
        %v3904 = vmul.f32 %v3776, %v3392
        %v3905 = vmul.f32 %v3777, %v3393
        %v3906 = vmul.f32 %v3778, %v3394
        %v3907 = vmul.f32 %v3779, %v3395
        %v3908 = vmul.f32 %v3780, %v3396
        %v3909 = vmul.f32 %v3781, %v3397
        %v3910 = vmul.f32 %v3782, %v3398
        %v3911 = vmul.f32 %v3783, %v3399
        %v3912 = vmul.f32 %v3784, %v3400
        %v3913 = vmul.f32 %v3785, %v3401
        %v3914 = vmul.f32 %v3786, %v3402
        %v3915 = vmul.f32 %v3787, %v3403
        %v3916 = vmul.f32 %v3788, %v3404
        %v3917 = vmul.f32 %v3789, %v3405
        %v3918 = vmul.f32 %v3790, %v3406
        %v3919 = vmul.f32 %v3791, %v3407
        %v3920 = vmul.f32 %v3792, %v3408
        %v3921 = vmul.f32 %v3793, %v3409
        %v3922 = vmul.f32 %v3794, %v3410
        %v3923 = vmul.f32 %v3795, %v3411
        %v3924 = vmul.f32 %v3796, %v3412
        %v3925 = vmul.f32 %v3797, %v3413
        %v3926 = vmul.f32 %v3798, %v3414
        %v3927 = vmul.f32 %v3799, %v3415
        %v3928 = vmul.f32 %v3800, %v3416
        %v3929 = vmul.f32 %v3801, %v3417
        %v3930 = vmul.f32 %v3802, %v3418
        %v3931 = vmul.f32 %v3803, %v3419
        %v3932 = vmul.f32 %v3804, %v3420
        %v3933 = vmul.f32 %v3805, %v3421
        %v3934 = vmul.f32 %v3806, %v3422
        %v3935 = vmul.f32 %v3807, %v3423
        %v3936 = vmul.f32 %v3808, %v3424
        %v3937 = vmul.f32 %v3809, %v3425
        %v3938 = vmul.f32 %v3810, %v3426
        %v3939 = vmul.f32 %v3811, %v3427
        %v3940 = vmul.f32 %v3812, %v3428
        %v3941 = vmul.f32 %v3813, %v3429
        %v3942 = vmul.f32 %v3814, %v3430
        %v3943 = vmul.f32 %v3815, %v3431
        %v3944 = vmul.f32 %v3816, %v3432
        %v3945 = vmul.f32 %v3817, %v3433
        %v3946 = vmul.f32 %v3818, %v3434
        %v3947 = vmul.f32 %v3819, %v3435
        %v3948 = vmul.f32 %v3820, %v3436
        %v3949 = vmul.f32 %v3821, %v3437
        %v3950 = vmul.f32 %v3822, %v3438
        %v3951 = vmul.f32 %v3823, %v3439
        %v3952 = vmul.f32 %v3824, %v3440
        %v3953 = vmul.f32 %v3825, %v3441
        %v3954 = vmul.f32 %v3826, %v3442
        %v3955 = vmul.f32 %v3827, %v3443
        %v3956 = vmul.f32 %v3828, %v3444
        %v3957 = vmul.f32 %v3829, %v3445
        %v3958 = vmul.f32 %v3830, %v3446
        %v3959 = vmul.f32 %v3831, %v3447
        %v3960 = vmul.f32 %v3832, %v3448
        %v3961 = vmul.f32 %v3833, %v3449
        %v3962 = vmul.f32 %v3834, %v3450
        %v3963 = vmul.f32 %v3835, %v3451
        %v3964 = vmul.f32 %v3836, %v3452
        %v3965 = vmul.f32 %v3837, %v3453
        %v3966 = vmul.f32 %v3838, %v3454
        %v3967 = vmul.f32 %v3839, %v3455
        %v3968 = vmul.f32 %v3840, %v3456
        %v3969 = vmul.f32 %v3841, %v3457
        %v3970 = vmul.f32 %v3842, %v3458
        %v3971 = vmul.f32 %v3843, %v3459
        %v3972 = vmul.f32 %v3844, %v3460
        %v3973 = vmul.f32 %v3845, %v3461
        %v3974 = vmul.f32 %v3846, %v3462
        %v3975 = vmul.f32 %v3847, %v3463
        %v3976 = vmul.f32 %v3848, %v3464
        %v3977 = vmul.f32 %v3849, %v3465
        %v3978 = vmul.f32 %v3850, %v3466
        %v3979 = vmul.f32 %v3851, %v3467
        %v3980 = vmul.f32 %v3852, %v3468
        %v3981 = vmul.f32 %v3853, %v3469
        %v3982 = vmul.f32 %v3854, %v3470
        %v3983 = vmul.f32 %v3855, %v3471
        %v3984 = vmul.f32 %v3856, %v3472
        %v3985 = vmul.f32 %v3857, %v3473
        %v3986 = vmul.f32 %v3858, %v3474
        %v3987 = vmul.f32 %v3859, %v3475
        %v3988 = vmul.f32 %v3860, %v3476
        %v3989 = vmul.f32 %v3861, %v3477
        %v3990 = vmul.f32 %v3862, %v3478
        %v3991 = vmul.f32 %v3863, %v3479
        %v3992 = vmul.f32 %v3864, %v3480
        %v3993 = vmul.f32 %v3865, %v3481
        %v3994 = vmul.f32 %v3866, %v3482
        %v3995 = vmul.f32 %v3867, %v3483
        %v3996 = vmul.f32 %v3868, %v3484
        %v3997 = vmul.f32 %v3869, %v3485
        %v3998 = vmul.f32 %v3870, %v3486
        %v3999 = vmul.f32 %v3871, %v3487
        %v4000 = vmul.f32 %v3872, %v3488
        %v4001 = vmul.f32 %v3873, %v3489
        %v4002 = vmul.f32 %v3874, %v3490
        %v4003 = vmul.f32 %v3875, %v3491
        %v4004 = vmul.f32 %v3876, %v3492
        %v4005 = vmul.f32 %v3877, %v3493
        %v4006 = vmul.f32 %v3878, %v3494
        %v4007 = vmul.f32 %v3879, %v3495
        %v4008 = vmul.f32 %v3880, %v3496
        %v4009 = vmul.f32 %v3881, %v3497
        %v4010 = vmul.f32 %v3882, %v3498
        %v4011 = vmul.f32 %v3883, %v3499
        %v4012 = vmul.f32 %v3884, %v3500
        %v4013 = vmul.f32 %v3885, %v3501
        %v4014 = vmul.f32 %v3886, %v3502
        %v4015 = vmul.f32 %v3887, %v3503
        %v4016 = vmul.f32 %v3888, %v3504
        %v4017 = vmul.f32 %v3889, %v3505
        %v4018 = vmul.f32 %v3890, %v3506
        %v4019 = vmul.f32 %v3891, %v3507
        %v4020 = vmul.f32 %v3892, %v3508
        %v4021 = vmul.f32 %v3893, %v3509
        %v4022 = vmul.f32 %v3894, %v3510
        %v4023 = vmul.f32 %v3895, %v3511
        %4152 = vrot.lane.b32.xlu0 %v3896, 127
        %v4153 = vpop.permute.xlu0 %4152
        %4154 = vrot.lane.b32.xlu0 %v3897, 127
        %v4155 = vpop.permute.xlu0 %4154
        %4156 = vrot.lane.b32.xlu0 %v3898, 127
        %v4157 = vpop.permute.xlu0 %4156
        %4158 = vrot.lane.b32.xlu0 %v3899, 127
        %v4159 = vpop.permute.xlu0 %4158
        %4160 = vrot.lane.b32.xlu0 %v3900, 127
        %v4161 = vpop.permute.xlu0 %4160
        %4162 = vrot.lane.b32.xlu0 %v3901, 127
        %v4163 = vpop.permute.xlu0 %4162
        %4164 = vrot.lane.b32.xlu0 %v3902, 127
        %v4165 = vpop.permute.xlu0 %4164
        %4166 = vrot.lane.b32.xlu0 %v3903, 127
        %v4167 = vpop.permute.xlu0 %4166
        %4168 = vrot.lane.b32.xlu0 %v3904, 127
        %v4169 = vpop.permute.xlu0 %4168
        %4170 = vrot.lane.b32.xlu0 %v3905, 127
        %v4171 = vpop.permute.xlu0 %4170
        %4172 = vrot.lane.b32.xlu0 %v3906, 127
        %v4173 = vpop.permute.xlu0 %4172
        %4174 = vrot.lane.b32.xlu0 %v3907, 127
        %v4175 = vpop.permute.xlu0 %4174
        %4176 = vrot.lane.b32.xlu0 %v3908, 127
        %v4177 = vpop.permute.xlu0 %4176
        %4178 = vrot.lane.b32.xlu0 %v3909, 127
        %v4179 = vpop.permute.xlu0 %4178
        %4180 = vrot.lane.b32.xlu0 %v3910, 127
        %v4181 = vpop.permute.xlu0 %4180
        %4182 = vrot.lane.b32.xlu0 %v3911, 127
        %v4183 = vpop.permute.xlu0 %4182
        %4184 = vrot.lane.b32.xlu0 %v3912, 127
        %v4185 = vpop.permute.xlu0 %4184
        %4186 = vrot.lane.b32.xlu0 %v3913, 127
        %v4187 = vpop.permute.xlu0 %4186
        %4188 = vrot.lane.b32.xlu0 %v3914, 127
        %v4189 = vpop.permute.xlu0 %4188
        %4190 = vrot.lane.b32.xlu0 %v3915, 127
        %v4191 = vpop.permute.xlu0 %4190
        %4192 = vrot.lane.b32.xlu0 %v3916, 127
        %v4193 = vpop.permute.xlu0 %4192
        %4194 = vrot.lane.b32.xlu0 %v3917, 127
        %v4195 = vpop.permute.xlu0 %4194
        %4196 = vrot.lane.b32.xlu0 %v3918, 127
        %v4197 = vpop.permute.xlu0 %4196
        %4198 = vrot.lane.b32.xlu0 %v3919, 127
        %v4199 = vpop.permute.xlu0 %4198
        %4200 = vrot.lane.b32.xlu0 %v3920, 127
        %v4201 = vpop.permute.xlu0 %4200
        %4202 = vrot.lane.b32.xlu0 %v3921, 127
        %v4203 = vpop.permute.xlu0 %4202
        %4204 = vrot.lane.b32.xlu0 %v3922, 127
        %v4205 = vpop.permute.xlu0 %4204
        %4206 = vrot.lane.b32.xlu0 %v3923, 127
        %v4207 = vpop.permute.xlu0 %4206
        %4208 = vrot.lane.b32.xlu0 %v3924, 127
        %v4209 = vpop.permute.xlu0 %4208
        %4210 = vrot.lane.b32.xlu0 %v3925, 127
        %v4211 = vpop.permute.xlu0 %4210
        %4212 = vrot.lane.b32.xlu0 %v3926, 127
        %v4213 = vpop.permute.xlu0 %4212
        %4214 = vrot.lane.b32.xlu0 %v3927, 127
        %v4215 = vpop.permute.xlu0 %4214
        %4216 = vrot.lane.b32.xlu0 %v3928, 127
        %v4217 = vpop.permute.xlu0 %4216
        %4218 = vrot.lane.b32.xlu0 %v3929, 127
        %v4219 = vpop.permute.xlu0 %4218
        %4220 = vrot.lane.b32.xlu0 %v3930, 127
        %v4221 = vpop.permute.xlu0 %4220
        %4222 = vrot.lane.b32.xlu0 %v3931, 127
        %v4223 = vpop.permute.xlu0 %4222
        %4224 = vrot.lane.b32.xlu0 %v3932, 127
        %v4225 = vpop.permute.xlu0 %4224
        %4226 = vrot.lane.b32.xlu0 %v3933, 127
        %v4227 = vpop.permute.xlu0 %4226
        %4228 = vrot.lane.b32.xlu0 %v3934, 127
        %v4229 = vpop.permute.xlu0 %4228
        %4230 = vrot.lane.b32.xlu0 %v3935, 127
        %v4231 = vpop.permute.xlu0 %4230
        %4232 = vrot.lane.b32.xlu0 %v3936, 127
        %v4233 = vpop.permute.xlu0 %4232
        %4234 = vrot.lane.b32.xlu0 %v3937, 127
        %v4235 = vpop.permute.xlu0 %4234
        %4236 = vrot.lane.b32.xlu0 %v3938, 127
        %v4237 = vpop.permute.xlu0 %4236
        %4238 = vrot.lane.b32.xlu0 %v3939, 127
        %v4239 = vpop.permute.xlu0 %4238
        %4240 = vrot.lane.b32.xlu0 %v3940, 127
        %v4241 = vpop.permute.xlu0 %4240
        %4242 = vrot.lane.b32.xlu0 %v3941, 127
        %v4243 = vpop.permute.xlu0 %4242
        %4244 = vrot.lane.b32.xlu0 %v3942, 127
        %v4245 = vpop.permute.xlu0 %4244
        %4246 = vrot.lane.b32.xlu0 %v3943, 127
        %v4247 = vpop.permute.xlu0 %4246
        %4248 = vrot.lane.b32.xlu0 %v3944, 127
        %v4249 = vpop.permute.xlu0 %4248
        %4250 = vrot.lane.b32.xlu0 %v3945, 127
        %v4251 = vpop.permute.xlu0 %4250
        %4252 = vrot.lane.b32.xlu0 %v3946, 127
        %v4253 = vpop.permute.xlu0 %4252
        %4254 = vrot.lane.b32.xlu0 %v3947, 127
        %v4255 = vpop.permute.xlu0 %4254
        %4256 = vrot.lane.b32.xlu0 %v3948, 127
        %v4257 = vpop.permute.xlu0 %4256
        %4258 = vrot.lane.b32.xlu0 %v3949, 127
        %v4259 = vpop.permute.xlu0 %4258
        %4260 = vrot.lane.b32.xlu0 %v3950, 127
        %v4261 = vpop.permute.xlu0 %4260
        %4262 = vrot.lane.b32.xlu0 %v3951, 127
        %v4263 = vpop.permute.xlu0 %4262
        %4264 = vrot.lane.b32.xlu0 %v3952, 127
        %v4265 = vpop.permute.xlu0 %4264
        %4266 = vrot.lane.b32.xlu0 %v3953, 127
        %v4267 = vpop.permute.xlu0 %4266
        %4268 = vrot.lane.b32.xlu0 %v3954, 127
        %v4269 = vpop.permute.xlu0 %4268
        %4270 = vrot.lane.b32.xlu0 %v3955, 127
        %v4271 = vpop.permute.xlu0 %4270
        %4272 = vrot.lane.b32.xlu0 %v3956, 127
        %v4273 = vpop.permute.xlu0 %4272
        %4274 = vrot.lane.b32.xlu0 %v3957, 127
        %v4275 = vpop.permute.xlu0 %4274
        %4276 = vrot.lane.b32.xlu0 %v3958, 127
        %v4277 = vpop.permute.xlu0 %4276
        %4278 = vrot.lane.b32.xlu0 %v3959, 127
        %v4279 = vpop.permute.xlu0 %4278
        %4280 = vrot.lane.b32.xlu0 %v3960, 127
        %v4281 = vpop.permute.xlu0 %4280
        %4282 = vrot.lane.b32.xlu0 %v3961, 127
        %v4283 = vpop.permute.xlu0 %4282
        %4284 = vrot.lane.b32.xlu0 %v3962, 127
        %v4285 = vpop.permute.xlu0 %4284
        %4286 = vrot.lane.b32.xlu0 %v3963, 127
        %v4287 = vpop.permute.xlu0 %4286
        %4288 = vrot.lane.b32.xlu0 %v3964, 127
        %v4289 = vpop.permute.xlu0 %4288
        %4290 = vrot.lane.b32.xlu0 %v3965, 127
        %v4291 = vpop.permute.xlu0 %4290
        %4292 = vrot.lane.b32.xlu0 %v3966, 127
        %v4293 = vpop.permute.xlu0 %4292
        %4294 = vrot.lane.b32.xlu0 %v3967, 127
        %v4295 = vpop.permute.xlu0 %4294
        %4296 = vrot.lane.b32.xlu0 %v3968, 127
        %v4297 = vpop.permute.xlu0 %4296
        %4298 = vrot.lane.b32.xlu0 %v3969, 127
        %v4299 = vpop.permute.xlu0 %4298
        %4300 = vrot.lane.b32.xlu0 %v3970, 127
        %v4301 = vpop.permute.xlu0 %4300
        %4302 = vrot.lane.b32.xlu0 %v3971, 127
        %v4303 = vpop.permute.xlu0 %4302
        %4304 = vrot.lane.b32.xlu0 %v3972, 127
        %v4305 = vpop.permute.xlu0 %4304
        %4306 = vrot.lane.b32.xlu0 %v3973, 127
        %v4307 = vpop.permute.xlu0 %4306
        %4308 = vrot.lane.b32.xlu0 %v3974, 127
        %v4309 = vpop.permute.xlu0 %4308
        %4310 = vrot.lane.b32.xlu0 %v3975, 127
        %v4311 = vpop.permute.xlu0 %4310
        %4312 = vrot.lane.b32.xlu0 %v3976, 127
        %v4313 = vpop.permute.xlu0 %4312
        %4314 = vrot.lane.b32.xlu0 %v3977, 127
        %v4315 = vpop.permute.xlu0 %4314
        %4316 = vrot.lane.b32.xlu0 %v3978, 127
        %v4317 = vpop.permute.xlu0 %4316
        %4318 = vrot.lane.b32.xlu0 %v3979, 127
        %v4319 = vpop.permute.xlu0 %4318
        %4320 = vrot.lane.b32.xlu0 %v3980, 127
        %v4321 = vpop.permute.xlu0 %4320
        %4322 = vrot.lane.b32.xlu0 %v3981, 127
        %v4323 = vpop.permute.xlu0 %4322
        %4324 = vrot.lane.b32.xlu0 %v3982, 127
        %v4325 = vpop.permute.xlu0 %4324
        %4326 = vrot.lane.b32.xlu0 %v3983, 127
        %v4327 = vpop.permute.xlu0 %4326
        %4328 = vrot.lane.b32.xlu0 %v3984, 127
        %v4329 = vpop.permute.xlu0 %4328
        %4330 = vrot.lane.b32.xlu0 %v3985, 127
        %v4331 = vpop.permute.xlu0 %4330
        %4332 = vrot.lane.b32.xlu0 %v3986, 127
        %v4333 = vpop.permute.xlu0 %4332
        %4334 = vrot.lane.b32.xlu0 %v3987, 127
        %v4335 = vpop.permute.xlu0 %4334
        %4336 = vrot.lane.b32.xlu0 %v3988, 127
        %v4337 = vpop.permute.xlu0 %4336
        %4338 = vrot.lane.b32.xlu0 %v3989, 127
        %v4339 = vpop.permute.xlu0 %4338
        %4340 = vrot.lane.b32.xlu0 %v3990, 127
        %v4341 = vpop.permute.xlu0 %4340
        %4342 = vrot.lane.b32.xlu0 %v3991, 127
        %v4343 = vpop.permute.xlu0 %4342
        %4344 = vrot.lane.b32.xlu0 %v3992, 127
        %v4345 = vpop.permute.xlu0 %4344
        %4346 = vrot.lane.b32.xlu0 %v3993, 127
        %v4347 = vpop.permute.xlu0 %4346
        %4348 = vrot.lane.b32.xlu0 %v3994, 127
        %v4349 = vpop.permute.xlu0 %4348
        %4350 = vrot.lane.b32.xlu0 %v3995, 127
        %v4351 = vpop.permute.xlu0 %4350
        %4352 = vrot.lane.b32.xlu0 %v3996, 127
        %v4353 = vpop.permute.xlu0 %4352
        %4354 = vrot.lane.b32.xlu0 %v3997, 127
        %v4355 = vpop.permute.xlu0 %4354
        %4356 = vrot.lane.b32.xlu0 %v3998, 127
        %v4357 = vpop.permute.xlu0 %4356
        %4358 = vrot.lane.b32.xlu0 %v3999, 127
        %v4359 = vpop.permute.xlu0 %4358
        %4360 = vrot.lane.b32.xlu0 %v4000, 127
        %v4361 = vpop.permute.xlu0 %4360
        %4362 = vrot.lane.b32.xlu0 %v4001, 127
        %v4363 = vpop.permute.xlu0 %4362
        %4364 = vrot.lane.b32.xlu0 %v4002, 127
        %v4365 = vpop.permute.xlu0 %4364
        %4366 = vrot.lane.b32.xlu0 %v4003, 127
        %v4367 = vpop.permute.xlu0 %4366
        %4368 = vrot.lane.b32.xlu0 %v4004, 127
        %v4369 = vpop.permute.xlu0 %4368
        %4370 = vrot.lane.b32.xlu0 %v4005, 127
        %v4371 = vpop.permute.xlu0 %4370
        %4372 = vrot.lane.b32.xlu0 %v4006, 127
        %v4373 = vpop.permute.xlu0 %4372
        %4374 = vrot.lane.b32.xlu0 %v4007, 127
        %v4375 = vpop.permute.xlu0 %4374
        %4376 = vrot.lane.b32.xlu0 %v4008, 127
        %v4377 = vpop.permute.xlu0 %4376
        %4378 = vrot.lane.b32.xlu0 %v4009, 127
        %v4379 = vpop.permute.xlu0 %4378
        %4380 = vrot.lane.b32.xlu0 %v4010, 127
        %v4381 = vpop.permute.xlu0 %4380
        %4382 = vrot.lane.b32.xlu0 %v4011, 127
        %v4383 = vpop.permute.xlu0 %4382
        %4384 = vrot.lane.b32.xlu0 %v4012, 127
        %v4385 = vpop.permute.xlu0 %4384
        %4386 = vrot.lane.b32.xlu0 %v4013, 127
        %v4387 = vpop.permute.xlu0 %4386
        %4388 = vrot.lane.b32.xlu0 %v4014, 127
        %v4389 = vpop.permute.xlu0 %4388
        %4390 = vrot.lane.b32.xlu0 %v4015, 127
        %v4391 = vpop.permute.xlu0 %4390
        %4392 = vrot.lane.b32.xlu0 %v4016, 127
        %v4393 = vpop.permute.xlu0 %4392
        %4394 = vrot.lane.b32.xlu0 %v4017, 127
        %v4395 = vpop.permute.xlu0 %4394
        %4396 = vrot.lane.b32.xlu0 %v4018, 127
        %v4397 = vpop.permute.xlu0 %4396
        %4398 = vrot.lane.b32.xlu0 %v4019, 127
        %v4399 = vpop.permute.xlu0 %4398
        %4400 = vrot.lane.b32.xlu0 %v4020, 127
        %v4401 = vpop.permute.xlu0 %4400
        %4402 = vrot.lane.b32.xlu0 %v4021, 127
        %v4403 = vpop.permute.xlu0 %4402
        %4404 = vrot.lane.b32.xlu0 %v4022, 127
        %v4405 = vpop.permute.xlu0 %4404
        %4406 = vrot.lane.b32.xlu0 %v4023, 127
        %v4407 = vpop.permute.xlu0 %4406
        %v4536 = vadd.f32 %v3512, %v4153
        %v4537 = vadd.f32 %v3513, %v4155
        %v4538 = vadd.f32 %v3514, %v4157
        %v4539 = vadd.f32 %v3515, %v4159
        %v4540 = vadd.f32 %v3516, %v4161
        %v4541 = vadd.f32 %v3517, %v4163
        %v4542 = vadd.f32 %v3518, %v4165
        %v4543 = vadd.f32 %v3519, %v4167
        %v4544 = vadd.f32 %v3520, %v4169
        %v4545 = vadd.f32 %v3521, %v4171
        %v4546 = vadd.f32 %v3522, %v4173
        %v4547 = vadd.f32 %v3523, %v4175
        %v4548 = vadd.f32 %v3524, %v4177
        %v4549 = vadd.f32 %v3525, %v4179
        %v4550 = vadd.f32 %v3526, %v4181
        %v4551 = vadd.f32 %v3527, %v4183
        %v4552 = vadd.f32 %v3528, %v4185
        %v4553 = vadd.f32 %v3529, %v4187
        %v4554 = vadd.f32 %v3530, %v4189
        %v4555 = vadd.f32 %v3531, %v4191
        %v4556 = vadd.f32 %v3532, %v4193
        %v4557 = vadd.f32 %v3533, %v4195
        %v4558 = vadd.f32 %v3534, %v4197
        %v4559 = vadd.f32 %v3535, %v4199
        %v4560 = vadd.f32 %v3536, %v4201
        %v4561 = vadd.f32 %v3537, %v4203
        %v4562 = vadd.f32 %v3538, %v4205
        %v4563 = vadd.f32 %v3539, %v4207
        %v4564 = vadd.f32 %v3540, %v4209
        %v4565 = vadd.f32 %v3541, %v4211
        %v4566 = vadd.f32 %v3542, %v4213
        %v4567 = vadd.f32 %v3543, %v4215
        %v4568 = vadd.f32 %v3544, %v4217
        %v4569 = vadd.f32 %v3545, %v4219
        %v4570 = vadd.f32 %v3546, %v4221
        %v4571 = vadd.f32 %v3547, %v4223
        %v4572 = vadd.f32 %v3548, %v4225
        %v4573 = vadd.f32 %v3549, %v4227
        %v4574 = vadd.f32 %v3550, %v4229
        %v4575 = vadd.f32 %v3551, %v4231
        %v4576 = vadd.f32 %v3552, %v4233
        %v4577 = vadd.f32 %v3553, %v4235
        %v4578 = vadd.f32 %v3554, %v4237
        %v4579 = vadd.f32 %v3555, %v4239
        %v4580 = vadd.f32 %v3556, %v4241
        %v4581 = vadd.f32 %v3557, %v4243
        %v4582 = vadd.f32 %v3558, %v4245
        %v4583 = vadd.f32 %v3559, %v4247
        %v4584 = vadd.f32 %v3560, %v4249
        %v4585 = vadd.f32 %v3561, %v4251
        %v4586 = vadd.f32 %v3562, %v4253
        %v4587 = vadd.f32 %v3563, %v4255
        %v4588 = vadd.f32 %v3564, %v4257
        %v4589 = vadd.f32 %v3565, %v4259
        %v4590 = vadd.f32 %v3566, %v4261
        %v4591 = vadd.f32 %v3567, %v4263
        %v4592 = vadd.f32 %v3568, %v4265
        %v4593 = vadd.f32 %v3569, %v4267
        %v4594 = vadd.f32 %v3570, %v4269
        %v4595 = vadd.f32 %v3571, %v4271
        %v4596 = vadd.f32 %v3572, %v4273
        %v4597 = vadd.f32 %v3573, %v4275
        %v4598 = vadd.f32 %v3574, %v4277
        %v4599 = vadd.f32 %v3575, %v4279
        %v4600 = vadd.f32 %v3576, %v4281
        %v4601 = vadd.f32 %v3577, %v4283
        %v4602 = vadd.f32 %v3578, %v4285
        %v4603 = vadd.f32 %v3579, %v4287
        %v4604 = vadd.f32 %v3580, %v4289
        %v4605 = vadd.f32 %v3581, %v4291
        %v4606 = vadd.f32 %v3582, %v4293
        %v4607 = vadd.f32 %v3583, %v4295
        %v4608 = vadd.f32 %v3584, %v4297
        %v4609 = vadd.f32 %v3585, %v4299
        %v4610 = vadd.f32 %v3586, %v4301
        %v4611 = vadd.f32 %v3587, %v4303
        %v4612 = vadd.f32 %v3588, %v4305
        %v4613 = vadd.f32 %v3589, %v4307
        %v4614 = vadd.f32 %v3590, %v4309
        %v4615 = vadd.f32 %v3591, %v4311
        %v4616 = vadd.f32 %v3592, %v4313
        %v4617 = vadd.f32 %v3593, %v4315
        %v4618 = vadd.f32 %v3594, %v4317
        %v4619 = vadd.f32 %v3595, %v4319
        %v4620 = vadd.f32 %v3596, %v4321
        %v4621 = vadd.f32 %v3597, %v4323
        %v4622 = vadd.f32 %v3598, %v4325
        %v4623 = vadd.f32 %v3599, %v4327
        %v4624 = vadd.f32 %v3600, %v4329
        %v4625 = vadd.f32 %v3601, %v4331
        %v4626 = vadd.f32 %v3602, %v4333
        %v4627 = vadd.f32 %v3603, %v4335
        %v4628 = vadd.f32 %v3604, %v4337
        %v4629 = vadd.f32 %v3605, %v4339
        %v4630 = vadd.f32 %v3606, %v4341
        %v4631 = vadd.f32 %v3607, %v4343
        %v4632 = vadd.f32 %v3608, %v4345
        %v4633 = vadd.f32 %v3609, %v4347
        %v4634 = vadd.f32 %v3610, %v4349
        %v4635 = vadd.f32 %v3611, %v4351
        %v4636 = vadd.f32 %v3612, %v4353
        %v4637 = vadd.f32 %v3613, %v4355
        %v4638 = vadd.f32 %v3614, %v4357
        %v4639 = vadd.f32 %v3615, %v4359
        %v4640 = vadd.f32 %v3616, %v4361
        %v4641 = vadd.f32 %v3617, %v4363
        %v4642 = vadd.f32 %v3618, %v4365
        %v4643 = vadd.f32 %v3619, %v4367
        %v4644 = vadd.f32 %v3620, %v4369
        %v4645 = vadd.f32 %v3621, %v4371
        %v4646 = vadd.f32 %v3622, %v4373
        %v4647 = vadd.f32 %v3623, %v4375
        %v4648 = vadd.f32 %v3624, %v4377
        %v4649 = vadd.f32 %v3625, %v4379
        %v4650 = vadd.f32 %v3626, %v4381
        %v4651 = vadd.f32 %v3627, %v4383
        %v4652 = vadd.f32 %v3628, %v4385
        %v4653 = vadd.f32 %v3629, %v4387
        %v4654 = vadd.f32 %v3630, %v4389
        %v4655 = vadd.f32 %v3631, %v4391
        %v4656 = vadd.f32 %v3632, %v4393
        %v4657 = vadd.f32 %v3633, %v4395
        %v4658 = vadd.f32 %v3634, %v4397
        %v4659 = vadd.f32 %v3635, %v4399
        %v4660 = vadd.f32 %v3636, %v4401
        %v4661 = vadd.f32 %v3637, %v4403
        %v4662 = vadd.f32 %v3638, %v4405
        %v4663 = vadd.f32 %v3639, %v4407
        %v4664 = vsub.f32 %v2738, %v4536
        %v4665 = vsub.f32 %v2739, %v4537
        %v4666 = vsub.f32 %v2740, %v4538
        %v4667 = vsub.f32 %v2741, %v4539
        %v4668 = vsub.f32 %v2742, %v4540
        %v4669 = vsub.f32 %v2743, %v4541
        %v4670 = vsub.f32 %v2744, %v4542
        %v4671 = vsub.f32 %v2745, %v4543
        %v4672 = vsub.f32 %v2746, %v4544
        %v4673 = vsub.f32 %v2747, %v4545
        %v4674 = vsub.f32 %v2748, %v4546
        %v4675 = vsub.f32 %v2749, %v4547
        %v4676 = vsub.f32 %v2750, %v4548
        %v4677 = vsub.f32 %v2751, %v4549
        %v4678 = vsub.f32 %v2752, %v4550
        %v4679 = vsub.f32 %v2753, %v4551
        %v4680 = vsub.f32 %v2754, %v4552
        %v4681 = vsub.f32 %v2755, %v4553
        %v4682 = vsub.f32 %v2756, %v4554
        %v4683 = vsub.f32 %v2757, %v4555
        %v4684 = vsub.f32 %v2758, %v4556
        %v4685 = vsub.f32 %v2759, %v4557
        %v4686 = vsub.f32 %v2760, %v4558
        %v4687 = vsub.f32 %v2761, %v4559
        %v4688 = vsub.f32 %v2762, %v4560
        %v4689 = vsub.f32 %v2763, %v4561
        %v4690 = vsub.f32 %v2764, %v4562
        %v4691 = vsub.f32 %v2765, %v4563
        %v4692 = vsub.f32 %v2766, %v4564
        %v4693 = vsub.f32 %v2767, %v4565
        %v4694 = vsub.f32 %v2768, %v4566
        %v4695 = vsub.f32 %v2769, %v4567
        %v4696 = vsub.f32 %v2770, %v4568
        %v4697 = vsub.f32 %v2771, %v4569
        %v4698 = vsub.f32 %v2772, %v4570
        %v4699 = vsub.f32 %v2773, %v4571
        %v4700 = vsub.f32 %v2774, %v4572
        %v4701 = vsub.f32 %v2775, %v4573
        %v4702 = vsub.f32 %v2776, %v4574
        %v4703 = vsub.f32 %v2777, %v4575
        %v4704 = vsub.f32 %v2778, %v4576
        %v4705 = vsub.f32 %v2779, %v4577
        %v4706 = vsub.f32 %v2780, %v4578
        %v4707 = vsub.f32 %v2781, %v4579
        %v4708 = vsub.f32 %v2782, %v4580
        %v4709 = vsub.f32 %v2783, %v4581
        %v4710 = vsub.f32 %v2784, %v4582
        %v4711 = vsub.f32 %v2785, %v4583
        %v4712 = vsub.f32 %v2786, %v4584
        %v4713 = vsub.f32 %v2787, %v4585
        %v4714 = vsub.f32 %v2788, %v4586
        %v4715 = vsub.f32 %v2789, %v4587
        %v4716 = vsub.f32 %v2790, %v4588
        %v4717 = vsub.f32 %v2791, %v4589
        %v4718 = vsub.f32 %v2792, %v4590
        %v4719 = vsub.f32 %v2793, %v4591
        %v4720 = vsub.f32 %v2794, %v4592
        %v4721 = vsub.f32 %v2795, %v4593
        %v4722 = vsub.f32 %v2796, %v4594
        %v4723 = vsub.f32 %v2797, %v4595
        %v4724 = vsub.f32 %v2798, %v4596
        %v4725 = vsub.f32 %v2799, %v4597
        %v4726 = vsub.f32 %v2800, %v4598
        %v4727 = vsub.f32 %v2801, %v4599
        %v4728 = vsub.f32 %v2802, %v4600
        %v4729 = vsub.f32 %v2803, %v4601
        %v4730 = vsub.f32 %v2804, %v4602
        %v4731 = vsub.f32 %v2805, %v4603
        %v4732 = vsub.f32 %v2806, %v4604
        %v4733 = vsub.f32 %v2807, %v4605
        %v4734 = vsub.f32 %v2808, %v4606
        %v4735 = vsub.f32 %v2809, %v4607
        %v4736 = vsub.f32 %v2810, %v4608
        %v4737 = vsub.f32 %v2811, %v4609
        %v4738 = vsub.f32 %v2812, %v4610
        %v4739 = vsub.f32 %v2813, %v4611
        %v4740 = vsub.f32 %v2814, %v4612
        %v4741 = vsub.f32 %v2815, %v4613
        %v4742 = vsub.f32 %v2816, %v4614
        %v4743 = vsub.f32 %v2817, %v4615
        %v4744 = vsub.f32 %v2818, %v4616
        %v4745 = vsub.f32 %v2819, %v4617
        %v4746 = vsub.f32 %v2820, %v4618
        %v4747 = vsub.f32 %v2821, %v4619
        %v4748 = vsub.f32 %v2822, %v4620
        %v4749 = vsub.f32 %v2823, %v4621
        %v4750 = vsub.f32 %v2824, %v4622
        %v4751 = vsub.f32 %v2825, %v4623
        %v4752 = vsub.f32 %v2826, %v4624
        %v4753 = vsub.f32 %v2827, %v4625
        %v4754 = vsub.f32 %v2828, %v4626
        %v4755 = vsub.f32 %v2829, %v4627
        %v4756 = vsub.f32 %v2830, %v4628
        %v4757 = vsub.f32 %v2831, %v4629
        %v4758 = vsub.f32 %v2832, %v4630
        %v4759 = vsub.f32 %v2833, %v4631
        %v4760 = vsub.f32 %v2834, %v4632
        %v4761 = vsub.f32 %v2835, %v4633
        %v4762 = vsub.f32 %v2836, %v4634
        %v4763 = vsub.f32 %v2837, %v4635
        %v4764 = vsub.f32 %v2838, %v4636
        %v4765 = vsub.f32 %v2839, %v4637
        %v4766 = vsub.f32 %v2840, %v4638
        %v4767 = vsub.f32 %v2841, %v4639
        %v4768 = vsub.f32 %v2842, %v4640
        %v4769 = vsub.f32 %v2843, %v4641
        %v4770 = vsub.f32 %v2844, %v4642
        %v4771 = vsub.f32 %v2845, %v4643
        %v4772 = vsub.f32 %v2846, %v4644
        %v4773 = vsub.f32 %v2847, %v4645
        %v4774 = vsub.f32 %v2848, %v4646
        %v4775 = vsub.f32 %v2849, %v4647
        %v4776 = vsub.f32 %v2850, %v4648
        %v4777 = vsub.f32 %v2851, %v4649
        %v4778 = vsub.f32 %v2852, %v4650
        %v4779 = vsub.f32 %v2853, %v4651
        %v4780 = vsub.f32 %v2854, %v4652
        %v4781 = vsub.f32 %v2855, %v4653
        %v4782 = vsub.f32 %v2856, %v4654
        %v4783 = vsub.f32 %v2857, %v4655
        %v4784 = vsub.f32 %v2858, %v4656
        %v4785 = vsub.f32 %v2859, %v4657
        %v4786 = vsub.f32 %v2860, %v4658
        %v4787 = vsub.f32 %v2861, %v4659
        %v4788 = vsub.f32 %v2862, %v4660
        %v4789 = vsub.f32 %v2863, %v4661
        %v4790 = vsub.f32 %v2864, %v4662
        %v4791 = vsub.f32 %v2865, %v4663
        %v4792 = vlaneseq
        %v4793 = vshrl.u32 %v4792, 7
        %v4794 = vadd.s32 %v4793, 8
        %v4795 = vadd.s32 %v4793, 16
        %v4796 = vadd.s32 %v4793, 24
        %v4797 = vadd.s32 %v4793, 32
        %v4798 = vadd.s32 %v4793, 40
        %v4799 = vadd.s32 %v4793, 48
        %v4800 = vadd.s32 %v4793, 56
        %v4801 = vadd.s32 %v4793, 64
        %v4802 = vadd.s32 %v4793, 72
        %v4803 = vadd.s32 %v4793, 80
        %v4804 = vadd.s32 %v4793, 88
        %v4805 = vadd.s32 %v4793, 96
        %v4806 = vadd.s32 %v4793, 104
        %v4807 = vadd.s32 %v4793, 112
        %v4808 = vadd.s32 %v4793, 120
        %v4809 = vadd.s32 %v4793, 128
        %v4810 = vadd.s32 %v4793, 136
        %v4811 = vadd.s32 %v4793, 144
        %v4812 = vadd.s32 %v4793, 152
        %v4813 = vadd.s32 %v4793, 160
        %v4814 = vadd.s32 %v4793, 168
        %v4815 = vadd.s32 %v4793, 176
        %v4816 = vadd.s32 %v4793, 184
        %v4817 = vadd.s32 %v4793, 192
        %v4818 = vadd.s32 %v4793, 200
        %v4819 = vadd.s32 %v4793, 208
        %v4820 = vadd.s32 %v4793, 216
        %v4821 = vadd.s32 %v4793, 224
        %v4822 = vadd.s32 %v4793, 232
        %v4823 = vadd.s32 %v4793, 240
        %v4824 = vadd.s32 %v4793, 248
        %v4825 = vadd.s32 %v4793, 256
        %v4826 = vadd.s32 %v4793, 264
        %v4827 = vadd.s32 %v4793, 272
        %v4828 = vadd.s32 %v4793, 280
        %v4829 = vadd.s32 %v4793, 288
        %v4830 = vadd.s32 %v4793, 296
        %v4831 = vadd.s32 %v4793, 304
        %v4832 = vadd.s32 %v4793, 312
        %v4833 = vadd.s32 %v4793, 320
        %v4834 = vadd.s32 %v4793, 328
        %v4835 = vadd.s32 %v4793, 336
        %v4836 = vadd.s32 %v4793, 344
        %v4837 = vadd.s32 %v4793, 352
        %v4838 = vadd.s32 %v4793, 360
        %v4839 = vadd.s32 %v4793, 368
        %v4840 = vadd.s32 %v4793, 376
        %v4841 = vadd.s32 %v4793, 384
        %v4842 = vadd.s32 %v4793, 392
        %v4843 = vadd.s32 %v4793, 400
        %v4844 = vadd.s32 %v4793, 408
        %v4845 = vadd.s32 %v4793, 416
        %v4846 = vadd.s32 %v4793, 424
        %v4847 = vadd.s32 %v4793, 432
        %v4848 = vadd.s32 %v4793, 440
        %v4849 = vadd.s32 %v4793, 448
        %v4850 = vadd.s32 %v4793, 456
        %v4851 = vadd.s32 %v4793, 464
        %v4852 = vadd.s32 %v4793, 472
        %v4853 = vadd.s32 %v4793, 480
        %v4854 = vadd.s32 %v4793, 488
        %v4855 = vadd.s32 %v4793, 496
        %v4856 = vadd.s32 %v4793, 504
        %v4857 = vadd.s32 %v4793, 512
        %v4858 = vadd.s32 %v4793, 520
        %v4859 = vadd.s32 %v4793, 528
        %v4860 = vadd.s32 %v4793, 536
        %v4861 = vadd.s32 %v4793, 544
        %v4862 = vadd.s32 %v4793, 552
        %v4863 = vadd.s32 %v4793, 560
        %v4864 = vadd.s32 %v4793, 568
        %v4865 = vadd.s32 %v4793, 576
        %v4866 = vadd.s32 %v4793, 584
        %v4867 = vadd.s32 %v4793, 592
        %v4868 = vadd.s32 %v4793, 600
        %v4869 = vadd.s32 %v4793, 608
        %v4870 = vadd.s32 %v4793, 616
        %v4871 = vadd.s32 %v4793, 624
        %v4872 = vadd.s32 %v4793, 632
        %v4873 = vadd.s32 %v4793, 640
        %v4874 = vadd.s32 %v4793, 648
        %v4875 = vadd.s32 %v4793, 656
        %v4876 = vadd.s32 %v4793, 664
        %v4877 = vadd.s32 %v4793, 672
        %v4878 = vadd.s32 %v4793, 680
        %v4879 = vadd.s32 %v4793, 688
        %v4880 = vadd.s32 %v4793, 696
        %v4881 = vadd.s32 %v4793, 704
        %v4882 = vadd.s32 %v4793, 712
        %v4883 = vadd.s32 %v4793, 720
        %v4884 = vadd.s32 %v4793, 728
        %v4885 = vadd.s32 %v4793, 736
        %v4886 = vadd.s32 %v4793, 744
        %v4887 = vadd.s32 %v4793, 752
        %v4888 = vadd.s32 %v4793, 760
        %v4889 = vadd.s32 %v4793, 768
        %v4890 = vadd.s32 %v4793, 776
        %v4891 = vadd.s32 %v4793, 784
        %v4892 = vadd.s32 %v4793, 792
        %v4893 = vadd.s32 %v4793, 800
        %v4894 = vadd.s32 %v4793, 808
        %v4895 = vadd.s32 %v4793, 816
        %v4896 = vadd.s32 %v4793, 824
        %v4897 = vadd.s32 %v4793, 832
        %v4898 = vadd.s32 %v4793, 840
        %v4899 = vadd.s32 %v4793, 848
        %v4900 = vadd.s32 %v4793, 856
        %v4901 = vadd.s32 %v4793, 864
        %v4902 = vadd.s32 %v4793, 872
        %v4903 = vadd.s32 %v4793, 880
        %v4904 = vadd.s32 %v4793, 888
        %v4905 = vadd.s32 %v4793, 896
        %v4906 = vadd.s32 %v4793, 904
        %v4907 = vadd.s32 %v4793, 912
        %v4908 = vadd.s32 %v4793, 920
        %v4909 = vadd.s32 %v4793, 928
        %v4910 = vadd.s32 %v4793, 936
        %v4911 = vadd.s32 %v4793, 944
        %v4912 = vadd.s32 %v4793, 952
        %v4913 = vadd.s32 %v4793, 960
        %v4914 = vadd.s32 %v4793, 968
        %v4915 = vadd.s32 %v4793, 976
        %v4916 = vadd.s32 %v4793, 984
        %v4917 = vadd.s32 %v4793, 992
        %v4918 = vadd.s32 %v4793, 1000
        %v4919 = vadd.s32 %v4793, 1008
        %v4920 = vadd.s32 %v4793, 1016
        %s4921 = sadd.s32 %s26, %s27
        %s4922 = smul.u32 %s4921, 1024
        %v4923 = vstv %s4922
        %v4924 = vadd.s32 %v4793, %v4923
        %v4925 = vadd.s32 %v4794, %v4923
        %v4926 = vadd.s32 %v4795, %v4923
        %v4927 = vadd.s32 %v4796, %v4923
        %v4928 = vadd.s32 %v4797, %v4923
        %v4929 = vadd.s32 %v4798, %v4923
        %v4930 = vadd.s32 %v4799, %v4923
        %v4931 = vadd.s32 %v4800, %v4923
        %v4932 = vadd.s32 %v4801, %v4923
        %v4933 = vadd.s32 %v4802, %v4923
        %v4934 = vadd.s32 %v4803, %v4923
        %v4935 = vadd.s32 %v4804, %v4923
        %v4936 = vadd.s32 %v4805, %v4923
        %v4937 = vadd.s32 %v4806, %v4923
        %v4938 = vadd.s32 %v4807, %v4923
        %v4939 = vadd.s32 %v4808, %v4923
        %v4940 = vadd.s32 %v4809, %v4923
        %v4941 = vadd.s32 %v4810, %v4923
        %v4942 = vadd.s32 %v4811, %v4923
        %v4943 = vadd.s32 %v4812, %v4923
        %v4944 = vadd.s32 %v4813, %v4923
        %v4945 = vadd.s32 %v4814, %v4923
        %v4946 = vadd.s32 %v4815, %v4923
        %v4947 = vadd.s32 %v4816, %v4923
        %v4948 = vadd.s32 %v4817, %v4923
        %v4949 = vadd.s32 %v4818, %v4923
        %v4950 = vadd.s32 %v4819, %v4923
        %v4951 = vadd.s32 %v4820, %v4923
        %v4952 = vadd.s32 %v4821, %v4923
        %v4953 = vadd.s32 %v4822, %v4923
        %v4954 = vadd.s32 %v4823, %v4923
        %v4955 = vadd.s32 %v4824, %v4923
        %v4956 = vadd.s32 %v4825, %v4923
        %v4957 = vadd.s32 %v4826, %v4923
        %v4958 = vadd.s32 %v4827, %v4923
        %v4959 = vadd.s32 %v4828, %v4923
        %v4960 = vadd.s32 %v4829, %v4923
        %v4961 = vadd.s32 %v4830, %v4923
        %v4962 = vadd.s32 %v4831, %v4923
        %v4963 = vadd.s32 %v4832, %v4923
        %v4964 = vadd.s32 %v4833, %v4923
        %v4965 = vadd.s32 %v4834, %v4923
        %v4966 = vadd.s32 %v4835, %v4923
        %v4967 = vadd.s32 %v4836, %v4923
        %v4968 = vadd.s32 %v4837, %v4923
        %v4969 = vadd.s32 %v4838, %v4923
        %v4970 = vadd.s32 %v4839, %v4923
        %v4971 = vadd.s32 %v4840, %v4923
        %v4972 = vadd.s32 %v4841, %v4923
        %v4973 = vadd.s32 %v4842, %v4923
        %v4974 = vadd.s32 %v4843, %v4923
        %v4975 = vadd.s32 %v4844, %v4923
        %v4976 = vadd.s32 %v4845, %v4923
        %v4977 = vadd.s32 %v4846, %v4923
        %v4978 = vadd.s32 %v4847, %v4923
        %v4979 = vadd.s32 %v4848, %v4923
        %v4980 = vadd.s32 %v4849, %v4923
        %v4981 = vadd.s32 %v4850, %v4923
        %v4982 = vadd.s32 %v4851, %v4923
        %v4983 = vadd.s32 %v4852, %v4923
        %v4984 = vadd.s32 %v4853, %v4923
        %v4985 = vadd.s32 %v4854, %v4923
        %v4986 = vadd.s32 %v4855, %v4923
        %v4987 = vadd.s32 %v4856, %v4923
        %v4988 = vadd.s32 %v4857, %v4923
        %v4989 = vadd.s32 %v4858, %v4923
        %v4990 = vadd.s32 %v4859, %v4923
        %v4991 = vadd.s32 %v4860, %v4923
        %v4992 = vadd.s32 %v4861, %v4923
        %v4993 = vadd.s32 %v4862, %v4923
        %v4994 = vadd.s32 %v4863, %v4923
        %v4995 = vadd.s32 %v4864, %v4923
        %v4996 = vadd.s32 %v4865, %v4923
        %v4997 = vadd.s32 %v4866, %v4923
        %v4998 = vadd.s32 %v4867, %v4923
        %v4999 = vadd.s32 %v4868, %v4923
        %v5000 = vadd.s32 %v4869, %v4923
        %v5001 = vadd.s32 %v4870, %v4923
        %v5002 = vadd.s32 %v4871, %v4923
        %v5003 = vadd.s32 %v4872, %v4923
        %v5004 = vadd.s32 %v4873, %v4923
        %v5005 = vadd.s32 %v4874, %v4923
        %v5006 = vadd.s32 %v4875, %v4923
        %v5007 = vadd.s32 %v4876, %v4923
        %v5008 = vadd.s32 %v4877, %v4923
        %v5009 = vadd.s32 %v4878, %v4923
        %v5010 = vadd.s32 %v4879, %v4923
        %v5011 = vadd.s32 %v4880, %v4923
        %v5012 = vadd.s32 %v4881, %v4923
        %v5013 = vadd.s32 %v4882, %v4923
        %v5014 = vadd.s32 %v4883, %v4923
        %v5015 = vadd.s32 %v4884, %v4923
        %v5016 = vadd.s32 %v4885, %v4923
        %v5017 = vadd.s32 %v4886, %v4923
        %v5018 = vadd.s32 %v4887, %v4923
        %v5019 = vadd.s32 %v4888, %v4923
        %v5020 = vadd.s32 %v4889, %v4923
        %v5021 = vadd.s32 %v4890, %v4923
        %v5022 = vadd.s32 %v4891, %v4923
        %v5023 = vadd.s32 %v4892, %v4923
        %v5024 = vadd.s32 %v4893, %v4923
        %v5025 = vadd.s32 %v4894, %v4923
        %v5026 = vadd.s32 %v4895, %v4923
        %v5027 = vadd.s32 %v4896, %v4923
        %v5028 = vadd.s32 %v4897, %v4923
        %v5029 = vadd.s32 %v4898, %v4923
        %v5030 = vadd.s32 %v4899, %v4923
        %v5031 = vadd.s32 %v4900, %v4923
        %v5032 = vadd.s32 %v4901, %v4923
        %v5033 = vadd.s32 %v4902, %v4923
        %v5034 = vadd.s32 %v4903, %v4923
        %v5035 = vadd.s32 %v4904, %v4923
        %v5036 = vadd.s32 %v4905, %v4923
        %v5037 = vadd.s32 %v4906, %v4923
        %v5038 = vadd.s32 %v4907, %v4923
        %v5039 = vadd.s32 %v4908, %v4923
        %v5040 = vadd.s32 %v4909, %v4923
        %v5041 = vadd.s32 %v4910, %v4923
        %v5042 = vadd.s32 %v4911, %v4923
        %v5043 = vadd.s32 %v4912, %v4923
        %v5044 = vadd.s32 %v4913, %v4923
        %v5045 = vadd.s32 %v4914, %v4923
        %v5046 = vadd.s32 %v4915, %v4923
        %v5047 = vadd.s32 %v4916, %v4923
        %v5048 = vadd.s32 %v4917, %v4923
        %v5049 = vadd.s32 %v4918, %v4923
        %v5050 = vadd.s32 %v4919, %v4923
        %v5051 = vadd.s32 %v4920, %v4923
        %vm5052 = vcmp.lt.s32.totalorder %v4924, 2048
        %vm5053 = vcmp.lt.s32.totalorder %v4925, 2048
        %vm5054 = vcmp.lt.s32.totalorder %v4926, 2048
        %vm5055 = vcmp.lt.s32.totalorder %v4927, 2048
        %vm5056 = vcmp.lt.s32.totalorder %v4928, 2048
        %vm5057 = vcmp.lt.s32.totalorder %v4929, 2048
        %vm5058 = vcmp.lt.s32.totalorder %v4930, 2048
        %vm5059 = vcmp.lt.s32.totalorder %v4931, 2048
        %vm5060 = vcmp.lt.s32.totalorder %v4932, 2048
        %vm5061 = vcmp.lt.s32.totalorder %v4933, 2048
        %vm5062 = vcmp.lt.s32.totalorder %v4934, 2048
        %vm5063 = vcmp.lt.s32.totalorder %v4935, 2048
        %vm5064 = vcmp.lt.s32.totalorder %v4936, 2048
        %vm5065 = vcmp.lt.s32.totalorder %v4937, 2048
        %vm5066 = vcmp.lt.s32.totalorder %v4938, 2048
        %vm5067 = vcmp.lt.s32.totalorder %v4939, 2048
        %vm5068 = vcmp.lt.s32.totalorder %v4940, 2048
        %vm5069 = vcmp.lt.s32.totalorder %v4941, 2048
        %vm5070 = vcmp.lt.s32.totalorder %v4942, 2048
        %vm5071 = vcmp.lt.s32.totalorder %v4943, 2048
        %vm5072 = vcmp.lt.s32.totalorder %v4944, 2048
        %vm5073 = vcmp.lt.s32.totalorder %v4945, 2048
        %vm5074 = vcmp.lt.s32.totalorder %v4946, 2048
        %vm5075 = vcmp.lt.s32.totalorder %v4947, 2048
        %vm5076 = vcmp.lt.s32.totalorder %v4948, 2048
        %vm5077 = vcmp.lt.s32.totalorder %v4949, 2048
        %vm5078 = vcmp.lt.s32.totalorder %v4950, 2048
        %vm5079 = vcmp.lt.s32.totalorder %v4951, 2048
        %vm5080 = vcmp.lt.s32.totalorder %v4952, 2048
        %vm5081 = vcmp.lt.s32.totalorder %v4953, 2048
        %vm5082 = vcmp.lt.s32.totalorder %v4954, 2048
        %vm5083 = vcmp.lt.s32.totalorder %v4955, 2048
        %vm5084 = vcmp.lt.s32.totalorder %v4956, 2048
        %vm5085 = vcmp.lt.s32.totalorder %v4957, 2048
        %vm5086 = vcmp.lt.s32.totalorder %v4958, 2048
        %vm5087 = vcmp.lt.s32.totalorder %v4959, 2048
        %vm5088 = vcmp.lt.s32.totalorder %v4960, 2048
        %vm5089 = vcmp.lt.s32.totalorder %v4961, 2048
        %vm5090 = vcmp.lt.s32.totalorder %v4962, 2048
        %vm5091 = vcmp.lt.s32.totalorder %v4963, 2048
        %vm5092 = vcmp.lt.s32.totalorder %v4964, 2048
        %vm5093 = vcmp.lt.s32.totalorder %v4965, 2048
        %vm5094 = vcmp.lt.s32.totalorder %v4966, 2048
        %vm5095 = vcmp.lt.s32.totalorder %v4967, 2048
        %vm5096 = vcmp.lt.s32.totalorder %v4968, 2048
        %vm5097 = vcmp.lt.s32.totalorder %v4969, 2048
        %vm5098 = vcmp.lt.s32.totalorder %v4970, 2048
        %vm5099 = vcmp.lt.s32.totalorder %v4971, 2048
        %vm5100 = vcmp.lt.s32.totalorder %v4972, 2048
        %vm5101 = vcmp.lt.s32.totalorder %v4973, 2048
        %vm5102 = vcmp.lt.s32.totalorder %v4974, 2048
        %vm5103 = vcmp.lt.s32.totalorder %v4975, 2048
        %vm5104 = vcmp.lt.s32.totalorder %v4976, 2048
        %vm5105 = vcmp.lt.s32.totalorder %v4977, 2048
        %vm5106 = vcmp.lt.s32.totalorder %v4978, 2048
        %vm5107 = vcmp.lt.s32.totalorder %v4979, 2048
        %vm5108 = vcmp.lt.s32.totalorder %v4980, 2048
        %vm5109 = vcmp.lt.s32.totalorder %v4981, 2048
        %vm5110 = vcmp.lt.s32.totalorder %v4982, 2048
        %vm5111 = vcmp.lt.s32.totalorder %v4983, 2048
        %vm5112 = vcmp.lt.s32.totalorder %v4984, 2048
        %vm5113 = vcmp.lt.s32.totalorder %v4985, 2048
        %vm5114 = vcmp.lt.s32.totalorder %v4986, 2048
        %vm5115 = vcmp.lt.s32.totalorder %v4987, 2048
        %vm5116 = vcmp.lt.s32.totalorder %v4988, 2048
        %vm5117 = vcmp.lt.s32.totalorder %v4989, 2048
        %vm5118 = vcmp.lt.s32.totalorder %v4990, 2048
        %vm5119 = vcmp.lt.s32.totalorder %v4991, 2048
        %vm5120 = vcmp.lt.s32.totalorder %v4992, 2048
        %vm5121 = vcmp.lt.s32.totalorder %v4993, 2048
        %vm5122 = vcmp.lt.s32.totalorder %v4994, 2048
        %vm5123 = vcmp.lt.s32.totalorder %v4995, 2048
        %vm5124 = vcmp.lt.s32.totalorder %v4996, 2048
        %vm5125 = vcmp.lt.s32.totalorder %v4997, 2048
        %vm5126 = vcmp.lt.s32.totalorder %v4998, 2048
        %vm5127 = vcmp.lt.s32.totalorder %v4999, 2048
        %vm5128 = vcmp.lt.s32.totalorder %v5000, 2048
        %vm5129 = vcmp.lt.s32.totalorder %v5001, 2048
        %vm5130 = vcmp.lt.s32.totalorder %v5002, 2048
        %vm5131 = vcmp.lt.s32.totalorder %v5003, 2048
        %vm5132 = vcmp.lt.s32.totalorder %v5004, 2048
        %vm5133 = vcmp.lt.s32.totalorder %v5005, 2048
        %vm5134 = vcmp.lt.s32.totalorder %v5006, 2048
        %vm5135 = vcmp.lt.s32.totalorder %v5007, 2048
        %vm5136 = vcmp.lt.s32.totalorder %v5008, 2048
        %vm5137 = vcmp.lt.s32.totalorder %v5009, 2048
        %vm5138 = vcmp.lt.s32.totalorder %v5010, 2048
        %vm5139 = vcmp.lt.s32.totalorder %v5011, 2048
        %vm5140 = vcmp.lt.s32.totalorder %v5012, 2048
        %vm5141 = vcmp.lt.s32.totalorder %v5013, 2048
        %vm5142 = vcmp.lt.s32.totalorder %v5014, 2048
        %vm5143 = vcmp.lt.s32.totalorder %v5015, 2048
        %vm5144 = vcmp.lt.s32.totalorder %v5016, 2048
        %vm5145 = vcmp.lt.s32.totalorder %v5017, 2048
        %vm5146 = vcmp.lt.s32.totalorder %v5018, 2048
        %vm5147 = vcmp.lt.s32.totalorder %v5019, 2048
        %vm5148 = vcmp.lt.s32.totalorder %v5020, 2048
        %vm5149 = vcmp.lt.s32.totalorder %v5021, 2048
        %vm5150 = vcmp.lt.s32.totalorder %v5022, 2048
        %vm5151 = vcmp.lt.s32.totalorder %v5023, 2048
        %vm5152 = vcmp.lt.s32.totalorder %v5024, 2048
        %vm5153 = vcmp.lt.s32.totalorder %v5025, 2048
        %vm5154 = vcmp.lt.s32.totalorder %v5026, 2048
        %vm5155 = vcmp.lt.s32.totalorder %v5027, 2048
        %vm5156 = vcmp.lt.s32.totalorder %v5028, 2048
        %vm5157 = vcmp.lt.s32.totalorder %v5029, 2048
        %vm5158 = vcmp.lt.s32.totalorder %v5030, 2048
        %vm5159 = vcmp.lt.s32.totalorder %v5031, 2048
        %vm5160 = vcmp.lt.s32.totalorder %v5032, 2048
        %vm5161 = vcmp.lt.s32.totalorder %v5033, 2048
        %vm5162 = vcmp.lt.s32.totalorder %v5034, 2048
        %vm5163 = vcmp.lt.s32.totalorder %v5035, 2048
        %vm5164 = vcmp.lt.s32.totalorder %v5036, 2048
        %vm5165 = vcmp.lt.s32.totalorder %v5037, 2048
        %vm5166 = vcmp.lt.s32.totalorder %v5038, 2048
        %vm5167 = vcmp.lt.s32.totalorder %v5039, 2048
        %vm5168 = vcmp.lt.s32.totalorder %v5040, 2048
        %vm5169 = vcmp.lt.s32.totalorder %v5041, 2048
        %vm5170 = vcmp.lt.s32.totalorder %v5042, 2048
        %vm5171 = vcmp.lt.s32.totalorder %v5043, 2048
        %vm5172 = vcmp.lt.s32.totalorder %v5044, 2048
        %vm5173 = vcmp.lt.s32.totalorder %v5045, 2048
        %vm5174 = vcmp.lt.s32.totalorder %v5046, 2048
        %vm5175 = vcmp.lt.s32.totalorder %v5047, 2048
        %vm5176 = vcmp.lt.s32.totalorder %v5048, 2048
        %vm5177 = vcmp.lt.s32.totalorder %v5049, 2048
        %vm5178 = vcmp.lt.s32.totalorder %v5050, 2048
        %vm5179 = vcmp.lt.s32.totalorder %v5051, 2048
        %v5180 = vmul.f32 %v4664, %v4664
        %v5181 = vmul.f32 %v4665, %v4665
        %v5182 = vmul.f32 %v4666, %v4666
        %v5183 = vmul.f32 %v4667, %v4667
        %v5184 = vmul.f32 %v4668, %v4668
        %v5185 = vmul.f32 %v4669, %v4669
        %v5186 = vmul.f32 %v4670, %v4670
        %v5187 = vmul.f32 %v4671, %v4671
        %v5188 = vmul.f32 %v4672, %v4672
        %v5189 = vmul.f32 %v4673, %v4673
        %v5190 = vmul.f32 %v4674, %v4674
        %v5191 = vmul.f32 %v4675, %v4675
        %v5192 = vmul.f32 %v4676, %v4676
        %v5193 = vmul.f32 %v4677, %v4677
        %v5194 = vmul.f32 %v4678, %v4678
        %v5195 = vmul.f32 %v4679, %v4679
        %v5196 = vmul.f32 %v4680, %v4680
        %v5197 = vmul.f32 %v4681, %v4681
        %v5198 = vmul.f32 %v4682, %v4682
        %v5199 = vmul.f32 %v4683, %v4683
        %v5200 = vmul.f32 %v4684, %v4684
        %v5201 = vmul.f32 %v4685, %v4685
        %v5202 = vmul.f32 %v4686, %v4686
        %v5203 = vmul.f32 %v4687, %v4687
        %v5204 = vmul.f32 %v4688, %v4688
        %v5205 = vmul.f32 %v4689, %v4689
        %v5206 = vmul.f32 %v4690, %v4690
        %v5207 = vmul.f32 %v4691, %v4691
        %v5208 = vmul.f32 %v4692, %v4692
        %v5209 = vmul.f32 %v4693, %v4693
        %v5210 = vmul.f32 %v4694, %v4694
        %v5211 = vmul.f32 %v4695, %v4695
        %v5212 = vmul.f32 %v4696, %v4696
        %v5213 = vmul.f32 %v4697, %v4697
        %v5214 = vmul.f32 %v4698, %v4698
        %v5215 = vmul.f32 %v4699, %v4699
        %v5216 = vmul.f32 %v4700, %v4700
        %v5217 = vmul.f32 %v4701, %v4701
        %v5218 = vmul.f32 %v4702, %v4702
        %v5219 = vmul.f32 %v4703, %v4703
        %v5220 = vmul.f32 %v4704, %v4704
        %v5221 = vmul.f32 %v4705, %v4705
        %v5222 = vmul.f32 %v4706, %v4706
        %v5223 = vmul.f32 %v4707, %v4707
        %v5224 = vmul.f32 %v4708, %v4708
        %v5225 = vmul.f32 %v4709, %v4709
        %v5226 = vmul.f32 %v4710, %v4710
        %v5227 = vmul.f32 %v4711, %v4711
        %v5228 = vmul.f32 %v4712, %v4712
        %v5229 = vmul.f32 %v4713, %v4713
        %v5230 = vmul.f32 %v4714, %v4714
        %v5231 = vmul.f32 %v4715, %v4715
        %v5232 = vmul.f32 %v4716, %v4716
        %v5233 = vmul.f32 %v4717, %v4717
        %v5234 = vmul.f32 %v4718, %v4718
        %v5235 = vmul.f32 %v4719, %v4719
        %v5236 = vmul.f32 %v4720, %v4720
        %v5237 = vmul.f32 %v4721, %v4721
        %v5238 = vmul.f32 %v4722, %v4722
        %v5239 = vmul.f32 %v4723, %v4723
        %v5240 = vmul.f32 %v4724, %v4724
        %v5241 = vmul.f32 %v4725, %v4725
        %v5242 = vmul.f32 %v4726, %v4726
        %v5243 = vmul.f32 %v4727, %v4727
        %v5244 = vmul.f32 %v4728, %v4728
        %v5245 = vmul.f32 %v4729, %v4729
        %v5246 = vmul.f32 %v4730, %v4730
        %v5247 = vmul.f32 %v4731, %v4731
        %v5248 = vmul.f32 %v4732, %v4732
        %v5249 = vmul.f32 %v4733, %v4733
        %v5250 = vmul.f32 %v4734, %v4734
        %v5251 = vmul.f32 %v4735, %v4735
        %v5252 = vmul.f32 %v4736, %v4736
        %v5253 = vmul.f32 %v4737, %v4737
        %v5254 = vmul.f32 %v4738, %v4738
        %v5255 = vmul.f32 %v4739, %v4739
        %v5256 = vmul.f32 %v4740, %v4740
        %v5257 = vmul.f32 %v4741, %v4741
        %v5258 = vmul.f32 %v4742, %v4742
        %v5259 = vmul.f32 %v4743, %v4743
        %v5260 = vmul.f32 %v4744, %v4744
        %v5261 = vmul.f32 %v4745, %v4745
        %v5262 = vmul.f32 %v4746, %v4746
        %v5263 = vmul.f32 %v4747, %v4747
        %v5264 = vmul.f32 %v4748, %v4748
        %v5265 = vmul.f32 %v4749, %v4749
        %v5266 = vmul.f32 %v4750, %v4750
        %v5267 = vmul.f32 %v4751, %v4751
        %v5268 = vmul.f32 %v4752, %v4752
        %v5269 = vmul.f32 %v4753, %v4753
        %v5270 = vmul.f32 %v4754, %v4754
        %v5271 = vmul.f32 %v4755, %v4755
        %v5272 = vmul.f32 %v4756, %v4756
        %v5273 = vmul.f32 %v4757, %v4757
        %v5274 = vmul.f32 %v4758, %v4758
        %v5275 = vmul.f32 %v4759, %v4759
        %v5276 = vmul.f32 %v4760, %v4760
        %v5277 = vmul.f32 %v4761, %v4761
        %v5278 = vmul.f32 %v4762, %v4762
        %v5279 = vmul.f32 %v4763, %v4763
        %v5280 = vmul.f32 %v4764, %v4764
        %v5281 = vmul.f32 %v4765, %v4765
        %v5282 = vmul.f32 %v4766, %v4766
        %v5283 = vmul.f32 %v4767, %v4767
        %v5284 = vmul.f32 %v4768, %v4768
        %v5285 = vmul.f32 %v4769, %v4769
        %v5286 = vmul.f32 %v4770, %v4770
        %v5287 = vmul.f32 %v4771, %v4771
        %v5288 = vmul.f32 %v4772, %v4772
        %v5289 = vmul.f32 %v4773, %v4773
        %v5290 = vmul.f32 %v4774, %v4774
        %v5291 = vmul.f32 %v4775, %v4775
        %v5292 = vmul.f32 %v4776, %v4776
        %v5293 = vmul.f32 %v4777, %v4777
        %v5294 = vmul.f32 %v4778, %v4778
        %v5295 = vmul.f32 %v4779, %v4779
        %v5296 = vmul.f32 %v4780, %v4780
        %v5297 = vmul.f32 %v4781, %v4781
        %v5298 = vmul.f32 %v4782, %v4782
        %v5299 = vmul.f32 %v4783, %v4783
        %v5300 = vmul.f32 %v4784, %v4784
        %v5301 = vmul.f32 %v4785, %v4785
        %v5302 = vmul.f32 %v4786, %v4786
        %v5303 = vmul.f32 %v4787, %v4787
        %v5304 = vmul.f32 %v4788, %v4788
        %v5305 = vmul.f32 %v4789, %v4789
        %v5306 = vmul.f32 %v4790, %v4790
        %v5307 = vmul.f32 %v4791, %v4791
        %v5308 = vsel %vm5052, %v5180, 0.0
        %v5309 = vsel %vm5053, %v5181, 0.0
        %v5310 = vsel %vm5054, %v5182, 0.0
        %v5311 = vsel %vm5055, %v5183, 0.0
        %v5312 = vsel %vm5056, %v5184, 0.0
        %v5313 = vsel %vm5057, %v5185, 0.0
        %v5314 = vsel %vm5058, %v5186, 0.0
        %v5315 = vsel %vm5059, %v5187, 0.0
        %v5316 = vsel %vm5060, %v5188, 0.0
        %v5317 = vsel %vm5061, %v5189, 0.0
        %v5318 = vsel %vm5062, %v5190, 0.0
        %v5319 = vsel %vm5063, %v5191, 0.0
        %v5320 = vsel %vm5064, %v5192, 0.0
        %v5321 = vsel %vm5065, %v5193, 0.0
        %v5322 = vsel %vm5066, %v5194, 0.0
        %v5323 = vsel %vm5067, %v5195, 0.0
        %v5324 = vsel %vm5068, %v5196, 0.0
        %v5325 = vsel %vm5069, %v5197, 0.0
        %v5326 = vsel %vm5070, %v5198, 0.0
        %v5327 = vsel %vm5071, %v5199, 0.0
        %v5328 = vsel %vm5072, %v5200, 0.0
        %v5329 = vsel %vm5073, %v5201, 0.0
        %v5330 = vsel %vm5074, %v5202, 0.0
        %v5331 = vsel %vm5075, %v5203, 0.0
        %v5332 = vsel %vm5076, %v5204, 0.0
        %v5333 = vsel %vm5077, %v5205, 0.0
        %v5334 = vsel %vm5078, %v5206, 0.0
        %v5335 = vsel %vm5079, %v5207, 0.0
        %v5336 = vsel %vm5080, %v5208, 0.0
        %v5337 = vsel %vm5081, %v5209, 0.0
        %v5338 = vsel %vm5082, %v5210, 0.0
        %v5339 = vsel %vm5083, %v5211, 0.0
        %v5340 = vsel %vm5084, %v5212, 0.0
        %v5341 = vsel %vm5085, %v5213, 0.0
        %v5342 = vsel %vm5086, %v5214, 0.0
        %v5343 = vsel %vm5087, %v5215, 0.0
        %v5344 = vsel %vm5088, %v5216, 0.0
        %v5345 = vsel %vm5089, %v5217, 0.0
        %v5346 = vsel %vm5090, %v5218, 0.0
        %v5347 = vsel %vm5091, %v5219, 0.0
        %v5348 = vsel %vm5092, %v5220, 0.0
        %v5349 = vsel %vm5093, %v5221, 0.0
        %v5350 = vsel %vm5094, %v5222, 0.0
        %v5351 = vsel %vm5095, %v5223, 0.0
        %v5352 = vsel %vm5096, %v5224, 0.0
        %v5353 = vsel %vm5097, %v5225, 0.0
        %v5354 = vsel %vm5098, %v5226, 0.0
        %v5355 = vsel %vm5099, %v5227, 0.0
        %v5356 = vsel %vm5100, %v5228, 0.0
        %v5357 = vsel %vm5101, %v5229, 0.0
        %v5358 = vsel %vm5102, %v5230, 0.0
        %v5359 = vsel %vm5103, %v5231, 0.0
        %v5360 = vsel %vm5104, %v5232, 0.0
        %v5361 = vsel %vm5105, %v5233, 0.0
        %v5362 = vsel %vm5106, %v5234, 0.0
        %v5363 = vsel %vm5107, %v5235, 0.0
        %v5364 = vsel %vm5108, %v5236, 0.0
        %v5365 = vsel %vm5109, %v5237, 0.0
        %v5366 = vsel %vm5110, %v5238, 0.0
        %v5367 = vsel %vm5111, %v5239, 0.0
        %v5368 = vsel %vm5112, %v5240, 0.0
        %v5369 = vsel %vm5113, %v5241, 0.0
        %v5370 = vsel %vm5114, %v5242, 0.0
        %v5371 = vsel %vm5115, %v5243, 0.0
        %v5372 = vsel %vm5116, %v5244, 0.0
        %v5373 = vsel %vm5117, %v5245, 0.0
        %v5374 = vsel %vm5118, %v5246, 0.0
        %v5375 = vsel %vm5119, %v5247, 0.0
        %v5376 = vsel %vm5120, %v5248, 0.0
        %v5377 = vsel %vm5121, %v5249, 0.0
        %v5378 = vsel %vm5122, %v5250, 0.0
        %v5379 = vsel %vm5123, %v5251, 0.0
        %v5380 = vsel %vm5124, %v5252, 0.0
        %v5381 = vsel %vm5125, %v5253, 0.0
        %v5382 = vsel %vm5126, %v5254, 0.0
        %v5383 = vsel %vm5127, %v5255, 0.0
        %v5384 = vsel %vm5128, %v5256, 0.0
        %v5385 = vsel %vm5129, %v5257, 0.0
        %v5386 = vsel %vm5130, %v5258, 0.0
        %v5387 = vsel %vm5131, %v5259, 0.0
        %v5388 = vsel %vm5132, %v5260, 0.0
        %v5389 = vsel %vm5133, %v5261, 0.0
        %v5390 = vsel %vm5134, %v5262, 0.0
        %v5391 = vsel %vm5135, %v5263, 0.0
        %v5392 = vsel %vm5136, %v5264, 0.0
        %v5393 = vsel %vm5137, %v5265, 0.0
        %v5394 = vsel %vm5138, %v5266, 0.0
        %v5395 = vsel %vm5139, %v5267, 0.0
        %v5396 = vsel %vm5140, %v5268, 0.0
        %v5397 = vsel %vm5141, %v5269, 0.0
        %v5398 = vsel %vm5142, %v5270, 0.0
        %v5399 = vsel %vm5143, %v5271, 0.0
        %v5400 = vsel %vm5144, %v5272, 0.0
        %v5401 = vsel %vm5145, %v5273, 0.0
        %v5402 = vsel %vm5146, %v5274, 0.0
        %v5403 = vsel %vm5147, %v5275, 0.0
        %v5404 = vsel %vm5148, %v5276, 0.0
        %v5405 = vsel %vm5149, %v5277, 0.0
        %v5406 = vsel %vm5150, %v5278, 0.0
        %v5407 = vsel %vm5151, %v5279, 0.0
        %v5408 = vsel %vm5152, %v5280, 0.0
        %v5409 = vsel %vm5153, %v5281, 0.0
        %v5410 = vsel %vm5154, %v5282, 0.0
        %v5411 = vsel %vm5155, %v5283, 0.0
        %v5412 = vsel %vm5156, %v5284, 0.0
        %v5413 = vsel %vm5157, %v5285, 0.0
        %v5414 = vsel %vm5158, %v5286, 0.0
        %v5415 = vsel %vm5159, %v5287, 0.0
        %v5416 = vsel %vm5160, %v5288, 0.0
        %v5417 = vsel %vm5161, %v5289, 0.0
        %v5418 = vsel %vm5162, %v5290, 0.0
        %v5419 = vsel %vm5163, %v5291, 0.0
        %v5420 = vsel %vm5164, %v5292, 0.0
        %v5421 = vsel %vm5165, %v5293, 0.0
        %v5422 = vsel %vm5166, %v5294, 0.0
        %v5423 = vsel %vm5167, %v5295, 0.0
        %v5424 = vsel %vm5168, %v5296, 0.0
        %v5425 = vsel %vm5169, %v5297, 0.0
        %v5426 = vsel %vm5170, %v5298, 0.0
        %v5427 = vsel %vm5171, %v5299, 0.0
        %v5428 = vsel %vm5172, %v5300, 0.0
        %v5429 = vsel %vm5173, %v5301, 0.0
        %v5430 = vsel %vm5174, %v5302, 0.0
        %v5431 = vsel %vm5175, %v5303, 0.0
        %v5432 = vsel %vm5176, %v5304, 0.0
        %v5433 = vsel %vm5177, %v5305, 0.0
        %v5434 = vsel %vm5178, %v5306, 0.0
        %v5435 = vsel %vm5179, %v5307, 0.0
        %v5436 = vld [vmem:[%s490] sm:$0x1]
        %vm5437 = vcmask 7168
        %v5438 = vsel %vm5437, %v5308, 0.0
        %v5439 = vsel %vm5437, %v5309, 0.0
        %v5440 = vadd.f32 %v5438, %v5439
        %v5441 = vsel %vm5437, %v5310, 0.0
        %v5442 = vadd.f32 %v5440, %v5441
        %v5443 = vsel %vm5437, %v5311, 0.0
        %v5444 = vadd.f32 %v5442, %v5443
        %v5445 = vsel %vm5437, %v5312, 0.0
        %v5446 = vadd.f32 %v5444, %v5445
        %v5447 = vsel %vm5437, %v5313, 0.0
        %v5448 = vadd.f32 %v5446, %v5447
        %v5449 = vsel %vm5437, %v5314, 0.0
        %v5450 = vadd.f32 %v5448, %v5449
        %v5451 = vsel %vm5437, %v5315, 0.0
        %v5452 = vadd.f32 %v5450, %v5451
        %v5453 = vsel %vm5437, %v5316, 0.0
        %v5454 = vadd.f32 %v5452, %v5453
        %v5455 = vsel %vm5437, %v5317, 0.0
        %v5456 = vadd.f32 %v5454, %v5455
        %v5457 = vsel %vm5437, %v5318, 0.0
        %v5458 = vadd.f32 %v5456, %v5457
        %v5459 = vsel %vm5437, %v5319, 0.0
        %v5460 = vadd.f32 %v5458, %v5459
        %v5461 = vsel %vm5437, %v5320, 0.0
        %v5462 = vadd.f32 %v5460, %v5461
        %v5463 = vsel %vm5437, %v5321, 0.0
        %v5464 = vadd.f32 %v5462, %v5463
        %v5465 = vsel %vm5437, %v5322, 0.0
        %v5466 = vadd.f32 %v5464, %v5465
        %v5467 = vsel %vm5437, %v5323, 0.0
        %v5468 = vadd.f32 %v5466, %v5467
        %v5469 = vsel %vm5437, %v5324, 0.0
        %v5470 = vadd.f32 %v5468, %v5469
        %v5471 = vsel %vm5437, %v5325, 0.0
        %v5472 = vadd.f32 %v5470, %v5471
        %v5473 = vsel %vm5437, %v5326, 0.0
        %v5474 = vadd.f32 %v5472, %v5473
        %v5475 = vsel %vm5437, %v5327, 0.0
        %v5476 = vadd.f32 %v5474, %v5475
        %v5477 = vsel %vm5437, %v5328, 0.0
        %v5478 = vadd.f32 %v5476, %v5477
        %v5479 = vsel %vm5437, %v5329, 0.0
        %v5480 = vadd.f32 %v5478, %v5479
        %v5481 = vsel %vm5437, %v5330, 0.0
        %v5482 = vadd.f32 %v5480, %v5481
        %v5483 = vsel %vm5437, %v5331, 0.0
        %v5484 = vadd.f32 %v5482, %v5483
        %v5485 = vsel %vm5437, %v5332, 0.0
        %v5486 = vadd.f32 %v5484, %v5485
        %v5487 = vsel %vm5437, %v5333, 0.0
        %v5488 = vadd.f32 %v5486, %v5487
        %v5489 = vsel %vm5437, %v5334, 0.0
        %v5490 = vadd.f32 %v5488, %v5489
        %v5491 = vsel %vm5437, %v5335, 0.0
        %v5492 = vadd.f32 %v5490, %v5491
        %v5493 = vsel %vm5437, %v5336, 0.0
        %v5494 = vadd.f32 %v5492, %v5493
        %v5495 = vsel %vm5437, %v5337, 0.0
        %v5496 = vadd.f32 %v5494, %v5495
        %v5497 = vsel %vm5437, %v5338, 0.0
        %v5498 = vadd.f32 %v5496, %v5497
        %v5499 = vsel %vm5437, %v5339, 0.0
        %v5500 = vadd.f32 %v5498, %v5499
        %v5501 = vsel %vm5437, %v5340, 0.0
        %v5502 = vadd.f32 %v5500, %v5501
        %v5503 = vsel %vm5437, %v5341, 0.0
        %v5504 = vadd.f32 %v5502, %v5503
        %v5505 = vsel %vm5437, %v5342, 0.0
        %v5506 = vadd.f32 %v5504, %v5505
        %v5507 = vsel %vm5437, %v5343, 0.0
        %v5508 = vadd.f32 %v5506, %v5507
        %v5509 = vsel %vm5437, %v5344, 0.0
        %v5510 = vadd.f32 %v5508, %v5509
        %v5511 = vsel %vm5437, %v5345, 0.0
        %v5512 = vadd.f32 %v5510, %v5511
        %v5513 = vsel %vm5437, %v5346, 0.0
        %v5514 = vadd.f32 %v5512, %v5513
        %v5515 = vsel %vm5437, %v5347, 0.0
        %v5516 = vadd.f32 %v5514, %v5515
        %v5517 = vsel %vm5437, %v5348, 0.0
        %v5518 = vadd.f32 %v5516, %v5517
        %v5519 = vsel %vm5437, %v5349, 0.0
        %v5520 = vadd.f32 %v5518, %v5519
        %v5521 = vsel %vm5437, %v5350, 0.0
        %v5522 = vadd.f32 %v5520, %v5521
        %v5523 = vsel %vm5437, %v5351, 0.0
        %v5524 = vadd.f32 %v5522, %v5523
        %v5525 = vsel %vm5437, %v5352, 0.0
        %v5526 = vadd.f32 %v5524, %v5525
        %v5527 = vsel %vm5437, %v5353, 0.0
        %v5528 = vadd.f32 %v5526, %v5527
        %v5529 = vsel %vm5437, %v5354, 0.0
        %v5530 = vadd.f32 %v5528, %v5529
        %v5531 = vsel %vm5437, %v5355, 0.0
        %v5532 = vadd.f32 %v5530, %v5531
        %v5533 = vsel %vm5437, %v5356, 0.0
        %v5534 = vadd.f32 %v5532, %v5533
        %v5535 = vsel %vm5437, %v5357, 0.0
        %v5536 = vadd.f32 %v5534, %v5535
        %v5537 = vsel %vm5437, %v5358, 0.0
        %v5538 = vadd.f32 %v5536, %v5537
        %v5539 = vsel %vm5437, %v5359, 0.0
        %v5540 = vadd.f32 %v5538, %v5539
        %v5541 = vsel %vm5437, %v5360, 0.0
        %v5542 = vadd.f32 %v5540, %v5541
        %v5543 = vsel %vm5437, %v5361, 0.0
        %v5544 = vadd.f32 %v5542, %v5543
        %v5545 = vsel %vm5437, %v5362, 0.0
        %v5546 = vadd.f32 %v5544, %v5545
        %v5547 = vsel %vm5437, %v5363, 0.0
        %v5548 = vadd.f32 %v5546, %v5547
        %v5549 = vsel %vm5437, %v5364, 0.0
        %v5550 = vadd.f32 %v5548, %v5549
        %v5551 = vsel %vm5437, %v5365, 0.0
        %v5552 = vadd.f32 %v5550, %v5551
        %v5553 = vsel %vm5437, %v5366, 0.0
        %v5554 = vadd.f32 %v5552, %v5553
        %v5555 = vsel %vm5437, %v5367, 0.0
        %v5556 = vadd.f32 %v5554, %v5555
        %v5557 = vsel %vm5437, %v5368, 0.0
        %v5558 = vadd.f32 %v5556, %v5557
        %v5559 = vsel %vm5437, %v5369, 0.0
        %v5560 = vadd.f32 %v5558, %v5559
        %v5561 = vsel %vm5437, %v5370, 0.0
        %v5562 = vadd.f32 %v5560, %v5561
        %v5563 = vsel %vm5437, %v5371, 0.0
        %v5564 = vadd.f32 %v5562, %v5563
        %v5565 = vsel %vm5437, %v5372, 0.0
        %v5566 = vadd.f32 %v5564, %v5565
        %v5567 = vsel %vm5437, %v5373, 0.0
        %v5568 = vadd.f32 %v5566, %v5567
        %v5569 = vsel %vm5437, %v5374, 0.0
        %v5570 = vadd.f32 %v5568, %v5569
        %v5571 = vsel %vm5437, %v5375, 0.0
        %v5572 = vadd.f32 %v5570, %v5571
        %v5573 = vsel %vm5437, %v5376, 0.0
        %v5574 = vadd.f32 %v5572, %v5573
        %v5575 = vsel %vm5437, %v5377, 0.0
        %v5576 = vadd.f32 %v5574, %v5575
        %v5577 = vsel %vm5437, %v5378, 0.0
        %v5578 = vadd.f32 %v5576, %v5577
        %v5579 = vsel %vm5437, %v5379, 0.0
        %v5580 = vadd.f32 %v5578, %v5579
        %v5581 = vsel %vm5437, %v5380, 0.0
        %v5582 = vadd.f32 %v5580, %v5581
        %v5583 = vsel %vm5437, %v5381, 0.0
        %v5584 = vadd.f32 %v5582, %v5583
        %v5585 = vsel %vm5437, %v5382, 0.0
        %v5586 = vadd.f32 %v5584, %v5585
        %v5587 = vsel %vm5437, %v5383, 0.0
        %v5588 = vadd.f32 %v5586, %v5587
        %v5589 = vsel %vm5437, %v5384, 0.0
        %v5590 = vadd.f32 %v5588, %v5589
        %v5591 = vsel %vm5437, %v5385, 0.0
        %v5592 = vadd.f32 %v5590, %v5591
        %v5593 = vsel %vm5437, %v5386, 0.0
        %v5594 = vadd.f32 %v5592, %v5593
        %v5595 = vsel %vm5437, %v5387, 0.0
        %v5596 = vadd.f32 %v5594, %v5595
        %v5597 = vsel %vm5437, %v5388, 0.0
        %v5598 = vadd.f32 %v5596, %v5597
        %v5599 = vsel %vm5437, %v5389, 0.0
        %v5600 = vadd.f32 %v5598, %v5599
        %v5601 = vsel %vm5437, %v5390, 0.0
        %v5602 = vadd.f32 %v5600, %v5601
        %v5603 = vsel %vm5437, %v5391, 0.0
        %v5604 = vadd.f32 %v5602, %v5603
        %v5605 = vsel %vm5437, %v5392, 0.0
        %v5606 = vadd.f32 %v5604, %v5605
        %v5607 = vsel %vm5437, %v5393, 0.0
        %v5608 = vadd.f32 %v5606, %v5607
        %v5609 = vsel %vm5437, %v5394, 0.0
        %v5610 = vadd.f32 %v5608, %v5609
        %v5611 = vsel %vm5437, %v5395, 0.0
        %v5612 = vadd.f32 %v5610, %v5611
        %v5613 = vsel %vm5437, %v5396, 0.0
        %v5614 = vadd.f32 %v5612, %v5613
        %v5615 = vsel %vm5437, %v5397, 0.0
        %v5616 = vadd.f32 %v5614, %v5615
        %v5617 = vsel %vm5437, %v5398, 0.0
        %v5618 = vadd.f32 %v5616, %v5617
        %v5619 = vsel %vm5437, %v5399, 0.0
        %v5620 = vadd.f32 %v5618, %v5619
        %v5621 = vsel %vm5437, %v5400, 0.0
        %v5622 = vadd.f32 %v5620, %v5621
        %v5623 = vsel %vm5437, %v5401, 0.0
        %v5624 = vadd.f32 %v5622, %v5623
        %v5625 = vsel %vm5437, %v5402, 0.0
        %v5626 = vadd.f32 %v5624, %v5625
        %v5627 = vsel %vm5437, %v5403, 0.0
        %v5628 = vadd.f32 %v5626, %v5627
        %v5629 = vsel %vm5437, %v5404, 0.0
        %v5630 = vadd.f32 %v5628, %v5629
        %v5631 = vsel %vm5437, %v5405, 0.0
        %v5632 = vadd.f32 %v5630, %v5631
        %v5633 = vsel %vm5437, %v5406, 0.0
        %v5634 = vadd.f32 %v5632, %v5633
        %v5635 = vsel %vm5437, %v5407, 0.0
        %v5636 = vadd.f32 %v5634, %v5635
        %v5637 = vsel %vm5437, %v5408, 0.0
        %v5638 = vadd.f32 %v5636, %v5637
        %v5639 = vsel %vm5437, %v5409, 0.0
        %v5640 = vadd.f32 %v5638, %v5639
        %v5641 = vsel %vm5437, %v5410, 0.0
        %v5642 = vadd.f32 %v5640, %v5641
        %v5643 = vsel %vm5437, %v5411, 0.0
        %v5644 = vadd.f32 %v5642, %v5643
        %v5645 = vsel %vm5437, %v5412, 0.0
        %v5646 = vadd.f32 %v5644, %v5645
        %v5647 = vsel %vm5437, %v5413, 0.0
        %v5648 = vadd.f32 %v5646, %v5647
        %v5649 = vsel %vm5437, %v5414, 0.0
        %v5650 = vadd.f32 %v5648, %v5649
        %v5651 = vsel %vm5437, %v5415, 0.0
        %v5652 = vadd.f32 %v5650, %v5651
        %v5653 = vsel %vm5437, %v5416, 0.0
        %v5654 = vadd.f32 %v5652, %v5653
        %v5655 = vsel %vm5437, %v5417, 0.0
        %v5656 = vadd.f32 %v5654, %v5655
        %v5657 = vsel %vm5437, %v5418, 0.0
        %v5658 = vadd.f32 %v5656, %v5657
        %v5659 = vsel %vm5437, %v5419, 0.0
        %v5660 = vadd.f32 %v5658, %v5659
        %v5661 = vsel %vm5437, %v5420, 0.0
        %v5662 = vadd.f32 %v5660, %v5661
        %v5663 = vsel %vm5437, %v5421, 0.0
        %v5664 = vadd.f32 %v5662, %v5663
        %v5665 = vsel %vm5437, %v5422, 0.0
        %v5666 = vadd.f32 %v5664, %v5665
        %v5667 = vsel %vm5437, %v5423, 0.0
        %v5668 = vadd.f32 %v5666, %v5667
        %v5669 = vsel %vm5437, %v5424, 0.0
        %v5670 = vadd.f32 %v5668, %v5669
        %v5671 = vsel %vm5437, %v5425, 0.0
        %v5672 = vadd.f32 %v5670, %v5671
        %v5673 = vsel %vm5437, %v5426, 0.0
        %v5674 = vadd.f32 %v5672, %v5673
        %v5675 = vsel %vm5437, %v5427, 0.0
        %v5676 = vadd.f32 %v5674, %v5675
        %v5677 = vsel %vm5437, %v5428, 0.0
        %v5678 = vadd.f32 %v5676, %v5677
        %v5679 = vsel %vm5437, %v5429, 0.0
        %v5680 = vadd.f32 %v5678, %v5679
        %v5681 = vsel %vm5437, %v5430, 0.0
        %v5682 = vadd.f32 %v5680, %v5681
        %v5683 = vsel %vm5437, %v5431, 0.0
        %v5684 = vadd.f32 %v5682, %v5683
        %v5685 = vsel %vm5437, %v5432, 0.0
        %v5686 = vadd.f32 %v5684, %v5685
        %v5687 = vsel %vm5437, %v5433, 0.0
        %v5688 = vadd.f32 %v5686, %v5687
        %v5689 = vsel %vm5437, %v5434, 0.0
        %v5690 = vadd.f32 %v5688, %v5689
        %v5691 = vsel %vm5437, %v5435, 0.0
        %v5692 = vadd.f32 %v5690, %v5691
        %v5693 = vrot.slane %v5692, 4
        %v5694 = vadd.f32 %v5692, %v5693
        %v5695 = vrot.slane %v5694, 2
        %v5696 = vadd.f32 %v5694, %v5695
        %v5697 = vrot.slane %v5696, 1
        %v5698 = vadd.f32 %v5696, %v5697
        %5700 = vset.pattern.permute.xlu0 0
        %5701 = vperm.xlu0 %5700, %v5698
        %v5702 = vpop.permute.xlu0 %5701
        %v5704 = vadd.f32 %v5436, %v5702
        %5705 = vst [vmem:[%s490] sm:$0x1] %v5704
        %p5706 = scmp.lt.s32.totalorder %s26, 1
        %s5707 = scalar_select %p5706, %s26, 1
        %s5708 = scalar_lea.vmem %s10, %s5707
        // Predicated region
        $region69: #{td0_value_loss.1} parent=59 // pred_check
          %p5709 = pneg %p295
        $region70: #{td0_value_loss.1} parent=59 // pred_check_branch
          %5711 = sbr.rel (%p5709) target = $region72
        $region71: #{td0_value_loss.1} parent=59 // pred_region
          _
        $region72: #{td0_value_loss.1} parent=59 // pred_fallthru
          _
      $region60: #{td0_value_loss.1} parent=5 // pred_fallthru
        _
      %p5712 = scmp.le.s32.totalorder 2, %s17
      // Predicated region
      $region73: #{td0_value_loss.1} parent=5 // pred_check
        %p5713 = pneg %p5712
      $region74: #{td0_value_loss.1} parent=5 // pred_check_branch
        %5715 = sbr.rel (%p5713) target = $region76
      $region75: #{td0_value_loss.1} parent=5 // pred_region
        %s5716 = ssub.s32 %s17, 2
        // Predicated region
        $region77: #{td0_value_loss.1} parent=75 // pred_check
          %p5717 = pneg %p301
        $region78: #{td0_value_loss.1} parent=75 // pred_check_branch
          %5719 = sbr.rel (%p5717) target = $region80
        $region79: #{td0_value_loss.1} parent=75 // pred_region
          %p5720 = scmp.lt.s32.totalorder %s28, 1
          %s5721 = scalar_select %p5720, %s28, 1
          %s5722 = scalar_lea.vmem %s10, %s5721
        $region80: #{td0_value_loss.1} parent=75 // pred_fallthru
          _
      $region76: #{td0_value_loss.1} parent=5 // pred_fallthru
        _
    $region6: #{td0_value_loss.1} parent=1 // loop_footer
      %s21 = sadd.s32 1, %s17
    $region7: #{td0_value_loss.1} parent=1 // loop_footer_branch
      %16 = sbr.rel target = $region3
    $region8: #{td0_value_loss.1} parent=1 // loop_exit
      _
    %5723 = vsyncpa [#allocation3], 1
    %s5724 = scalar_lea.sflag [#allocation3], 1
    %5725 = vsyncpa %s5724, 1

</llo_original>
